<compile_context>
chip_gen: v6e
topology: v6e:2x2x1
jax: 0.10.0
libtpu: 0.0.40
codegen_flags: <defaults>
</compile_context>

<pallas_src>
import functools

import jax
import jax.numpy as jnp
from jax.experimental import pallas as pl
from jax.experimental.pallas import tpu as pltpu

_VMEM = pl.BlockSpec(memory_space=pltpu.MemorySpace.VMEM)


# --------------------------- fused Pallas kernel ------------------------------

def _fused_forward_kernel(
    # graph data / hoisted structure matrices
    x_ref, eattr_ref, gsrc_ref, smean_ref, gsrc_sl_ref, gdst_sl_ref,
    mask_sl_ref, pool_ref,
    # parameters
    w0_ref, b0_ref, we1_ref, be1_ref, we2_ref, be2_ref,
    wroot_ref, broot_ref, wgat_ref, att_ref, bgat_ref,
    w1_ref, b1_ref, w2_ref, b2_ref,
    # output
    y_ref,
    *, dim, negative_slope):
    f32 = jnp.float32

    def mm(a, b):
        return jnp.dot(a, b, preferred_element_type=f32)

    def relu(v):
        return jnp.maximum(v, 0.0)

    # ------------------------------ lin0 + relu -------------------------------
    h0 = relu(mm(x_ref[...], w0_ref[...]) + b0_ref[...])            # [N, dim]

    # ---- edge network (depends only on edge_attr; computed exactly once) -----
    e1 = relu(mm(eattr_ref[...], we1_ref[...]) + be1_ref[...])      # [E, 128]
    wflat = mm(e1, we2_ref[...]) + be2_ref[...]                     # [E, dim*dim]

    # graph-structure matrices (hoisted; loaded once, reused by every layer)
    gsrc = gsrc_ref[...]            # [E, N]     one-hot of edge source
    smean = smean_ref[...]          # [N, E]     one-hot(dst) / in-degree
    gsrc_sl = gsrc_sl_ref[...]      # [E+N, N]   source one-hot incl. self loops
    gdst_sl = gdst_sl_ref[...]      # [E+N, N]   target one-hot incl. self loops
    mask_sl = mask_sl_ref[...]      # [N, E+N]   target mask incl. self loops
    wroot = wroot_ref[...]
    broot = broot_ref[...]
    wgat = wgat_ref[...]
    att = att_ref[...]              # [dim, 2] = [att_src | att_dst]
    bgat = bgat_ref[...]

    def nnconv_relu(h):
        # PyG NNConv (ECConv), aggr='mean', followed by ReLU.
        root = mm(h, wroot) + broot                                  # [N, dim]
        xj = mm(gsrc, h)                                             # [E, dim]
        # per-edge (1 x dim) @ (dim x dim) as unrolled rank-1 FMAs:
        # no [E, dim, dim] broadcast temp, no XLU sublane reduction.
        msgs = xj[:, 0:1] * wflat[:, 0:dim]
        for d in range(1, dim):
            msgs = msgs + xj[:, d:d + 1] * wflat[:, d * dim:(d + 1) * dim]
        agg = mm(smean, msgs)                                        # mean aggregation
        return relu(agg + root)

    def gat_relu(h):
        # PyG GATConv (1 head, add_self_loops=True), followed by ReLU.
        hp = mm(h, wgat)                                             # [N, dim]
        av = mm(hp, att)                                             # [N, 2] (src/dst proj fused)
        msgs = mm(gsrc_sl, hp)                                       # [E+N, dim]
        a_e = mm(gsrc_sl, av[:, 0:1]) + mm(gdst_sl, av[:, 1:2])      # [E+N, 1]
        a_e = jnp.where(a_e >= 0, a_e, negative_slope * a_e)         # LeakyReLU(0.2)
        # masked softmax over incoming edges; a single global max keeps the
        # whole thing transpose-free and the aggregation pure MXU matmuls.
        p = jnp.exp(a_e - jnp.max(a_e))                              # [E+N, 1], <= 1
        numer = mm(mask_sl, p * msgs)                                # [N, dim]
        denom = jnp.maximum(mm(mask_sl, p), 1e-30)                   # [N, 1] (guarded)
        return relu(numer / denom + bgat)

    # Reference loops apply the conv to the SAME input each iteration, keeping
    # only the last result -> one application is mathematically identical.
    m1 = gat_relu(nnconv_relu(h0))
    m3 = gat_relu(nnconv_relu(m1))
    m5 = gat_relu(nnconv_relu(m3))

    ms = (m1 + m3 + m5) * f32(1.0 / 3.0)                             # mean over stack

    pooled = mm(pool_ref[...], ms)                                   # global mean pool [G, dim]
    h1 = relu(mm(pooled, w1_ref[...]) + b1_ref[...])                 # lin1 + relu
    y_ref[...] = mm(h1, w2_ref[...]) + b2_ref[...]                   # lin2


# ------------------------------ model wrapper ---------------------------------

def init_params(key, num_features, dim):
    ks = jax.random.split(key, 16)

    def nrm(k, shape, scale=0.1):
        return scale * jax.random.normal(k, shape, dtype=jnp.float32)

    return {
        # lin0
        "W0": nrm(ks[0], (num_features, dim)), "b0": nrm(ks[1], (dim,)),
        # edge network nn = Linear(3,128) -> ReLU -> Linear(128, dim*dim)
        "We1": nrm(ks[2], (3, 128)), "be1": nrm(ks[3], (128,)),
        "We2": nrm(ks[4], (128, dim * dim), 0.05), "be2": nrm(ks[5], (dim * dim,), 0.05),
        # NNConv root weight / bias
        "Wroot": nrm(ks[6], (dim, dim)), "broot": nrm(ks[7], (dim,)),
        # GATConv (1 head): lin (no bias), att_src, att_dst, bias
        "Wgat": nrm(ks[8], (dim, dim)),
        "att_src": nrm(ks[9], (dim,)), "att_dst": nrm(ks[10], (dim,)),
        "bgat": nrm(ks[11], (dim,)),
        # lin1 / lin2
        "W1": nrm(ks[12], (dim, dim)), "b1": nrm(ks[13], (dim,)),
        "W2": nrm(ks[14], (dim, 1)), "b2": nrm(ks[15], (1,)),
    }


@functools.partial(jax.jit, static_argnames=("num_graphs", "add_des"))
def forward(params, x, edge_index, edge_attr, batch, num_graphs, add_des=False):
    # TODO(synk): add_des=True concat branch is shape-inconsistent with
    # lin1(dim, dim) in the reference module; only add_des=False is implemented.
    f32 = jnp.float32
    N = x.shape[0]
    dim = params["W0"].shape[1]
    src, dst = edge_index[0], edge_index[1]            # row0 = source j, row1 = target i
    node_ids = jnp.arange(N, dtype=src.dtype)

    # -------- graph-structure-invariant matrices (built once per forward) -----
    gsrc = (src[:, None] == node_ids[None, :]).astype(f32)           # [E, N]
    onehot_dst = (dst[None, :] == node_ids[:, None]).astype(f32)     # [N, E]
    deg = jnp.maximum(jnp.sum(onehot_dst, axis=1, keepdims=True), 1.0)
    smean = onehot_dst / deg                                         # scatter-mean
    src_sl = jnp.concatenate([src, node_ids])                        # add self loops
    dst_sl = jnp.concatenate([dst, node_ids])
    gsrc_sl = (src_sl[:, None] == node_ids[None, :]).astype(f32)     # [E+N, N]
    gdst_sl = (dst_sl[:, None] == node_ids[None, :]).astype(f32)     # [E+N, N]
    mask_sl = (dst_sl[None, :] == node_ids[:, None]).astype(f32)     # [N, E+N]

    graph_ids = jnp.arange(num_graphs, dtype=batch.dtype)
    pool = (batch[None, :] == graph_ids[:, None]).astype(f32)        # [G, N]
    cnt = jnp.maximum(jnp.sum(pool, axis=1, keepdims=True), 1.0)
    pool_mean = pool / cnt

    att = jnp.stack([params["att_src"], params["att_dst"]], axis=1)  # [dim, 2]

    def row(v):                                                      # 1-D bias -> [1, D]
        return v.reshape(1, -1).astype(f32)

    inputs = (
        x.astype(f32), edge_attr.astype(f32),
        gsrc, smean, gsrc_sl, gdst_sl, mask_sl, pool_mean,
        params["W0"].astype(f32), row(params["b0"]),
        params["We1"].astype(f32), row(params["be1"]),
        params["We2"].astype(f32), row(params["be2"]),
        params["Wroot"].astype(f32), row(params["broot"]),
        params["Wgat"].astype(f32), att.astype(f32), row(params["bgat"]),
        params["W1"].astype(f32), row(params["b1"]),
        params["W2"].astype(f32), row(params["b2"]),
    )

    # Single VMEM-resident block, one kernel launch for the whole forward.
    # TODO(synk): for realistically sized graphs, replace the dense one-hot
    # scatter/gather matrices with scalar-prefetched segment aggregation and add
    # a ("parallel",) grid over node/graph tiles (uses both v7x TensorCores and
    # respects its 64 MiB VMEM budget).
    y = pl.pallas_call(
        functools.partial(_fused_forward_kernel, dim=dim, negative_slope=0.2),
        out_shape=jax.ShapeDtypeStruct((num_graphs, 1), f32),
        in_specs=[_VMEM] * len(inputs),
        out_specs=_VMEM,
    )(*inputs)
    return y.reshape(-1)                                             # view(-1)


# --------------------------------- main ----------------------------------------

if __name__ == "__main__":
    num_features, dim = 8, 16
    nodes_per_graph, num_graphs = 6, 2
    N = nodes_per_graph * num_graphs
    edges_per_graph = 12
    E = edges_per_graph * num_graphs

    key = jax.random.PRNGKey(0)
    kx, ksrc, koff, ke, kp = jax.random.split(key, 5)

    x = jax.random.normal(kx, (N, num_features), jnp.float32)

    src0 = jax.random.randint(ksrc, (edges_per_graph,), 0, nodes_per_graph)
    off = jax.random.randint(koff, (edges_per_graph,), 1, nodes_per_graph)
    dst0 = (src0 + off) % nodes_per_graph            # no self loops in the data
    src = jnp.concatenate([src0, src0 + nodes_per_graph]).astype(jnp.int32)
    dst = jnp.concatenate([dst0, dst0 + nodes_per_graph]).astype(jnp.int32)
    edge_index = jnp.stack([src, dst])               # [2, E]
    edge_attr = jax.random.normal(ke, (E, 3), jnp.float32)
    batch = jnp.repeat(jnp.arange(num_graphs, dtype=jnp.int32), nodes_per_graph)

    params = init_params(kp, num_features, dim)

    y = forward(params, x, edge_index, edge_attr, batch, num_graphs=num_graphs)
    jax.block_until_ready(y)
    assert y.shape == (num_graphs,)
    print("KERNEL_OK")
</pallas_src>

<mosaic_0001>
module attributes {stable_mosaic.version = 11 : i64} {
  func.func @_fused_forward_kernel(%arg0: memref<12x8xf32, #tpu.memory_space<vmem>>, %arg1: memref<24x3xf32, #tpu.memory_space<vmem>>, %arg2: memref<24x12xf32, #tpu.memory_space<vmem>>, %arg3: memref<12x24xf32, #tpu.memory_space<vmem>>, %arg4: memref<36x12xf32, #tpu.memory_space<vmem>>, %arg5: memref<36x12xf32, #tpu.memory_space<vmem>>, %arg6: memref<12x36xf32, #tpu.memory_space<vmem>>, %arg7: memref<2x12xf32, #tpu.memory_space<vmem>>, %arg8: memref<8x16xf32, #tpu.memory_space<vmem>>, %arg9: memref<1x16xf32, #tpu.memory_space<vmem>>, %arg10: memref<3x128xf32, #tpu.memory_space<vmem>>, %arg11: memref<1x128xf32, #tpu.memory_space<vmem>>, %arg12: memref<128x256xf32, #tpu.memory_space<vmem>>, %arg13: memref<1x256xf32, #tpu.memory_space<vmem>>, %arg14: memref<16x16xf32, #tpu.memory_space<vmem>>, %arg15: memref<1x16xf32, #tpu.memory_space<vmem>>, %arg16: memref<16x16xf32, #tpu.memory_space<vmem>>, %arg17: memref<16x2xf32, #tpu.memory_space<vmem>>, %arg18: memref<1x16xf32, #tpu.memory_space<vmem>>, %arg19: memref<16x16xf32, #tpu.memory_space<vmem>>, %arg20: memref<1x16xf32, #tpu.memory_space<vmem>>, %arg21: memref<16x1xf32, #tpu.memory_space<vmem>>, %arg22: memref<1x1xf32, #tpu.memory_space<vmem>>, %arg23: memref<2x1xf32, #tpu.memory_space<vmem>>) attributes {dimension_semantics = [], scalar_prefetch = 0 : i64, scratch_operands = 0 : i64, tpu.core_type = #tpu.core_type<tc>} {
    %c0 = arith.constant 0 : index
    %c0_0 = arith.constant 0 : index
    %0 = vector.load %arg0[%c0, %c0_0] : memref<12x8xf32, #tpu.memory_space<vmem>>, vector<12x8xf32>
    %c0_1 = arith.constant 0 : index
    %c0_2 = arith.constant 0 : index
    %1 = vector.load %arg8[%c0_1, %c0_2] : memref<8x16xf32, #tpu.memory_space<vmem>>, vector<8x16xf32>
    %cst = arith.constant dense<0.000000e+00> : vector<12x16xf32>
    %2 = tpu.matmul %0, %1, %cst {dimension_numbers = #tpu.dot_dimension_numbers<[1], [0], [0], [1], [0, 0, 1, 1], [], []>} : vector<12x8xf32>, vector<8x16xf32>, vector<12x16xf32> -> vector<12x16xf32>
    %c0_3 = arith.constant 0 : index
    %c0_4 = arith.constant 0 : index
    %3 = vector.load %arg9[%c0_3, %c0_4] : memref<1x16xf32, #tpu.memory_space<vmem>>, vector<1x16xf32>
    %4 = vector.broadcast %3 : vector<1x16xf32> to vector<12x16xf32>
    %5 = arith.addf %2, %4 : vector<12x16xf32>
    %cst_5 = arith.constant 0.000000e+00 : f32
    %6 = vector.broadcast %cst_5 : f32 to vector<12x16xf32>
    %7 = arith.maximumf %5, %6 : vector<12x16xf32>
    %c0_6 = arith.constant 0 : index
    %c0_7 = arith.constant 0 : index
    %8 = vector.load %arg1[%c0_6, %c0_7] : memref<24x3xf32, #tpu.memory_space<vmem>>, vector<24x3xf32>
    %c0_8 = arith.constant 0 : index
    %c0_9 = arith.constant 0 : index
    %9 = vector.load %arg10[%c0_8, %c0_9] : memref<3x128xf32, #tpu.memory_space<vmem>>, vector<3x128xf32>
    %cst_10 = arith.constant dense<0.000000e+00> : vector<24x128xf32>
    %10 = tpu.matmul %8, %9, %cst_10 {dimension_numbers = #tpu.dot_dimension_numbers<[1], [0], [0], [1], [0, 0, 1, 1], [], []>} : vector<24x3xf32>, vector<3x128xf32>, vector<24x128xf32> -> vector<24x128xf32>
    %c0_11 = arith.constant 0 : index
    %c0_12 = arith.constant 0 : index
    %11 = vector.load %arg11[%c0_11, %c0_12] : memref<1x128xf32, #tpu.memory_space<vmem>>, vector<1x128xf32>
    %12 = vector.broadcast %11 : vector<1x128xf32> to vector<24x128xf32>
    %13 = arith.addf %10, %12 : vector<24x128xf32>
    %cst_13 = arith.constant 0.000000e+00 : f32
    %14 = vector.broadcast %cst_13 : f32 to vector<24x128xf32>
    %15 = arith.maximumf %13, %14 : vector<24x128xf32>
    %c0_14 = arith.constant 0 : index
    %c0_15 = arith.constant 0 : index
    %16 = vector.load %arg12[%c0_14, %c0_15] : memref<128x256xf32, #tpu.memory_space<vmem>>, vector<128x256xf32>
    %cst_16 = arith.constant dense<0.000000e+00> : vector<24x256xf32>
    %17 = tpu.matmul %15, %16, %cst_16 {dimension_numbers = #tpu.dot_dimension_numbers<[1], [0], [0], [1], [0, 0, 1, 1], [], []>} : vector<24x128xf32>, vector<128x256xf32>, vector<24x256xf32> -> vector<24x256xf32>
    %c0_17 = arith.constant 0 : index
    %c0_18 = arith.constant 0 : index
    %18 = vector.load %arg13[%c0_17, %c0_18] : memref<1x256xf32, #tpu.memory_space<vmem>>, vector<1x256xf32>
    %19 = vector.broadcast %18 : vector<1x256xf32> to vector<24x256xf32>
    %20 = arith.addf %17, %19 : vector<24x256xf32>
    %c0_19 = arith.constant 0 : index
    %c0_20 = arith.constant 0 : index
    %21 = vector.load %arg2[%c0_19, %c0_20] : memref<24x12xf32, #tpu.memory_space<vmem>>, vector<24x12xf32>
    %c0_21 = arith.constant 0 : index
    %c0_22 = arith.constant 0 : index
    %22 = vector.load %arg3[%c0_21, %c0_22] : memref<12x24xf32, #tpu.memory_space<vmem>>, vector<12x24xf32>
    %c0_23 = arith.constant 0 : index
    %c0_24 = arith.constant 0 : index
    %23 = vector.load %arg4[%c0_23, %c0_24] : memref<36x12xf32, #tpu.memory_space<vmem>>, vector<36x12xf32>
    %c0_25 = arith.constant 0 : index
    %c0_26 = arith.constant 0 : index
    %24 = vector.load %arg5[%c0_25, %c0_26] : memref<36x12xf32, #tpu.memory_space<vmem>>, vector<36x12xf32>
    %c0_27 = arith.constant 0 : index
    %c0_28 = arith.constant 0 : index
    %25 = vector.load %arg6[%c0_27, %c0_28] : memref<12x36xf32, #tpu.memory_space<vmem>>, vector<12x36xf32>
    %c0_29 = arith.constant 0 : index
    %c0_30 = arith.constant 0 : index
    %26 = vector.load %arg14[%c0_29, %c0_30] : memref<16x16xf32, #tpu.memory_space<vmem>>, vector<16x16xf32>
    %c0_31 = arith.constant 0 : index
    %c0_32 = arith.constant 0 : index
    %27 = vector.load %arg15[%c0_31, %c0_32] : memref<1x16xf32, #tpu.memory_space<vmem>>, vector<1x16xf32>
    %c0_33 = arith.constant 0 : index
    %c0_34 = arith.constant 0 : index
    %28 = vector.load %arg16[%c0_33, %c0_34] : memref<16x16xf32, #tpu.memory_space<vmem>>, vector<16x16xf32>
    %c0_35 = arith.constant 0 : index
    %c0_36 = arith.constant 0 : index
    %29 = vector.load %arg17[%c0_35, %c0_36] : memref<16x2xf32, #tpu.memory_space<vmem>>, vector<16x2xf32>
    %c0_37 = arith.constant 0 : index
    %c0_38 = arith.constant 0 : index
    %30 = vector.load %arg18[%c0_37, %c0_38] : memref<1x16xf32, #tpu.memory_space<vmem>>, vector<1x16xf32>
    %cst_39 = arith.constant dense<0.000000e+00> : vector<12x16xf32>
    %31 = tpu.matmul %7, %26, %cst_39 {dimension_numbers = #tpu.dot_dimension_numbers<[1], [0], [0], [1], [0, 0, 1, 1], [], []>} : vector<12x16xf32>, vector<16x16xf32>, vector<12x16xf32> -> vector<12x16xf32>
    %32 = vector.broadcast %27 : vector<1x16xf32> to vector<12x16xf32>
    %33 = arith.addf %31, %32 : vector<12x16xf32>
    %cst_40 = arith.constant dense<0.000000e+00> : vector<24x16xf32>
    %34 = tpu.matmul %21, %7, %cst_40 {dimension_numbers = #tpu.dot_dimension_numbers<[1], [0], [0], [1], [0, 0, 1, 1], [], []>} : vector<24x12xf32>, vector<12x16xf32>, vector<24x16xf32> -> vector<24x16xf32>
    %35 = vector.extract_strided_slice %34 {offsets = [0, 0], sizes = [24, 1], strides = [1, 1]} : vector<24x16xf32> to vector<24x1xf32>
    %36 = vector.extract_strided_slice %20 {offsets = [0, 0], sizes = [24, 16], strides = [1, 1]} : vector<24x256xf32> to vector<24x16xf32>
    %37 = vector.broadcast %35 : vector<24x1xf32> to vector<24x16xf32>
    %38 = arith.mulf %37, %36 : vector<24x16xf32>
    %39 = vector.extract_strided_slice %34 {offsets = [0, 1], sizes = [24, 1], strides = [1, 1]} : vector<24x16xf32> to vector<24x1xf32>
    %40 = vector.extract_strided_slice %20 {offsets = [0, 16], sizes = [24, 16], strides = [1, 1]} : vector<24x256xf32> to vector<24x16xf32>
    %41 = vector.broadcast %39 : vector<24x1xf32> to vector<24x16xf32>
    %42 = arith.mulf %41, %40 : vector<24x16xf32>
    %43 = arith.addf %38, %42 : vector<24x16xf32>
    %44 = vector.extract_strided_slice %34 {offsets = [0, 2], sizes = [24, 1], strides = [1, 1]} : vector<24x16xf32> to vector<24x1xf32>
    %45 = vector.extract_strided_slice %20 {offsets = [0, 32], sizes = [24, 16], strides = [1, 1]} : vector<24x256xf32> to vector<24x16xf32>
    %46 = vector.broadcast %44 : vector<24x1xf32> to vector<24x16xf32>
    %47 = arith.mulf %46, %45 : vector<24x16xf32>
    %48 = arith.addf %43, %47 : vector<24x16xf32>
    %49 = vector.extract_strided_slice %34 {offsets = [0, 3], sizes = [24, 1], strides = [1, 1]} : vector<24x16xf32> to vector<24x1xf32>
    %50 = vector.extract_strided_slice %20 {offsets = [0, 48], sizes = [24, 16], strides = [1, 1]} : vector<24x256xf32> to vector<24x16xf32>
    %51 = vector.broadcast %49 : vector<24x1xf32> to vector<24x16xf32>
    %52 = arith.mulf %51, %50 : vector<24x16xf32>
    %53 = arith.addf %48, %52 : vector<24x16xf32>
    %54 = vector.extract_strided_slice %34 {offsets = [0, 4], sizes = [24, 1], strides = [1, 1]} : vector<24x16xf32> to vector<24x1xf32>
    %55 = vector.extract_strided_slice %20 {offsets = [0, 64], sizes = [24, 16], strides = [1, 1]} : vector<24x256xf32> to vector<24x16xf32>
    %56 = vector.broadcast %54 : vector<24x1xf32> to vector<24x16xf32>
    %57 = arith.mulf %56, %55 : vector<24x16xf32>
    %58 = arith.addf %53, %57 : vector<24x16xf32>
    %59 = vector.extract_strided_slice %34 {offsets = [0, 5], sizes = [24, 1], strides = [1, 1]} : vector<24x16xf32> to vector<24x1xf32>
    %60 = vector.extract_strided_slice %20 {offsets = [0, 80], sizes = [24, 16], strides = [1, 1]} : vector<24x256xf32> to vector<24x16xf32>
    %61 = vector.broadcast %59 : vector<24x1xf32> to vector<24x16xf32>
    %62 = arith.mulf %61, %60 : vector<24x16xf32>
    %63 = arith.addf %58, %62 : vector<24x16xf32>
    %64 = vector.extract_strided_slice %34 {offsets = [0, 6], sizes = [24, 1], strides = [1, 1]} : vector<24x16xf32> to vector<24x1xf32>
    %65 = vector.extract_strided_slice %20 {offsets = [0, 96], sizes = [24, 16], strides = [1, 1]} : vector<24x256xf32> to vector<24x16xf32>
    %66 = vector.broadcast %64 : vector<24x1xf32> to vector<24x16xf32>
    %67 = arith.mulf %66, %65 : vector<24x16xf32>
    %68 = arith.addf %63, %67 : vector<24x16xf32>
    %69 = vector.extract_strided_slice %34 {offsets = [0, 7], sizes = [24, 1], strides = [1, 1]} : vector<24x16xf32> to vector<24x1xf32>
    %70 = vector.extract_strided_slice %20 {offsets = [0, 112], sizes = [24, 16], strides = [1, 1]} : vector<24x256xf32> to vector<24x16xf32>
    %71 = vector.broadcast %69 : vector<24x1xf32> to vector<24x16xf32>
    %72 = arith.mulf %71, %70 : vector<24x16xf32>
    %73 = arith.addf %68, %72 : vector<24x16xf32>
    %74 = vector.extract_strided_slice %34 {offsets = [0, 8], sizes = [24, 1], strides = [1, 1]} : vector<24x16xf32> to vector<24x1xf32>
    %75 = vector.extract_strided_slice %20 {offsets = [0, 128], sizes = [24, 16], strides = [1, 1]} : vector<24x256xf32> to vector<24x16xf32>
    %76 = vector.broadcast %74 : vector<24x1xf32> to vector<24x16xf32>
    %77 = arith.mulf %76, %75 : vector<24x16xf32>
    %78 = arith.addf %73, %77 : vector<24x16xf32>
    %79 = vector.extract_strided_slice %34 {offsets = [0, 9], sizes = [24, 1], strides = [1, 1]} : vector<24x16xf32> to vector<24x1xf32>
    %80 = vector.extract_strided_slice %20 {offsets = [0, 144], sizes = [24, 16], strides = [1, 1]} : vector<24x256xf32> to vector<24x16xf32>
    %81 = vector.broadcast %79 : vector<24x1xf32> to vector<24x16xf32>
    %82 = arith.mulf %81, %80 : vector<24x16xf32>
    %83 = arith.addf %78, %82 : vector<24x16xf32>
    %84 = vector.extract_strided_slice %34 {offsets = [0, 10], sizes = [24, 1], strides = [1, 1]} : vector<24x16xf32> to vector<24x1xf32>
    %85 = vector.extract_strided_slice %20 {offsets = [0, 160], sizes = [24, 16], strides = [1, 1]} : vector<24x256xf32> to vector<24x16xf32>
    %86 = vector.broadcast %84 : vector<24x1xf32> to vector<24x16xf32>
    %87 = arith.mulf %86, %85 : vector<24x16xf32>
    %88 = arith.addf %83, %87 : vector<24x16xf32>
    %89 = vector.extract_strided_slice %34 {offsets = [0, 11], sizes = [24, 1], strides = [1, 1]} : vector<24x16xf32> to vector<24x1xf32>
    %90 = vector.extract_strided_slice %20 {offsets = [0, 176], sizes = [24, 16], strides = [1, 1]} : vector<24x256xf32> to vector<24x16xf32>
    %91 = vector.broadcast %89 : vector<24x1xf32> to vector<24x16xf32>
    %92 = arith.mulf %91, %90 : vector<24x16xf32>
    %93 = arith.addf %88, %92 : vector<24x16xf32>
    %94 = vector.extract_strided_slice %34 {offsets = [0, 12], sizes = [24, 1], strides = [1, 1]} : vector<24x16xf32> to vector<24x1xf32>
    %95 = vector.extract_strided_slice %20 {offsets = [0, 192], sizes = [24, 16], strides = [1, 1]} : vector<24x256xf32> to vector<24x16xf32>
    %96 = vector.broadcast %94 : vector<24x1xf32> to vector<24x16xf32>
    %97 = arith.mulf %96, %95 : vector<24x16xf32>
    %98 = arith.addf %93, %97 : vector<24x16xf32>
    %99 = vector.extract_strided_slice %34 {offsets = [0, 13], sizes = [24, 1], strides = [1, 1]} : vector<24x16xf32> to vector<24x1xf32>
    %100 = vector.extract_strided_slice %20 {offsets = [0, 208], sizes = [24, 16], strides = [1, 1]} : vector<24x256xf32> to vector<24x16xf32>
    %101 = vector.broadcast %99 : vector<24x1xf32> to vector<24x16xf32>
    %102 = arith.mulf %101, %100 : vector<24x16xf32>
    %103 = arith.addf %98, %102 : vector<24x16xf32>
    %104 = vector.extract_strided_slice %34 {offsets = [0, 14], sizes = [24, 1], strides = [1, 1]} : vector<24x16xf32> to vector<24x1xf32>
    %105 = vector.extract_strided_slice %20 {offsets = [0, 224], sizes = [24, 16], strides = [1, 1]} : vector<24x256xf32> to vector<24x16xf32>
    %106 = vector.broadcast %104 : vector<24x1xf32> to vector<24x16xf32>
    %107 = arith.mulf %106, %105 : vector<24x16xf32>
    %108 = arith.addf %103, %107 : vector<24x16xf32>
    %109 = vector.extract_strided_slice %34 {offsets = [0, 15], sizes = [24, 1], strides = [1, 1]} : vector<24x16xf32> to vector<24x1xf32>
    %110 = vector.extract_strided_slice %20 {offsets = [0, 240], sizes = [24, 16], strides = [1, 1]} : vector<24x256xf32> to vector<24x16xf32>
    %111 = vector.broadcast %109 : vector<24x1xf32> to vector<24x16xf32>
    %112 = arith.mulf %111, %110 : vector<24x16xf32>
    %113 = arith.addf %108, %112 : vector<24x16xf32>
    %cst_41 = arith.constant dense<0.000000e+00> : vector<12x16xf32>
    %114 = tpu.matmul %22, %113, %cst_41 {dimension_numbers = #tpu.dot_dimension_numbers<[1], [0], [0], [1], [0, 0, 1, 1], [], []>} : vector<12x24xf32>, vector<24x16xf32>, vector<12x16xf32> -> vector<12x16xf32>
    %115 = arith.addf %114, %33 : vector<12x16xf32>
    %cst_42 = arith.constant 0.000000e+00 : f32
    %116 = vector.broadcast %cst_42 : f32 to vector<12x16xf32>
    %117 = arith.maximumf %115, %116 : vector<12x16xf32>
    %cst_43 = arith.constant dense<0.000000e+00> : vector<12x16xf32>
    %118 = tpu.matmul %117, %28, %cst_43 {dimension_numbers = #tpu.dot_dimension_numbers<[1], [0], [0], [1], [0, 0, 1, 1], [], []>} : vector<12x16xf32>, vector<16x16xf32>, vector<12x16xf32> -> vector<12x16xf32>
    %cst_44 = arith.constant dense<0.000000e+00> : vector<12x2xf32>
    %119 = tpu.matmul %118, %29, %cst_44 {dimension_numbers = #tpu.dot_dimension_numbers<[1], [0], [0], [1], [0, 0, 1, 1], [], []>} : vector<12x16xf32>, vector<16x2xf32>, vector<12x2xf32> -> vector<12x2xf32>
    %cst_45 = arith.constant dense<0.000000e+00> : vector<36x16xf32>
    %120 = tpu.matmul %23, %118, %cst_45 {dimension_numbers = #tpu.dot_dimension_numbers<[1], [0], [0], [1], [0, 0, 1, 1], [], []>} : vector<36x12xf32>, vector<12x16xf32>, vector<36x16xf32> -> vector<36x16xf32>
    %121 = vector.extract_strided_slice %119 {offsets = [0, 0], sizes = [12, 1], strides = [1, 1]} : vector<12x2xf32> to vector<12x1xf32>
    %cst_46 = arith.constant dense<0.000000e+00> : vector<36x1xf32>
    %122 = tpu.matmul %23, %121, %cst_46 {dimension_numbers = #tpu.dot_dimension_numbers<[1], [0], [0], [1], [0, 0, 1, 1], [], []>} : vector<36x12xf32>, vector<12x1xf32>, vector<36x1xf32> -> vector<36x1xf32>
    %123 = vector.extract_strided_slice %119 {offsets = [0, 1], sizes = [12, 1], strides = [1, 1]} : vector<12x2xf32> to vector<12x1xf32>
    %cst_47 = arith.constant dense<0.000000e+00> : vector<36x1xf32>
    %124 = tpu.matmul %24, %123, %cst_47 {dimension_numbers = #tpu.dot_dimension_numbers<[1], [0], [0], [1], [0, 0, 1, 1], [], []>} : vector<36x12xf32>, vector<12x1xf32>, vector<36x1xf32> -> vector<36x1xf32>
    %125 = arith.addf %122, %124 : vector<36x1xf32>
    %cst_48 = arith.constant 0.000000e+00 : f32
    %126 = vector.broadcast %cst_48 : f32 to vector<36x1xf32>
    %127 = arith.cmpf oge, %125, %126 : vector<36x1xf32>
    %cst_49 = arith.constant 2.000000e-01 : f32
    %128 = vector.broadcast %cst_49 : f32 to vector<36x1xf32>
    %129 = arith.mulf %128, %125 : vector<36x1xf32>
    %130 = arith.select %127, %125, %129 : vector<36x1xi1>, vector<36x1xf32>
    %131 = vector.shape_cast %130 : vector<36x1xf32> to vector<1x36x1xf32>
    %cst_50 = arith.constant dense<0xFF800000> : vector<1xf32>
    %132 = vector.multi_reduction <maximumf>, %131, %cst_50 [1, 2] : vector<1x36x1xf32> to vector<1xf32>
    %133 = vector.shape_cast %132 : vector<1xf32> to vector<1x1x1xf32>
    %134 = vector.extract %133[0, 0, 0] : f32 from vector<1x1x1xf32>
    %135 = vector.broadcast %134 : f32 to vector<36x1xf32>
    %136 = arith.subf %130, %135 : vector<36x1xf32>
    %137 = math.exp %136 : vector<36x1xf32>
    %138 = vector.broadcast %137 : vector<36x1xf32> to vector<36x16xf32>
    %139 = arith.mulf %138, %120 : vector<36x16xf32>
    %cst_51 = arith.constant dense<0.000000e+00> : vector<12x16xf32>
    %140 = tpu.matmul %25, %139, %cst_51 {dimension_numbers = #tpu.dot_dimension_numbers<[1], [0], [0], [1], [0, 0, 1, 1], [], []>} : vector<12x36xf32>, vector<36x16xf32>, vector<12x16xf32> -> vector<12x16xf32>
    %cst_52 = arith.constant dense<0.000000e+00> : vector<12x1xf32>
    %141 = tpu.matmul %25, %137, %cst_52 {dimension_numbers = #tpu.dot_dimension_numbers<[1], [0], [0], [1], [0, 0, 1, 1], [], []>} : vector<12x36xf32>, vector<36x1xf32>, vector<12x1xf32> -> vector<12x1xf32>
    %cst_53 = arith.constant 1.000000e-30 : f32
    %142 = vector.broadcast %cst_53 : f32 to vector<12x1xf32>
    %143 = arith.maximumf %141, %142 : vector<12x1xf32>
    %144 = vector.broadcast %143 : vector<12x1xf32> to vector<12x16xf32>
    %145 = arith.divf %140, %144 : vector<12x16xf32>
    %146 = vector.broadcast %30 : vector<1x16xf32> to vector<12x16xf32>
    %147 = arith.addf %145, %146 : vector<12x16xf32>
    %cst_54 = arith.constant 0.000000e+00 : f32
    %148 = vector.broadcast %cst_54 : f32 to vector<12x16xf32>
    %149 = arith.maximumf %147, %148 : vector<12x16xf32>
    %cst_55 = arith.constant dense<0.000000e+00> : vector<12x16xf32>
    %150 = tpu.matmul %149, %26, %cst_55 {dimension_numbers = #tpu.dot_dimension_numbers<[1], [0], [0], [1], [0, 0, 1, 1], [], []>} : vector<12x16xf32>, vector<16x16xf32>, vector<12x16xf32> -> vector<12x16xf32>
    %151 = vector.broadcast %27 : vector<1x16xf32> to vector<12x16xf32>
    %152 = arith.addf %150, %151 : vector<12x16xf32>
    %cst_56 = arith.constant dense<0.000000e+00> : vector<24x16xf32>
    %153 = tpu.matmul %21, %149, %cst_56 {dimension_numbers = #tpu.dot_dimension_numbers<[1], [0], [0], [1], [0, 0, 1, 1], [], []>} : vector<24x12xf32>, vector<12x16xf32>, vector<24x16xf32> -> vector<24x16xf32>
    %154 = vector.extract_strided_slice %153 {offsets = [0, 0], sizes = [24, 1], strides = [1, 1]} : vector<24x16xf32> to vector<24x1xf32>
    %155 = vector.extract_strided_slice %20 {offsets = [0, 0], sizes = [24, 16], strides = [1, 1]} : vector<24x256xf32> to vector<24x16xf32>
    %156 = vector.broadcast %154 : vector<24x1xf32> to vector<24x16xf32>
    %157 = arith.mulf %156, %155 : vector<24x16xf32>
    %158 = vector.extract_strided_slice %153 {offsets = [0, 1], sizes = [24, 1], strides = [1, 1]} : vector<24x16xf32> to vector<24x1xf32>
    %159 = vector.extract_strided_slice %20 {offsets = [0, 16], sizes = [24, 16], strides = [1, 1]} : vector<24x256xf32> to vector<24x16xf32>
    %160 = vector.broadcast %158 : vector<24x1xf32> to vector<24x16xf32>
    %161 = arith.mulf %160, %159 : vector<24x16xf32>
    %162 = arith.addf %157, %161 : vector<24x16xf32>
    %163 = vector.extract_strided_slice %153 {offsets = [0, 2], sizes = [24, 1], strides = [1, 1]} : vector<24x16xf32> to vector<24x1xf32>
    %164 = vector.extract_strided_slice %20 {offsets = [0, 32], sizes = [24, 16], strides = [1, 1]} : vector<24x256xf32> to vector<24x16xf32>
    %165 = vector.broadcast %163 : vector<24x1xf32> to vector<24x16xf32>
    %166 = arith.mulf %165, %164 : vector<24x16xf32>
    %167 = arith.addf %162, %166 : vector<24x16xf32>
    %168 = vector.extract_strided_slice %153 {offsets = [0, 3], sizes = [24, 1], strides = [1, 1]} : vector<24x16xf32> to vector<24x1xf32>
    %169 = vector.extract_strided_slice %20 {offsets = [0, 48], sizes = [24, 16], strides = [1, 1]} : vector<24x256xf32> to vector<24x16xf32>
    %170 = vector.broadcast %168 : vector<24x1xf32> to vector<24x16xf32>
    %171 = arith.mulf %170, %169 : vector<24x16xf32>
    %172 = arith.addf %167, %171 : vector<24x16xf32>
    %173 = vector.extract_strided_slice %153 {offsets = [0, 4], sizes = [24, 1], strides = [1, 1]} : vector<24x16xf32> to vector<24x1xf32>
    %174 = vector.extract_strided_slice %20 {offsets = [0, 64], sizes = [24, 16], strides = [1, 1]} : vector<24x256xf32> to vector<24x16xf32>
    %175 = vector.broadcast %173 : vector<24x1xf32> to vector<24x16xf32>
    %176 = arith.mulf %175, %174 : vector<24x16xf32>
    %177 = arith.addf %172, %176 : vector<24x16xf32>
    %178 = vector.extract_strided_slice %153 {offsets = [0, 5], sizes = [24, 1], strides = [1, 1]} : vector<24x16xf32> to vector<24x1xf32>
    %179 = vector.extract_strided_slice %20 {offsets = [0, 80], sizes = [24, 16], strides = [1, 1]} : vector<24x256xf32> to vector<24x16xf32>
    %180 = vector.broadcast %178 : vector<24x1xf32> to vector<24x16xf32>
    %181 = arith.mulf %180, %179 : vector<24x16xf32>
    %182 = arith.addf %177, %181 : vector<24x16xf32>
    %183 = vector.extract_strided_slice %153 {offsets = [0, 6], sizes = [24, 1], strides = [1, 1]} : vector<24x16xf32> to vector<24x1xf32>
    %184 = vector.extract_strided_slice %20 {offsets = [0, 96], sizes = [24, 16], strides = [1, 1]} : vector<24x256xf32> to vector<24x16xf32>
    %185 = vector.broadcast %183 : vector<24x1xf32> to vector<24x16xf32>
    %186 = arith.mulf %185, %184 : vector<24x16xf32>
    %187 = arith.addf %182, %186 : vector<24x16xf32>
    %188 = vector.extract_strided_slice %153 {offsets = [0, 7], sizes = [24, 1], strides = [1, 1]} : vector<24x16xf32> to vector<24x1xf32>
    %189 = vector.extract_strided_slice %20 {offsets = [0, 112], sizes = [24, 16], strides = [1, 1]} : vector<24x256xf32> to vector<24x16xf32>
    %190 = vector.broadcast %188 : vector<24x1xf32> to vector<24x16xf32>
    %191 = arith.mulf %190, %189 : vector<24x16xf32>
    %192 = arith.addf %187, %191 : vector<24x16xf32>
    %193 = vector.extract_strided_slice %153 {offsets = [0, 8], sizes = [24, 1], strides = [1, 1]} : vector<24x16xf32> to vector<24x1xf32>
    %194 = vector.extract_strided_slice %20 {offsets = [0, 128], sizes = [24, 16], strides = [1, 1]} : vector<24x256xf32> to vector<24x16xf32>
    %195 = vector.broadcast %193 : vector<24x1xf32> to vector<24x16xf32>
    %196 = arith.mulf %195, %194 : vector<24x16xf32>
    %197 = arith.addf %192, %196 : vector<24x16xf32>
    %198 = vector.extract_strided_slice %153 {offsets = [0, 9], sizes = [24, 1], strides = [1, 1]} : vector<24x16xf32> to vector<24x1xf32>
    %199 = vector.extract_strided_slice %20 {offsets = [0, 144], sizes = [24, 16], strides = [1, 1]} : vector<24x256xf32> to vector<24x16xf32>
    %200 = vector.broadcast %198 : vector<24x1xf32> to vector<24x16xf32>
    %201 = arith.mulf %200, %199 : vector<24x16xf32>
    %202 = arith.addf %197, %201 : vector<24x16xf32>
    %203 = vector.extract_strided_slice %153 {offsets = [0, 10], sizes = [24, 1], strides = [1, 1]} : vector<24x16xf32> to vector<24x1xf32>
    %204 = vector.extract_strided_slice %20 {offsets = [0, 160], sizes = [24, 16], strides = [1, 1]} : vector<24x256xf32> to vector<24x16xf32>
    %205 = vector.broadcast %203 : vector<24x1xf32> to vector<24x16xf32>
    %206 = arith.mulf %205, %204 : vector<24x16xf32>
    %207 = arith.addf %202, %206 : vector<24x16xf32>
    %208 = vector.extract_strided_slice %153 {offsets = [0, 11], sizes = [24, 1], strides = [1, 1]} : vector<24x16xf32> to vector<24x1xf32>
    %209 = vector.extract_strided_slice %20 {offsets = [0, 176], sizes = [24, 16], strides = [1, 1]} : vector<24x256xf32> to vector<24x16xf32>
    %210 = vector.broadcast %208 : vector<24x1xf32> to vector<24x16xf32>
    %211 = arith.mulf %210, %209 : vector<24x16xf32>
    %212 = arith.addf %207, %211 : vector<24x16xf32>
    %213 = vector.extract_strided_slice %153 {offsets = [0, 12], sizes = [24, 1], strides = [1, 1]} : vector<24x16xf32> to vector<24x1xf32>
    %214 = vector.extract_strided_slice %20 {offsets = [0, 192], sizes = [24, 16], strides = [1, 1]} : vector<24x256xf32> to vector<24x16xf32>
    %215 = vector.broadcast %213 : vector<24x1xf32> to vector<24x16xf32>
    %216 = arith.mulf %215, %214 : vector<24x16xf32>
    %217 = arith.addf %212, %216 : vector<24x16xf32>
    %218 = vector.extract_strided_slice %153 {offsets = [0, 13], sizes = [24, 1], strides = [1, 1]} : vector<24x16xf32> to vector<24x1xf32>
    %219 = vector.extract_strided_slice %20 {offsets = [0, 208], sizes = [24, 16], strides = [1, 1]} : vector<24x256xf32> to vector<24x16xf32>
    %220 = vector.broadcast %218 : vector<24x1xf32> to vector<24x16xf32>
    %221 = arith.mulf %220, %219 : vector<24x16xf32>
    %222 = arith.addf %217, %221 : vector<24x16xf32>
    %223 = vector.extract_strided_slice %153 {offsets = [0, 14], sizes = [24, 1], strides = [1, 1]} : vector<24x16xf32> to vector<24x1xf32>
    %224 = vector.extract_strided_slice %20 {offsets = [0, 224], sizes = [24, 16], strides = [1, 1]} : vector<24x256xf32> to vector<24x16xf32>
    %225 = vector.broadcast %223 : vector<24x1xf32> to vector<24x16xf32>
    %226 = arith.mulf %225, %224 : vector<24x16xf32>
    %227 = arith.addf %222, %226 : vector<24x16xf32>
    %228 = vector.extract_strided_slice %153 {offsets = [0, 15], sizes = [24, 1], strides = [1, 1]} : vector<24x16xf32> to vector<24x1xf32>
    %229 = vector.extract_strided_slice %20 {offsets = [0, 240], sizes = [24, 16], strides = [1, 1]} : vector<24x256xf32> to vector<24x16xf32>
    %230 = vector.broadcast %228 : vector<24x1xf32> to vector<24x16xf32>
    %231 = arith.mulf %230, %229 : vector<24x16xf32>
    %232 = arith.addf %227, %231 : vector<24x16xf32>
    %cst_57 = arith.constant dense<0.000000e+00> : vector<12x16xf32>
    %233 = tpu.matmul %22, %232, %cst_57 {dimension_numbers = #tpu.dot_dimension_numbers<[1], [0], [0], [1], [0, 0, 1, 1], [], []>} : vector<12x24xf32>, vector<24x16xf32>, vector<12x16xf32> -> vector<12x16xf32>
    %234 = arith.addf %233, %152 : vector<12x16xf32>
    %cst_58 = arith.constant 0.000000e+00 : f32
    %235 = vector.broadcast %cst_58 : f32 to vector<12x16xf32>
    %236 = arith.maximumf %234, %235 : vector<12x16xf32>
    %cst_59 = arith.constant dense<0.000000e+00> : vector<12x16xf32>
    %237 = tpu.matmul %236, %28, %cst_59 {dimension_numbers = #tpu.dot_dimension_numbers<[1], [0], [0], [1], [0, 0, 1, 1], [], []>} : vector<12x16xf32>, vector<16x16xf32>, vector<12x16xf32> -> vector<12x16xf32>
    %cst_60 = arith.constant dense<0.000000e+00> : vector<12x2xf32>
    %238 = tpu.matmul %237, %29, %cst_60 {dimension_numbers = #tpu.dot_dimension_numbers<[1], [0], [0], [1], [0, 0, 1, 1], [], []>} : vector<12x16xf32>, vector<16x2xf32>, vector<12x2xf32> -> vector<12x2xf32>
    %cst_61 = arith.constant dense<0.000000e+00> : vector<36x16xf32>
    %239 = tpu.matmul %23, %237, %cst_61 {dimension_numbers = #tpu.dot_dimension_numbers<[1], [0], [0], [1], [0, 0, 1, 1], [], []>} : vector<36x12xf32>, vector<12x16xf32>, vector<36x16xf32> -> vector<36x16xf32>
    %240 = vector.extract_strided_slice %238 {offsets = [0, 0], sizes = [12, 1], strides = [1, 1]} : vector<12x2xf32> to vector<12x1xf32>
    %cst_62 = arith.constant dense<0.000000e+00> : vector<36x1xf32>
    %241 = tpu.matmul %23, %240, %cst_62 {dimension_numbers = #tpu.dot_dimension_numbers<[1], [0], [0], [1], [0, 0, 1, 1], [], []>} : vector<36x12xf32>, vector<12x1xf32>, vector<36x1xf32> -> vector<36x1xf32>
    %242 = vector.extract_strided_slice %238 {offsets = [0, 1], sizes = [12, 1], strides = [1, 1]} : vector<12x2xf32> to vector<12x1xf32>
    %cst_63 = arith.constant dense<0.000000e+00> : vector<36x1xf32>
    %243 = tpu.matmul %24, %242, %cst_63 {dimension_numbers = #tpu.dot_dimension_numbers<[1], [0], [0], [1], [0, 0, 1, 1], [], []>} : vector<36x12xf32>, vector<12x1xf32>, vector<36x1xf32> -> vector<36x1xf32>
    %244 = arith.addf %241, %243 : vector<36x1xf32>
    %cst_64 = arith.constant 0.000000e+00 : f32
    %245 = vector.broadcast %cst_64 : f32 to vector<36x1xf32>
    %246 = arith.cmpf oge, %244, %245 : vector<36x1xf32>
    %cst_65 = arith.constant 2.000000e-01 : f32
    %247 = vector.broadcast %cst_65 : f32 to vector<36x1xf32>
    %248 = arith.mulf %247, %244 : vector<36x1xf32>
    %249 = arith.select %246, %244, %248 : vector<36x1xi1>, vector<36x1xf32>
    %250 = vector.shape_cast %249 : vector<36x1xf32> to vector<1x36x1xf32>
    %cst_66 = arith.constant dense<0xFF800000> : vector<1xf32>
    %251 = vector.multi_reduction <maximumf>, %250, %cst_66 [1, 2] : vector<1x36x1xf32> to vector<1xf32>
    %252 = vector.shape_cast %251 : vector<1xf32> to vector<1x1x1xf32>
    %253 = vector.extract %252[0, 0, 0] : f32 from vector<1x1x1xf32>
    %254 = vector.broadcast %253 : f32 to vector<36x1xf32>
    %255 = arith.subf %249, %254 : vector<36x1xf32>
    %256 = math.exp %255 : vector<36x1xf32>
    %257 = vector.broadcast %256 : vector<36x1xf32> to vector<36x16xf32>
    %258 = arith.mulf %257, %239 : vector<36x16xf32>
    %cst_67 = arith.constant dense<0.000000e+00> : vector<12x16xf32>
    %259 = tpu.matmul %25, %258, %cst_67 {dimension_numbers = #tpu.dot_dimension_numbers<[1], [0], [0], [1], [0, 0, 1, 1], [], []>} : vector<12x36xf32>, vector<36x16xf32>, vector<12x16xf32> -> vector<12x16xf32>
    %cst_68 = arith.constant dense<0.000000e+00> : vector<12x1xf32>
    %260 = tpu.matmul %25, %256, %cst_68 {dimension_numbers = #tpu.dot_dimension_numbers<[1], [0], [0], [1], [0, 0, 1, 1], [], []>} : vector<12x36xf32>, vector<36x1xf32>, vector<12x1xf32> -> vector<12x1xf32>
    %cst_69 = arith.constant 1.000000e-30 : f32
    %261 = vector.broadcast %cst_69 : f32 to vector<12x1xf32>
    %262 = arith.maximumf %260, %261 : vector<12x1xf32>
    %263 = vector.broadcast %262 : vector<12x1xf32> to vector<12x16xf32>
    %264 = arith.divf %259, %263 : vector<12x16xf32>
    %265 = vector.broadcast %30 : vector<1x16xf32> to vector<12x16xf32>
    %266 = arith.addf %264, %265 : vector<12x16xf32>
    %cst_70 = arith.constant 0.000000e+00 : f32
    %267 = vector.broadcast %cst_70 : f32 to vector<12x16xf32>
    %268 = arith.maximumf %266, %267 : vector<12x16xf32>
    %cst_71 = arith.constant dense<0.000000e+00> : vector<12x16xf32>
    %269 = tpu.matmul %268, %26, %cst_71 {dimension_numbers = #tpu.dot_dimension_numbers<[1], [0], [0], [1], [0, 0, 1, 1], [], []>} : vector<12x16xf32>, vector<16x16xf32>, vector<12x16xf32> -> vector<12x16xf32>
    %270 = vector.broadcast %27 : vector<1x16xf32> to vector<12x16xf32>
    %271 = arith.addf %269, %270 : vector<12x16xf32>
    %cst_72 = arith.constant dense<0.000000e+00> : vector<24x16xf32>
    %272 = tpu.matmul %21, %268, %cst_72 {dimension_numbers = #tpu.dot_dimension_numbers<[1], [0], [0], [1], [0, 0, 1, 1], [], []>} : vector<24x12xf32>, vector<12x16xf32>, vector<24x16xf32> -> vector<24x16xf32>
    %273 = vector.extract_strided_slice %272 {offsets = [0, 0], sizes = [24, 1], strides = [1, 1]} : vector<24x16xf32> to vector<24x1xf32>
    %274 = vector.extract_strided_slice %20 {offsets = [0, 0], sizes = [24, 16], strides = [1, 1]} : vector<24x256xf32> to vector<24x16xf32>
    %275 = vector.broadcast %273 : vector<24x1xf32> to vector<24x16xf32>
    %276 = arith.mulf %275, %274 : vector<24x16xf32>
    %277 = vector.extract_strided_slice %272 {offsets = [0, 1], sizes = [24, 1], strides = [1, 1]} : vector<24x16xf32> to vector<24x1xf32>
    %278 = vector.extract_strided_slice %20 {offsets = [0, 16], sizes = [24, 16], strides = [1, 1]} : vector<24x256xf32> to vector<24x16xf32>
    %279 = vector.broadcast %277 : vector<24x1xf32> to vector<24x16xf32>
    %280 = arith.mulf %279, %278 : vector<24x16xf32>
    %281 = arith.addf %276, %280 : vector<24x16xf32>
    %282 = vector.extract_strided_slice %272 {offsets = [0, 2], sizes = [24, 1], strides = [1, 1]} : vector<24x16xf32> to vector<24x1xf32>
    %283 = vector.extract_strided_slice %20 {offsets = [0, 32], sizes = [24, 16], strides = [1, 1]} : vector<24x256xf32> to vector<24x16xf32>
    %284 = vector.broadcast %282 : vector<24x1xf32> to vector<24x16xf32>
    %285 = arith.mulf %284, %283 : vector<24x16xf32>
    %286 = arith.addf %281, %285 : vector<24x16xf32>
    %287 = vector.extract_strided_slice %272 {offsets = [0, 3], sizes = [24, 1], strides = [1, 1]} : vector<24x16xf32> to vector<24x1xf32>
    %288 = vector.extract_strided_slice %20 {offsets = [0, 48], sizes = [24, 16], strides = [1, 1]} : vector<24x256xf32> to vector<24x16xf32>
    %289 = vector.broadcast %287 : vector<24x1xf32> to vector<24x16xf32>
    %290 = arith.mulf %289, %288 : vector<24x16xf32>
    %291 = arith.addf %286, %290 : vector<24x16xf32>
    %292 = vector.extract_strided_slice %272 {offsets = [0, 4], sizes = [24, 1], strides = [1, 1]} : vector<24x16xf32> to vector<24x1xf32>
    %293 = vector.extract_strided_slice %20 {offsets = [0, 64], sizes = [24, 16], strides = [1, 1]} : vector<24x256xf32> to vector<24x16xf32>
    %294 = vector.broadcast %292 : vector<24x1xf32> to vector<24x16xf32>
    %295 = arith.mulf %294, %293 : vector<24x16xf32>
    %296 = arith.addf %291, %295 : vector<24x16xf32>
    %297 = vector.extract_strided_slice %272 {offsets = [0, 5], sizes = [24, 1], strides = [1, 1]} : vector<24x16xf32> to vector<24x1xf32>
    %298 = vector.extract_strided_slice %20 {offsets = [0, 80], sizes = [24, 16], strides = [1, 1]} : vector<24x256xf32> to vector<24x16xf32>
    %299 = vector.broadcast %297 : vector<24x1xf32> to vector<24x16xf32>
    %300 = arith.mulf %299, %298 : vector<24x16xf32>
    %301 = arith.addf %296, %300 : vector<24x16xf32>
    %302 = vector.extract_strided_slice %272 {offsets = [0, 6], sizes = [24, 1], strides = [1, 1]} : vector<24x16xf32> to vector<24x1xf32>
    %303 = vector.extract_strided_slice %20 {offsets = [0, 96], sizes = [24, 16], strides = [1, 1]} : vector<24x256xf32> to vector<24x16xf32>
    %304 = vector.broadcast %302 : vector<24x1xf32> to vector<24x16xf32>
    %305 = arith.mulf %304, %303 : vector<24x16xf32>
    %306 = arith.addf %301, %305 : vector<24x16xf32>
    %307 = vector.extract_strided_slice %272 {offsets = [0, 7], sizes = [24, 1], strides = [1, 1]} : vector<24x16xf32> to vector<24x1xf32>
    %308 = vector.extract_strided_slice %20 {offsets = [0, 112], sizes = [24, 16], strides = [1, 1]} : vector<24x256xf32> to vector<24x16xf32>
    %309 = vector.broadcast %307 : vector<24x1xf32> to vector<24x16xf32>
    %310 = arith.mulf %309, %308 : vector<24x16xf32>
    %311 = arith.addf %306, %310 : vector<24x16xf32>
    %312 = vector.extract_strided_slice %272 {offsets = [0, 8], sizes = [24, 1], strides = [1, 1]} : vector<24x16xf32> to vector<24x1xf32>
    %313 = vector.extract_strided_slice %20 {offsets = [0, 128], sizes = [24, 16], strides = [1, 1]} : vector<24x256xf32> to vector<24x16xf32>
    %314 = vector.broadcast %312 : vector<24x1xf32> to vector<24x16xf32>
    %315 = arith.mulf %314, %313 : vector<24x16xf32>
    %316 = arith.addf %311, %315 : vector<24x16xf32>
    %317 = vector.extract_strided_slice %272 {offsets = [0, 9], sizes = [24, 1], strides = [1, 1]} : vector<24x16xf32> to vector<24x1xf32>
    %318 = vector.extract_strided_slice %20 {offsets = [0, 144], sizes = [24, 16], strides = [1, 1]} : vector<24x256xf32> to vector<24x16xf32>
    %319 = vector.broadcast %317 : vector<24x1xf32> to vector<24x16xf32>
    %320 = arith.mulf %319, %318 : vector<24x16xf32>
    %321 = arith.addf %316, %320 : vector<24x16xf32>
    %322 = vector.extract_strided_slice %272 {offsets = [0, 10], sizes = [24, 1], strides = [1, 1]} : vector<24x16xf32> to vector<24x1xf32>
    %323 = vector.extract_strided_slice %20 {offsets = [0, 160], sizes = [24, 16], strides = [1, 1]} : vector<24x256xf32> to vector<24x16xf32>
    %324 = vector.broadcast %322 : vector<24x1xf32> to vector<24x16xf32>
    %325 = arith.mulf %324, %323 : vector<24x16xf32>
    %326 = arith.addf %321, %325 : vector<24x16xf32>
    %327 = vector.extract_strided_slice %272 {offsets = [0, 11], sizes = [24, 1], strides = [1, 1]} : vector<24x16xf32> to vector<24x1xf32>
    %328 = vector.extract_strided_slice %20 {offsets = [0, 176], sizes = [24, 16], strides = [1, 1]} : vector<24x256xf32> to vector<24x16xf32>
    %329 = vector.broadcast %327 : vector<24x1xf32> to vector<24x16xf32>
    %330 = arith.mulf %329, %328 : vector<24x16xf32>
    %331 = arith.addf %326, %330 : vector<24x16xf32>
    %332 = vector.extract_strided_slice %272 {offsets = [0, 12], sizes = [24, 1], strides = [1, 1]} : vector<24x16xf32> to vector<24x1xf32>
    %333 = vector.extract_strided_slice %20 {offsets = [0, 192], sizes = [24, 16], strides = [1, 1]} : vector<24x256xf32> to vector<24x16xf32>
    %334 = vector.broadcast %332 : vector<24x1xf32> to vector<24x16xf32>
    %335 = arith.mulf %334, %333 : vector<24x16xf32>
    %336 = arith.addf %331, %335 : vector<24x16xf32>
    %337 = vector.extract_strided_slice %272 {offsets = [0, 13], sizes = [24, 1], strides = [1, 1]} : vector<24x16xf32> to vector<24x1xf32>
    %338 = vector.extract_strided_slice %20 {offsets = [0, 208], sizes = [24, 16], strides = [1, 1]} : vector<24x256xf32> to vector<24x16xf32>
    %339 = vector.broadcast %337 : vector<24x1xf32> to vector<24x16xf32>
    %340 = arith.mulf %339, %338 : vector<24x16xf32>
    %341 = arith.addf %336, %340 : vector<24x16xf32>
    %342 = vector.extract_strided_slice %272 {offsets = [0, 14], sizes = [24, 1], strides = [1, 1]} : vector<24x16xf32> to vector<24x1xf32>
    %343 = vector.extract_strided_slice %20 {offsets = [0, 224], sizes = [24, 16], strides = [1, 1]} : vector<24x256xf32> to vector<24x16xf32>
    %344 = vector.broadcast %342 : vector<24x1xf32> to vector<24x16xf32>
    %345 = arith.mulf %344, %343 : vector<24x16xf32>
    %346 = arith.addf %341, %345 : vector<24x16xf32>
    %347 = vector.extract_strided_slice %272 {offsets = [0, 15], sizes = [24, 1], strides = [1, 1]} : vector<24x16xf32> to vector<24x1xf32>
    %348 = vector.extract_strided_slice %20 {offsets = [0, 240], sizes = [24, 16], strides = [1, 1]} : vector<24x256xf32> to vector<24x16xf32>
    %349 = vector.broadcast %347 : vector<24x1xf32> to vector<24x16xf32>
    %350 = arith.mulf %349, %348 : vector<24x16xf32>
    %351 = arith.addf %346, %350 : vector<24x16xf32>
    %cst_73 = arith.constant dense<0.000000e+00> : vector<12x16xf32>
    %352 = tpu.matmul %22, %351, %cst_73 {dimension_numbers = #tpu.dot_dimension_numbers<[1], [0], [0], [1], [0, 0, 1, 1], [], []>} : vector<12x24xf32>, vector<24x16xf32>, vector<12x16xf32> -> vector<12x16xf32>
    %353 = arith.addf %352, %271 : vector<12x16xf32>
    %cst_74 = arith.constant 0.000000e+00 : f32
    %354 = vector.broadcast %cst_74 : f32 to vector<12x16xf32>
    %355 = arith.maximumf %353, %354 : vector<12x16xf32>
    %cst_75 = arith.constant dense<0.000000e+00> : vector<12x16xf32>
    %356 = tpu.matmul %355, %28, %cst_75 {dimension_numbers = #tpu.dot_dimension_numbers<[1], [0], [0], [1], [0, 0, 1, 1], [], []>} : vector<12x16xf32>, vector<16x16xf32>, vector<12x16xf32> -> vector<12x16xf32>
    %cst_76 = arith.constant dense<0.000000e+00> : vector<12x2xf32>
    %357 = tpu.matmul %356, %29, %cst_76 {dimension_numbers = #tpu.dot_dimension_numbers<[1], [0], [0], [1], [0, 0, 1, 1], [], []>} : vector<12x16xf32>, vector<16x2xf32>, vector<12x2xf32> -> vector<12x2xf32>
    %cst_77 = arith.constant dense<0.000000e+00> : vector<36x16xf32>
    %358 = tpu.matmul %23, %356, %cst_77 {dimension_numbers = #tpu.dot_dimension_numbers<[1], [0], [0], [1], [0, 0, 1, 1], [], []>} : vector<36x12xf32>, vector<12x16xf32>, vector<36x16xf32> -> vector<36x16xf32>
    %359 = vector.extract_strided_slice %357 {offsets = [0, 0], sizes = [12, 1], strides = [1, 1]} : vector<12x2xf32> to vector<12x1xf32>
    %cst_78 = arith.constant dense<0.000000e+00> : vector<36x1xf32>
    %360 = tpu.matmul %23, %359, %cst_78 {dimension_numbers = #tpu.dot_dimension_numbers<[1], [0], [0], [1], [0, 0, 1, 1], [], []>} : vector<36x12xf32>, vector<12x1xf32>, vector<36x1xf32> -> vector<36x1xf32>
    %361 = vector.extract_strided_slice %357 {offsets = [0, 1], sizes = [12, 1], strides = [1, 1]} : vector<12x2xf32> to vector<12x1xf32>
    %cst_79 = arith.constant dense<0.000000e+00> : vector<36x1xf32>
    %362 = tpu.matmul %24, %361, %cst_79 {dimension_numbers = #tpu.dot_dimension_numbers<[1], [0], [0], [1], [0, 0, 1, 1], [], []>} : vector<36x12xf32>, vector<12x1xf32>, vector<36x1xf32> -> vector<36x1xf32>
    %363 = arith.addf %360, %362 : vector<36x1xf32>
    %cst_80 = arith.constant 0.000000e+00 : f32
    %364 = vector.broadcast %cst_80 : f32 to vector<36x1xf32>
    %365 = arith.cmpf oge, %363, %364 : vector<36x1xf32>
    %cst_81 = arith.constant 2.000000e-01 : f32
    %366 = vector.broadcast %cst_81 : f32 to vector<36x1xf32>
    %367 = arith.mulf %366, %363 : vector<36x1xf32>
    %368 = arith.select %365, %363, %367 : vector<36x1xi1>, vector<36x1xf32>
    %369 = vector.shape_cast %368 : vector<36x1xf32> to vector<1x36x1xf32>
    %cst_82 = arith.constant dense<0xFF800000> : vector<1xf32>
    %370 = vector.multi_reduction <maximumf>, %369, %cst_82 [1, 2] : vector<1x36x1xf32> to vector<1xf32>
    %371 = vector.shape_cast %370 : vector<1xf32> to vector<1x1x1xf32>
    %372 = vector.extract %371[0, 0, 0] : f32 from vector<1x1x1xf32>
    %373 = vector.broadcast %372 : f32 to vector<36x1xf32>
    %374 = arith.subf %368, %373 : vector<36x1xf32>
    %375 = math.exp %374 : vector<36x1xf32>
    %376 = vector.broadcast %375 : vector<36x1xf32> to vector<36x16xf32>
    %377 = arith.mulf %376, %358 : vector<36x16xf32>
    %cst_83 = arith.constant dense<0.000000e+00> : vector<12x16xf32>
    %378 = tpu.matmul %25, %377, %cst_83 {dimension_numbers = #tpu.dot_dimension_numbers<[1], [0], [0], [1], [0, 0, 1, 1], [], []>} : vector<12x36xf32>, vector<36x16xf32>, vector<12x16xf32> -> vector<12x16xf32>
    %cst_84 = arith.constant dense<0.000000e+00> : vector<12x1xf32>
    %379 = tpu.matmul %25, %375, %cst_84 {dimension_numbers = #tpu.dot_dimension_numbers<[1], [0], [0], [1], [0, 0, 1, 1], [], []>} : vector<12x36xf32>, vector<36x1xf32>, vector<12x1xf32> -> vector<12x1xf32>
    %cst_85 = arith.constant 1.000000e-30 : f32
    %380 = vector.broadcast %cst_85 : f32 to vector<12x1xf32>
    %381 = arith.maximumf %379, %380 : vector<12x1xf32>
    %382 = vector.broadcast %381 : vector<12x1xf32> to vector<12x16xf32>
    %383 = arith.divf %378, %382 : vector<12x16xf32>
    %384 = vector.broadcast %30 : vector<1x16xf32> to vector<12x16xf32>
    %385 = arith.addf %383, %384 : vector<12x16xf32>
    %cst_86 = arith.constant 0.000000e+00 : f32
    %386 = vector.broadcast %cst_86 : f32 to vector<12x16xf32>
    %387 = arith.maximumf %385, %386 : vector<12x16xf32>
    %388 = arith.addf %149, %268 : vector<12x16xf32>
    %389 = arith.addf %388, %387 : vector<12x16xf32>
    %cst_87 = arith.constant 0.333333343 : f32
    %390 = vector.broadcast %cst_87 : f32 to vector<12x16xf32>
    %391 = arith.mulf %389, %390 : vector<12x16xf32>
    %c0_88 = arith.constant 0 : index
    %c0_89 = arith.constant 0 : index
    %392 = vector.load %arg7[%c0_88, %c0_89] : memref<2x12xf32, #tpu.memory_space<vmem>>, vector<2x12xf32>
    %cst_90 = arith.constant dense<0.000000e+00> : vector<2x16xf32>
    %393 = tpu.matmul %392, %391, %cst_90 {dimension_numbers = #tpu.dot_dimension_numbers<[1], [0], [0], [1], [0, 0, 1, 1], [], []>} : vector<2x12xf32>, vector<12x16xf32>, vector<2x16xf32> -> vector<2x16xf32>
    %c0_91 = arith.constant 0 : index
    %c0_92 = arith.constant 0 : index
    %394 = vector.load %arg19[%c0_91, %c0_92] : memref<16x16xf32, #tpu.memory_space<vmem>>, vector<16x16xf32>
    %cst_93 = arith.constant dense<0.000000e+00> : vector<2x16xf32>
    %395 = tpu.matmul %393, %394, %cst_93 {dimension_numbers = #tpu.dot_dimension_numbers<[1], [0], [0], [1], [0, 0, 1, 1], [], []>} : vector<2x16xf32>, vector<16x16xf32>, vector<2x16xf32> -> vector<2x16xf32>
    %c0_94 = arith.constant 0 : index
    %c0_95 = arith.constant 0 : index
    %396 = vector.load %arg20[%c0_94, %c0_95] : memref<1x16xf32, #tpu.memory_space<vmem>>, vector<1x16xf32>
    %397 = vector.broadcast %396 : vector<1x16xf32> to vector<2x16xf32>
    %398 = arith.addf %395, %397 : vector<2x16xf32>
    %cst_96 = arith.constant 0.000000e+00 : f32
    %399 = vector.broadcast %cst_96 : f32 to vector<2x16xf32>
    %400 = arith.maximumf %398, %399 : vector<2x16xf32>
    %c0_97 = arith.constant 0 : index
    %c0_98 = arith.constant 0 : index
    %401 = vector.load %arg21[%c0_97, %c0_98] : memref<16x1xf32, #tpu.memory_space<vmem>>, vector<16x1xf32>
    %cst_99 = arith.constant dense<0.000000e+00> : vector<2x1xf32>
    %402 = tpu.matmul %400, %401, %cst_99 {dimension_numbers = #tpu.dot_dimension_numbers<[1], [0], [0], [1], [0, 0, 1, 1], [], []>} : vector<2x16xf32>, vector<16x1xf32>, vector<2x1xf32> -> vector<2x1xf32>
    %c0_100 = arith.constant 0 : index
    %c0_101 = arith.constant 0 : index
    %403 = vector.load %arg22[%c0_100, %c0_101] : memref<1x1xf32, #tpu.memory_space<vmem>>, vector<1x1xf32>
    %404 = vector.broadcast %403 : vector<1x1xf32> to vector<2x1xf32>
    %405 = arith.addf %402, %404 : vector<2x1xf32>
    %c0_102 = arith.constant 0 : index
    %c0_103 = arith.constant 0 : index
    %406 = vector.load %arg23[%c0_102, %c0_103] : memref<2x1xf32, #tpu.memory_space<vmem>>, vector<2x1xf32>
    tpu.vector_store %arg23[%c0_102, %c0_103], %405 {strides = array<i32>} : memref<2x1xf32, #tpu.memory_space<vmem>>, vector<2x1xf32>,
    return
  }
}

</mosaic_0001>

<llo_original>
// kernel: forward.1
$region0: #{forward.1}
  #allocation0 [shape = 'u32[]', space=smem, size = 0x4, offset = 0x4, fixed_abs, tag = 'smem constant byte address 0x4 - core index']
  #allocation1 [shape = 'u32[144,128]{1,0:T(1,128)}', space=vmem, size = 0x12000, scoped, tag = 'internal scratch']
  #allocation2 [shape = 'f32[1,1]{1,0:T(1,128)S(1)}', space=vmem, size = 0x200, scoped, tag = 'scoped memory for forward.1']
  %s0 = inlined_call_operand.vmem [shape: f32[12,8], index: 0, kind: input, shape index: {}]
  %s1 = inlined_call_operand.vmem [shape: f32[24,3], index: 1, kind: input, shape index: {}]
  %s2 = inlined_call_operand.vmem [shape: f32[24,12], index: 2, kind: input, shape index: {}]
  %s3 = inlined_call_operand.vmem [shape: f32[12,24], index: 3, kind: input, shape index: {}]
  %s4 = inlined_call_operand.vmem [shape: f32[36,12], index: 4, kind: input, shape index: {}]
  %s5 = inlined_call_operand.vmem [shape: f32[36,12], index: 5, kind: input, shape index: {}]
  %s6 = inlined_call_operand.vmem [shape: f32[12,36], index: 6, kind: input, shape index: {}]
  %s7 = inlined_call_operand.vmem [shape: f32[2,12], index: 7, kind: input, shape index: {}]
  %s8 = inlined_call_operand.hbm [shape: f32[8,16], index: 8, kind: input, shape index: {}]
  %s9 = inlined_call_operand.hbm [shape: f32[1,16], index: 9, kind: input, shape index: {}]
  %s10 = inlined_call_operand.hbm [shape: f32[3,128], index: 10, kind: input, shape index: {}]
  %s11 = inlined_call_operand.hbm [shape: f32[1,128], index: 11, kind: input, shape index: {}]
  %s12 = inlined_call_operand.vmem [shape: f32[128,256], index: 12, kind: input, shape index: {}]
  %s13 = inlined_call_operand.hbm [shape: f32[1,256], index: 13, kind: input, shape index: {}]
  %s14 = inlined_call_operand.vmem [shape: f32[16,16], index: 14, kind: input, shape index: {}]
  %s15 = inlined_call_operand.hbm [shape: f32[1,16], index: 15, kind: input, shape index: {}]
  %s16 = inlined_call_operand.vmem [shape: f32[16,16], index: 16, kind: input, shape index: {}]
  %s17 = inlined_call_operand.vmem [shape: f32[16,2], index: 17, kind: input, shape index: {}]
  %s18 = inlined_call_operand.hbm [shape: f32[1,16], index: 18, kind: input, shape index: {}]
  %s19 = inlined_call_operand.hbm [shape: f32[16,16], index: 19, kind: input, shape index: {}]
  %s20 = inlined_call_operand.hbm [shape: f32[1,16], index: 20, kind: input, shape index: {}]
  %s21 = inlined_call_operand.vmem [shape: f32[16,1], index: 21, kind: input, shape index: {}]
  %s22 = inlined_call_operand.<no memory space> [shape: f32[1,1], index: 22, kind: input, shape index: {}]
  %s23 = inlined_call_operand.vmem [shape: f32[2,1], index: 23, kind: output, shape index: {}]
  %s24 = sld [smem:[#allocation0]]
  $region138: #{forward.1} parent=0
    _
  %s26 = ssub.s32 1, %s24
  %s27 = scalar_select 0, %s26, %s24
  %v28 = vstv %s22
  %29 = vst [vmem:[#allocation2] sm:$0x1] %v28
  $region1: #{forward.1} parent=0
    #allocation3 [shape = 'u8[4096]{0}', space=vmem, size = 0x1000, scoped, tag = 'input window, operand 8, single buffered']
    #allocation4 [shape = 's32[1]{0}', space=sflag, size = 0x4, scoped, tag = 'scoped memory for forward.1']
    #allocation5 [shape = 'u8[512]{0}', space=vmem, size = 0x400, scoped, tag = 'input window, operand 9, single buffered']
    #allocation6 [shape = 's32[1]{0}', space=sflag, size = 0x4, scoped, tag = 'scoped memory for forward.1']
    #allocation7 [shape = 'u8[2048]{0}', space=vmem, size = 0x800, scoped, tag = 'input window, operand 10, single buffered']
    #allocation8 [shape = 'u8[512]{0}', space=vmem, size = 0x400, scoped, tag = 'input window, operand 11, single buffered']
    #allocation9 [shape = 's32[1]{0}', space=sflag, size = 0x4, scoped, tag = 'scoped memory for forward.1']
    #allocation10 [shape = 'u8[1024]{0}', space=vmem, size = 0x400, scoped, tag = 'input window, operand 13, single buffered']
    #allocation11 [shape = 'u8[512]{0}', space=vmem, size = 0x400, scoped, tag = 'input window, operand 15, single buffered']
    #allocation12 [shape = 's32[1]{0}', space=sflag, size = 0x4, scoped, tag = 'scoped memory for forward.1']
    #allocation13 [shape = 'u8[512]{0}', space=vmem, size = 0x400, scoped, tag = 'input window, operand 18, single buffered']
    #allocation14 [shape = 'u8[8192]{0}', space=vmem, size = 0x2000, scoped, tag = 'input window, operand 19, single buffered']
    #allocation15 [shape = 's32[1]{0}', space=sflag, size = 0x4, scoped, tag = 'scoped memory for forward.1']
    #allocation16 [shape = 'u8[512]{0}', space=vmem, size = 0x400, scoped, tag = 'input window, operand 20, single buffered']
    %30 = vsyncpa [#allocation4], 0
    %31 = vsyncpa [#allocation6], 0
    %32 = vsyncpa [#allocation9], 0
    %33 = vsyncpa [#allocation12], 0
    %34 = vsyncpa [#allocation15], 0
    // Predicated region
    $region2: #{forward.1} parent=1 // pred_check
      _
    $region3: #{forward.1} parent=1 // pred_check_branch
      %36 = sbr.rel (0) target = $region5
    $region4: #{forward.1} parent=1 // pred_region
      _
    $region5: #{forward.1} parent=1 // pred_fallthru
      _
    // Predicated region
    $region6: #{forward.1} parent=1 // pred_check
      _
    $region7: #{forward.1} parent=1 // pred_check_branch
      %38 = sbr.rel (0) target = $region9
    $region8: #{forward.1} parent=1 // pred_region
      _
    $region9: #{forward.1} parent=1 // pred_fallthru
      _
    // Predicated region
    $region10: #{forward.1} parent=1 // pred_check
      _
    $region11: #{forward.1} parent=1 // pred_check_branch
      %40 = sbr.rel (0) target = $region13
    $region12: #{forward.1} parent=1 // pred_region
      _
    $region13: #{forward.1} parent=1 // pred_fallthru
      _
    // Predicated region
    $region14: #{forward.1} parent=1 // pred_check
      _
    $region15: #{forward.1} parent=1 // pred_check_branch
      %42 = sbr.rel (0) target = $region17
    $region16: #{forward.1} parent=1 // pred_region
      _
    $region17: #{forward.1} parent=1 // pred_fallthru
      _
    // Predicated region
    $region18: #{forward.1} parent=1 // pred_check
      _
    $region19: #{forward.1} parent=1 // pred_check_branch
      %44 = sbr.rel (0) target = $region21
    $region20: #{forward.1} parent=1 // pred_region
      _
    $region21: #{forward.1} parent=1 // pred_fallthru
      _
    // Predicated region
    $region22: #{forward.1} parent=1 // pred_check
      _
    $region23: #{forward.1} parent=1 // pred_check_branch
      %46 = sbr.rel (0) target = $region25
    $region24: #{forward.1} parent=1 // pred_region
      _
    $region25: #{forward.1} parent=1 // pred_fallthru
      _
    // Predicated region
    $region26: #{forward.1} parent=1 // pred_check
      _
    $region27: #{forward.1} parent=1 // pred_check_branch
      %48 = sbr.rel (0) target = $region29
    $region28: #{forward.1} parent=1 // pred_region
      _
    $region29: #{forward.1} parent=1 // pred_fallthru
      _
    // Predicated region
    $region30: #{forward.1} parent=1 // pred_check
      _
    $region31: #{forward.1} parent=1 // pred_check_branch
      %50 = sbr.rel (0) target = $region33
    $region32: #{forward.1} parent=1 // pred_region
      _
    $region33: #{forward.1} parent=1 // pred_fallthru
      _
    // Predicated region
    $region34: #{forward.1} parent=1 // pred_check
      _
    $region35: #{forward.1} parent=1 // pred_check_branch
      %52 = sbr.rel (0) target = $region37
    $region36: #{forward.1} parent=1 // pred_region
      %s54 = ssub.s32 128, 128
      %55 = vsyncadd [#allocation4], %s54
      %s57 = sshll.u32 [#allocation3], 4
      %s58 = int_to_ptr.vmem [resolvable:$true] %s57
      %60 = dma.hbm_to_vmem [thread:$0]  %s8, 128, %s58, [#allocation4]
    $region37: #{forward.1} parent=1 // pred_fallthru
      _
    // Predicated region
    $region38: #{forward.1} parent=1 // pred_check
      _
    $region39: #{forward.1} parent=1 // pred_check_branch
      %62 = sbr.rel (0) target = $region41
    $region40: #{forward.1} parent=1 // pred_region
      %s64 = ssub.s32 16, 16
      %65 = vsyncadd [#allocation6], %s64
      %s67 = sshll.u32 [#allocation5], 4
      %s68 = int_to_ptr.vmem [resolvable:$true] %s67
      %70 = dma.hbm_to_vmem [thread:$0]  %s9, 16, %s68, [#allocation6]
    $region41: #{forward.1} parent=1 // pred_fallthru
      _
    // Predicated region
    $region42: #{forward.1} parent=1 // pred_check
      _
    $region43: #{forward.1} parent=1 // pred_check_branch
      %72 = sbr.rel (0) target = $region45
    $region44: #{forward.1} parent=1 // pred_region
      %s74 = ssub.s32 64, 64
      %75 = vsyncadd [#allocation6], %s74
      %s77 = sshll.u32 [#allocation7], 4
      %s78 = int_to_ptr.vmem [resolvable:$true] %s77
      %80 = dma.hbm_to_vmem [thread:$0]  %s10, 64, %s78, [#allocation6]
    $region45: #{forward.1} parent=1 // pred_fallthru
      _
    // Predicated region
    $region46: #{forward.1} parent=1 // pred_check
      _
    $region47: #{forward.1} parent=1 // pred_check_branch
      %82 = sbr.rel (0) target = $region49
    $region48: #{forward.1} parent=1 // pred_region
      %s84 = ssub.s32 16, 16
      %85 = vsyncadd [#allocation9], %s84
      %s87 = sshll.u32 [#allocation8], 4
      %s88 = int_to_ptr.vmem [resolvable:$true] %s87
      %90 = dma.hbm_to_vmem [thread:$0]  %s11, 16, %s88, [#allocation9]
    $region49: #{forward.1} parent=1 // pred_fallthru
      _
    // Predicated region
    $region50: #{forward.1} parent=1 // pred_check
      _
    $region51: #{forward.1} parent=1 // pred_check_branch
      %92 = sbr.rel (0) target = $region53
    $region52: #{forward.1} parent=1 // pred_region
      _
    $region53: #{forward.1} parent=1 // pred_fallthru
      _
    // Predicated region
    $region54: #{forward.1} parent=1 // pred_check
      _
    $region55: #{forward.1} parent=1 // pred_check_branch
      %94 = sbr.rel (0) target = $region57
    $region56: #{forward.1} parent=1 // pred_region
      %s96 = ssub.s32 32, 32
      %97 = vsyncadd [#allocation9], %s96
      %s99 = sshll.u32 [#allocation10], 4
      %s100 = int_to_ptr.vmem [resolvable:$true] %s99
      %102 = dma.hbm_to_vmem [thread:$0]  %s13, 32, %s100, [#allocation9]
    $region57: #{forward.1} parent=1 // pred_fallthru
      _
    // Predicated region
    $region58: #{forward.1} parent=1 // pred_check
      _
    $region59: #{forward.1} parent=1 // pred_check_branch
      %104 = sbr.rel (0) target = $region61
    $region60: #{forward.1} parent=1 // pred_region
      _
    $region61: #{forward.1} parent=1 // pred_fallthru
      _
    // Predicated region
    $region62: #{forward.1} parent=1 // pred_check
      _
    $region63: #{forward.1} parent=1 // pred_check_branch
      %106 = sbr.rel (0) target = $region65
    $region64: #{forward.1} parent=1 // pred_region
      %s108 = ssub.s32 16, 16
      %109 = vsyncadd [#allocation12], %s108
      %s111 = sshll.u32 [#allocation11], 4
      %s112 = int_to_ptr.vmem [resolvable:$true] %s111
      %114 = dma.hbm_to_vmem [thread:$0]  %s15, 16, %s112, [#allocation12]
    $region65: #{forward.1} parent=1 // pred_fallthru
      _
    // Predicated region
    $region66: #{forward.1} parent=1 // pred_check
      _
    $region67: #{forward.1} parent=1 // pred_check_branch
      %116 = sbr.rel (0) target = $region69
    $region68: #{forward.1} parent=1 // pred_region
      _
    $region69: #{forward.1} parent=1 // pred_fallthru
      _
    // Predicated region
    $region70: #{forward.1} parent=1 // pred_check
      _
    $region71: #{forward.1} parent=1 // pred_check_branch
      %118 = sbr.rel (0) target = $region73
    $region72: #{forward.1} parent=1 // pred_region
      _
    $region73: #{forward.1} parent=1 // pred_fallthru
      _
    // Predicated region
    $region74: #{forward.1} parent=1 // pred_check
      _
    $region75: #{forward.1} parent=1 // pred_check_branch
      %120 = sbr.rel (0) target = $region77
    $region76: #{forward.1} parent=1 // pred_region
      %s122 = ssub.s32 16, 16
      %123 = vsyncadd [#allocation12], %s122
      %s125 = sshll.u32 [#allocation13], 4
      %s126 = int_to_ptr.vmem [resolvable:$true] %s125
      %128 = dma.hbm_to_vmem [thread:$0]  %s18, 16, %s126, [#allocation12]
    $region77: #{forward.1} parent=1 // pred_fallthru
      _
    // Predicated region
    $region78: #{forward.1} parent=1 // pred_check
      _
    $region79: #{forward.1} parent=1 // pred_check_branch
      %130 = sbr.rel (0) target = $region81
    $region80: #{forward.1} parent=1 // pred_region
      %s132 = ssub.s32 256, 256
      %133 = vsyncadd [#allocation15], %s132
      %s134 = sshll.u32 [#allocation14], 4
      %s135 = int_to_ptr.vmem [resolvable:$true] %s134
      %140 = dma.hbm_to_vmem [thread:$0]  %s19, 256, %s135, [#allocation15], 128, 128, 8
    $region81: #{forward.1} parent=1 // pred_fallthru
      _
    // Predicated region
    $region82: #{forward.1} parent=1 // pred_check
      _
    $region83: #{forward.1} parent=1 // pred_check_branch
      %142 = sbr.rel (0) target = $region85
    $region84: #{forward.1} parent=1 // pred_region
      %s144 = ssub.s32 16, 16
      %145 = vsyncadd [#allocation15], %s144
      %s147 = sshll.u32 [#allocation16], 4
      %s148 = int_to_ptr.vmem [resolvable:$true] %s147
      %150 = dma.hbm_to_vmem [thread:$0]  %s20, 16, %s148, [#allocation15]
    $region85: #{forward.1} parent=1 // pred_fallthru
      _
    // Predicated region
    $region86: #{forward.1} parent=1 // pred_check
      _
    $region87: #{forward.1} parent=1 // pred_check_branch
      %152 = sbr.rel (0) target = $region89
    $region88: #{forward.1} parent=1 // pred_region
      _
    $region89: #{forward.1} parent=1 // pred_fallthru
      _
    // Predicated region
    $region90: #{forward.1} parent=1 // pred_check
      _
    $region91: #{forward.1} parent=1 // pred_check_branch
      %154 = sbr.rel (0) target = $region93
    $region92: #{forward.1} parent=1 // pred_region
      _
    $region93: #{forward.1} parent=1 // pred_fallthru
      _
    // Predicated region
    $region94: #{forward.1} parent=1 // pred_check
      _
    $region95: #{forward.1} parent=1 // pred_check_branch
      %156 = sbr.rel (0) target = $region97
    $region96: #{forward.1} parent=1 // pred_region
      %157 = dma.done [#allocation4], 128
    $region97: #{forward.1} parent=1 // pred_fallthru
      _
    // Predicated region
    $region98: #{forward.1} parent=1 // pred_check
      _
    $region99: #{forward.1} parent=1 // pred_check_branch
      %159 = sbr.rel (0) target = $region101
    $region100: #{forward.1} parent=1 // pred_region
      %160 = dma.done [#allocation6], 16
    $region101: #{forward.1} parent=1 // pred_fallthru
      _
    // Predicated region
    $region102: #{forward.1} parent=1 // pred_check
      _
    $region103: #{forward.1} parent=1 // pred_check_branch
      %162 = sbr.rel (0) target = $region105
    $region104: #{forward.1} parent=1 // pred_region
      %163 = dma.done [#allocation6], 64
    $region105: #{forward.1} parent=1 // pred_fallthru
      _
    // Predicated region
    $region106: #{forward.1} parent=1 // pred_check
      _
    $region107: #{forward.1} parent=1 // pred_check_branch
      %165 = sbr.rel (0) target = $region109
    $region108: #{forward.1} parent=1 // pred_region
      %166 = dma.done [#allocation9], 16
    $region109: #{forward.1} parent=1 // pred_fallthru
      _
    // Predicated region
    $region110: #{forward.1} parent=1 // pred_check
      _
    $region111: #{forward.1} parent=1 // pred_check_branch
      %168 = sbr.rel (0) target = $region113
    $region112: #{forward.1} parent=1 // pred_region
      %169 = dma.done [#allocation9], 32
    $region113: #{forward.1} parent=1 // pred_fallthru
      _
    // Predicated region
    $region114: #{forward.1} parent=1 // pred_check
      _
    $region115: #{forward.1} parent=1 // pred_check_branch
      %171 = sbr.rel (0) target = $region117
    $region116: #{forward.1} parent=1 // pred_region
      %172 = dma.done [#allocation12], 16
    $region117: #{forward.1} parent=1 // pred_fallthru
      _
    // Predicated region
    $region118: #{forward.1} parent=1 // pred_check
      _
    $region119: #{forward.1} parent=1 // pred_check_branch
      %174 = sbr.rel (0) target = $region121
    $region120: #{forward.1} parent=1 // pred_region
      %175 = dma.done [#allocation12], 16
    $region121: #{forward.1} parent=1 // pred_fallthru
      _
    // Predicated region
    $region122: #{forward.1} parent=1 // pred_check
      _
    $region123: #{forward.1} parent=1 // pred_check_branch
      %177 = sbr.rel (0) target = $region125
    $region124: #{forward.1} parent=1 // pred_region
      %178 = dma.done [#allocation15], 256
    $region125: #{forward.1} parent=1 // pred_fallthru
      _
    // Predicated region
    $region126: #{forward.1} parent=1 // pred_check
      _
    $region127: #{forward.1} parent=1 // pred_check_branch
      %180 = sbr.rel (0) target = $region129
    $region128: #{forward.1} parent=1 // pred_region
      %181 = dma.done [#allocation15], 16
    $region129: #{forward.1} parent=1 // pred_fallthru
      _
    %v182 = vld [vmem:[%s0] sm:$0xff]
    %v183 = vld [vmem:[%s0 + $0x8] sm:$0xf]
    %v184 = vld [vmem:[#allocation3] sm:$0xff]
    %v185 = vld [vmem:[#allocation5] sm:$0x1]
    %v187 = vlaneseq
    %v188 = vshrl.u32 %v187, 7
    %v189 = vsub.s32 0, %v188
    %v190 = vrot.slane %v185, %v189
    %vm192 = vcmask 64512
    %v194 = vsel %vm192, %v182, 0
    %v197 = vsel %vm192, %v183, 0
    %199 = vmatprep.subr.mxu0 0.0
    %200 = vmatpush1.msra.mxu0 0.0
    %201 = vmatprep.subr.mxu0 0.0
    %202 = vmatpush1.msra.mxu0 0.0
    %203 = vmatprep.subr.mxu0 0.0
    %204 = vmatpush1.msra.mxu0 0.0
    %205 = vmatprep.subr.mxu0 0.0
    %206 = vmatpush1.msra.mxu0 0.0
    %207 = vmatprep.subr.mxu0 0.0
    %208 = vmatpush1.msra.mxu0 0.0
    %209 = vmatprep.subr.mxu0 0.0
    %210 = vmatpush1.msra.mxu0 0.0
    %211 = vmatprep.subr.mxu0 0.0
    %212 = vmatpush1.msra.mxu0 0.0
    %213 = vmatprep.subr.mxu0 0.0
    %214 = vmatpush1.msra.mxu0 0.0
    %215 = vmatprep.subr.mxu0 0.0
    %216 = vmatpush1.msra.mxu0 0.0
    %217 = vmatprep.subr.mxu0 0.0
    %218 = vmatpush1.msra.mxu0 0.0
    %219 = vmatprep.subr.mxu0 0.0
    %220 = vmatpush1.msra.mxu0 0.0
    %221 = vmatprep.subr.mxu0 0.0
    %222 = vmatpush1.msra.mxu0 0.0
    %223 = vmatprep.subr.mxu0 0.0
    %224 = vmatpush1.msra.mxu0 0.0
    %225 = vmatprep.subr.mxu0 0.0
    %226 = vmatpush1.msra.mxu0 0.0
    %227 = vmatprep.subr.mxu0 0.0
    %228 = vmatpush1.msra.mxu0 0.0
    %229 = vmatprep.subr.mxu0 0.0
    %230 = vmatpush1.msra.mxu0 %v184
    %231 = vmatprep.subr.mxu0 0.0
    %232 = vmatpush2.msra.mxu0 0.0
    %233 = vmatprep.subr.mxu0 0.0
    %234 = vmatpush2.msra.mxu0 0.0
    %235 = vmatprep.subr.mxu0 0.0
    %236 = vmatpush2.msra.mxu0 0.0
    %237 = vmatprep.subr.mxu0 0.0
    %238 = vmatpush2.msra.mxu0 0.0
    %239 = vmatprep.subr.mxu0 0.0
    %240 = vmatpush2.msra.mxu0 0.0
    %241 = vmatprep.subr.mxu0 0.0
    %242 = vmatpush2.msra.mxu0 0.0
    %243 = vmatprep.subr.mxu0 0.0
    %244 = vmatpush2.msra.mxu0 0.0
    %245 = vmatprep.subr.mxu0 0.0
    %246 = vmatpush2.msra.mxu0 0.0
    %247 = vmatprep.subr.mxu0 0.0
    %248 = vmatpush2.msra.mxu0 0.0
    %249 = vmatprep.subr.mxu0 0.0
    %250 = vmatpush2.msra.mxu0 0.0
    %251 = vmatprep.subr.mxu0 0.0
    %252 = vmatpush2.msra.mxu0 0.0
    %253 = vmatprep.subr.mxu0 0.0
    %254 = vmatpush2.msra.mxu0 0.0
    %255 = vmatprep.subr.mxu0 0.0
    %256 = vmatpush2.msra.mxu0 0.0
    %257 = vmatprep.subr.mxu0 0.0
    %258 = vmatpush2.msra.mxu0 0.0
    %259 = vmatprep.subr.mxu0 0.0
    %260 = vmatpush2.msra.mxu0 0.0
    %261 = vmatprep.subr.mxu0 0.0
    %262 = vmatpush2.msra.mxu0 0.0
    %263 = vmatprep.mubr.f32.mxu0 0.0
    %264 = vmatmul.mubr.f32.gmra.mxu0 %v194
    %v265 = vpop.f32.mrf.mxu0
    %v266 = vadd.f32 %v190, %v265
    %v267 = vpop.f32.mrf.mxu0
    %268 = vmatprep.mubr.f32.mxu0 0.0
    %269 = vmatmul.mubr.f32.gmra.mxu0 %v197
    %v270 = vpop.f32.mrf.mxu0
    %v271 = vadd.f32 %v190, %v270
    %v272 = vpop.f32.mrf.mxu0
    %273 = vdwg.mxu0
    %v274 = vmax.f32 %v266, 0.0
    %v275 = vmax.f32 %v271, 0.0
    %v276 = vld [vmem:[%s1] sm:$0xff]
    %v277 = vld [vmem:[%s1 + $0x8] sm:$0xff]
    %v278 = vld [vmem:[%s1 + $0x10] sm:$0xff]
    %v279 = vld [vmem:[#allocation7] sm:$0x7]
    %v280 = vld [vmem:[#allocation8] sm:$0x1]
    %v282 = vlaneseq
    %v283 = vshrl.u32 %v282, 7
    %v284 = vsub.s32 0, %v283
    %v285 = vrot.slane %v280, %v284
    %vm287 = vcmask 23552
    %v289 = vsel %vm287, %v276, 0
    %v292 = vsel %vm287, %v277, 0
    %v295 = vsel %vm287, %v278, 0
    %vm297 = vcmask 1042432
    %v299 = vsel %vm297, %v279, 0
    %301 = vmatprep.subr.mxu0 0.0
    %302 = vmatpush1.msra.mxu0 0.0
    %303 = vmatprep.subr.mxu0 0.0
    %304 = vmatpush1.msra.mxu0 0.0
    %305 = vmatprep.subr.mxu0 0.0
    %306 = vmatpush1.msra.mxu0 0.0
    %307 = vmatprep.subr.mxu0 0.0
    %308 = vmatpush1.msra.mxu0 0.0
    %309 = vmatprep.subr.mxu0 0.0
    %310 = vmatpush1.msra.mxu0 0.0
    %311 = vmatprep.subr.mxu0 0.0
    %312 = vmatpush1.msra.mxu0 0.0
    %313 = vmatprep.subr.mxu0 0.0
    %314 = vmatpush1.msra.mxu0 0.0
    %315 = vmatprep.subr.mxu0 0.0
    %316 = vmatpush1.msra.mxu0 0.0
    %317 = vmatprep.subr.mxu0 0.0
    %318 = vmatpush1.msra.mxu0 0.0
    %319 = vmatprep.subr.mxu0 0.0
    %320 = vmatpush1.msra.mxu0 0.0
    %321 = vmatprep.subr.mxu0 0.0
    %322 = vmatpush1.msra.mxu0 0.0
    %323 = vmatprep.subr.mxu0 0.0
    %324 = vmatpush1.msra.mxu0 0.0
    %325 = vmatprep.subr.mxu0 0.0
    %326 = vmatpush1.msra.mxu0 0.0
    %327 = vmatprep.subr.mxu0 0.0
    %328 = vmatpush1.msra.mxu0 0.0
    %329 = vmatprep.subr.mxu0 0.0
    %330 = vmatpush1.msra.mxu0 0.0
    %331 = vmatprep.subr.mxu0 0.0
    %332 = vmatpush1.msra.mxu0 %v299
    %333 = vmatprep.subr.mxu0 0.0
    %334 = vmatpush2.msra.mxu0 0.0
    %335 = vmatprep.subr.mxu0 0.0
    %336 = vmatpush2.msra.mxu0 0.0
    %337 = vmatprep.subr.mxu0 0.0
    %338 = vmatpush2.msra.mxu0 0.0
    %339 = vmatprep.subr.mxu0 0.0
    %340 = vmatpush2.msra.mxu0 0.0
    %341 = vmatprep.subr.mxu0 0.0
    %342 = vmatpush2.msra.mxu0 0.0
    %343 = vmatprep.subr.mxu0 0.0
    %344 = vmatpush2.msra.mxu0 0.0
    %345 = vmatprep.subr.mxu0 0.0
    %346 = vmatpush2.msra.mxu0 0.0
    %347 = vmatprep.subr.mxu0 0.0
    %348 = vmatpush2.msra.mxu0 0.0
    %349 = vmatprep.subr.mxu0 0.0
    %350 = vmatpush2.msra.mxu0 0.0
    %351 = vmatprep.subr.mxu0 0.0
    %352 = vmatpush2.msra.mxu0 0.0
    %353 = vmatprep.subr.mxu0 0.0
    %354 = vmatpush2.msra.mxu0 0.0
    %355 = vmatprep.subr.mxu0 0.0
    %356 = vmatpush2.msra.mxu0 0.0
    %357 = vmatprep.subr.mxu0 0.0
    %358 = vmatpush2.msra.mxu0 0.0
    %359 = vmatprep.subr.mxu0 0.0
    %360 = vmatpush2.msra.mxu0 0.0
    %361 = vmatprep.subr.mxu0 0.0
    %362 = vmatpush2.msra.mxu0 0.0
    %363 = vmatprep.subr.mxu0 0.0
    %364 = vmatpush2.msra.mxu0 0.0
    %365 = vmatprep.mubr.f32.mxu0 0.0
    %366 = vmatmul.mubr.f32.gmra.mxu0 %v289
    %v367 = vpop.f32.mrf.mxu0
    %v368 = vadd.f32 %v285, %v367
    %v369 = vpop.f32.mrf.mxu0
    %370 = vmatprep.mubr.f32.mxu0 0.0
    %371 = vmatmul.mubr.f32.gmra.mxu0 %v292
    %v372 = vpop.f32.mrf.mxu0
    %v373 = vadd.f32 %v285, %v372
    %v374 = vpop.f32.mrf.mxu0
    %375 = vmatprep.mubr.f32.mxu0 0.0
    %376 = vmatmul.mubr.f32.gmra.mxu0 %v295
    %v377 = vpop.f32.mrf.mxu0
    %v378 = vadd.f32 %v285, %v377
    %v379 = vpop.f32.mrf.mxu0
    %380 = vdwg.mxu0
    %v381 = vmax.f32 %v368, 0.0
    %v382 = vmax.f32 %v373, 0.0
    %v383 = vmax.f32 %v378, 0.0
    %v384 = vld [vmem:[%s12] sm:$0xff]
    %v385 = vld [vmem:[%s12 + $0x8] sm:$0xff]
    %v386 = vld [vmem:[%s12 + $0x10] sm:$0xff]
    %v387 = vld [vmem:[%s12 + $0x18] sm:$0xff]
    %v388 = vld [vmem:[%s12 + $0x20] sm:$0xff]
    %v389 = vld [vmem:[%s12 + $0x28] sm:$0xff]
    %v390 = vld [vmem:[%s12 + $0x30] sm:$0xff]
    %v391 = vld [vmem:[%s12 + $0x38] sm:$0xff]
    %v392 = vld [vmem:[%s12 + $0x40] sm:$0xff]
    %v393 = vld [vmem:[%s12 + $0x48] sm:$0xff]
    %v394 = vld [vmem:[%s12 + $0x50] sm:$0xff]
    %v395 = vld [vmem:[%s12 + $0x58] sm:$0xff]
    %v396 = vld [vmem:[%s12 + $0x60] sm:$0xff]
    %v397 = vld [vmem:[%s12 + $0x68] sm:$0xff]
    %v398 = vld [vmem:[%s12 + $0x70] sm:$0xff]
    %v399 = vld [vmem:[%s12 + $0x78] sm:$0xff]
    %v400 = vld [vmem:[%s12 + $0x80] sm:$0xff]
    %v401 = vld [vmem:[%s12 + $0x88] sm:$0xff]
    %v402 = vld [vmem:[%s12 + $0x90] sm:$0xff]
    %v403 = vld [vmem:[%s12 + $0x98] sm:$0xff]
    %v404 = vld [vmem:[%s12 + $0xa0] sm:$0xff]
    %v405 = vld [vmem:[%s12 + $0xa8] sm:$0xff]
    %v406 = vld [vmem:[%s12 + $0xb0] sm:$0xff]
    %v407 = vld [vmem:[%s12 + $0xb8] sm:$0xff]
    %v408 = vld [vmem:[%s12 + $0xc0] sm:$0xff]
    %v409 = vld [vmem:[%s12 + $0xc8] sm:$0xff]
    %v410 = vld [vmem:[%s12 + $0xd0] sm:$0xff]
    %v411 = vld [vmem:[%s12 + $0xd8] sm:$0xff]
    %v412 = vld [vmem:[%s12 + $0xe0] sm:$0xff]
    %v413 = vld [vmem:[%s12 + $0xe8] sm:$0xff]
    %v414 = vld [vmem:[%s12 + $0xf0] sm:$0xff]
    %v415 = vld [vmem:[%s12 + $0xf8] sm:$0xff]
    %v416 = vld [vmem:[#allocation10] sm:$0x3]
    %v418 = vlaneseq
    %v419 = vshrl.u32 %v418, 7
    %v420 = vsub.s32 0, %v419
    %v421 = vrot.slane %v416, %v420
    %v422 = vlaneseq
    %v423 = vshrl.u32 %v422, 7
    %v424 = vsub.s32 1, %v423
    %v425 = vrot.slane %v416, %v424
    %428 = vmatprep.subr.mxu0 %v415
    %429 = vmatpush1.msra.mxu0 %v414
    %430 = vmatprep.subr.mxu0 %v413
    %431 = vmatpush1.msra.mxu0 %v412
    %432 = vmatprep.subr.mxu0 %v411
    %433 = vmatpush1.msra.mxu0 %v410
    %434 = vmatprep.subr.mxu0 %v409
    %435 = vmatpush1.msra.mxu0 %v408
    %436 = vmatprep.subr.mxu0 %v407
    %437 = vmatpush1.msra.mxu0 %v406
    %438 = vmatprep.subr.mxu0 %v405
    %439 = vmatpush1.msra.mxu0 %v404
    %440 = vmatprep.subr.mxu0 %v403
    %441 = vmatpush1.msra.mxu0 %v402
    %442 = vmatprep.subr.mxu0 %v401
    %443 = vmatpush1.msra.mxu0 %v400
    %444 = vmatprep.subr.mxu0 %v399
    %445 = vmatpush1.msra.mxu0 %v398
    %446 = vmatprep.subr.mxu0 %v397
    %447 = vmatpush1.msra.mxu0 %v396
    %448 = vmatprep.subr.mxu0 %v395
    %449 = vmatpush1.msra.mxu0 %v394
    %450 = vmatprep.subr.mxu0 %v393
    %451 = vmatpush1.msra.mxu0 %v392
    %452 = vmatprep.subr.mxu0 %v391
    %453 = vmatpush1.msra.mxu0 %v390
    %454 = vmatprep.subr.mxu0 %v389
    %455 = vmatpush1.msra.mxu0 %v388
    %456 = vmatprep.subr.mxu0 %v387
    %457 = vmatpush1.msra.mxu0 %v386
    %458 = vmatprep.subr.mxu0 %v385
    %459 = vmatpush1.msra.mxu0 %v384
    %460 = vmatprep.subr.mxu0 0.0
    %461 = vmatpush2.msra.mxu0 0.0
    %462 = vmatprep.subr.mxu0 0.0
    %463 = vmatpush2.msra.mxu0 0.0
    %464 = vmatprep.subr.mxu0 0.0
    %465 = vmatpush2.msra.mxu0 0.0
    %466 = vmatprep.subr.mxu0 0.0
    %467 = vmatpush2.msra.mxu0 0.0
    %468 = vmatprep.subr.mxu0 0.0
    %469 = vmatpush2.msra.mxu0 0.0
    %470 = vmatprep.subr.mxu0 0.0
    %471 = vmatpush2.msra.mxu0 0.0
    %472 = vmatprep.subr.mxu0 0.0
    %473 = vmatpush2.msra.mxu0 0.0
    %474 = vmatprep.subr.mxu0 0.0
    %475 = vmatpush2.msra.mxu0 0.0
    %476 = vmatprep.subr.mxu0 0.0
    %477 = vmatpush2.msra.mxu0 0.0
    %478 = vmatprep.subr.mxu0 0.0
    %479 = vmatpush2.msra.mxu0 0.0
    %480 = vmatprep.subr.mxu0 0.0
    %481 = vmatpush2.msra.mxu0 0.0
    %482 = vmatprep.subr.mxu0 0.0
    %483 = vmatpush2.msra.mxu0 0.0
    %484 = vmatprep.subr.mxu0 0.0
    %485 = vmatpush2.msra.mxu0 0.0
    %486 = vmatprep.subr.mxu0 0.0
    %487 = vmatpush2.msra.mxu0 0.0
    %488 = vmatprep.subr.mxu0 0.0
    %489 = vmatpush2.msra.mxu0 0.0
    %490 = vmatprep.subr.mxu0 0.0
    %491 = vmatpush2.msra.mxu0 0.0
    %492 = vmatprep.mubr.f32.mxu0 0.0
    %493 = vmatmul.mubr.f32.gmra.mxu0 %v381
    %v494 = vpop.f32.mrf.mxu0
    %v495 = vadd.f32 %v421, %v494
    %v496 = vpop.f32.mrf.mxu0
    %v497 = vadd.f32 %v425, %v496
    %498 = vmatprep.mubr.f32.mxu0 0.0
    %499 = vmatmul.mubr.f32.gmra.mxu0 %v382
    %v500 = vpop.f32.mrf.mxu0
    %v501 = vadd.f32 %v421, %v500
    %v502 = vpop.f32.mrf.mxu0
    %v503 = vadd.f32 %v425, %v502
    %504 = vmatprep.mubr.f32.mxu0 0.0
    %505 = vmatmul.mubr.f32.gmra.mxu0 %v383
    %v506 = vpop.f32.mrf.mxu0
    %v507 = vadd.f32 %v421, %v506
    %v508 = vpop.f32.mrf.mxu0
    %v509 = vadd.f32 %v425, %v508
    %510 = vdwg.mxu0
    %v511 = vld [vmem:[%s2] sm:$0xff]
    %v512 = vld [vmem:[%s2 + $0x8] sm:$0xff]
    %v513 = vld [vmem:[%s2 + $0x10] sm:$0xff]
    %v514 = vld [vmem:[%s3] sm:$0xff]
    %v515 = vld [vmem:[%s3 + $0x8] sm:$0xf]
    %v516 = vld [vmem:[%s4] sm:$0xff]
    %v517 = vld [vmem:[%s4 + $0x8] sm:$0xff]
    %v518 = vld [vmem:[%s4 + $0x10] sm:$0xff]
    %v519 = vld [vmem:[%s4 + $0x18] sm:$0xff]
    %v520 = vld [vmem:[%s4 + $0x20] sm:$0xf]
    %v521 = vld [vmem:[%s5] sm:$0xff]
    %v522 = vld [vmem:[%s5 + $0x8] sm:$0xff]
    %v523 = vld [vmem:[%s5 + $0x10] sm:$0xff]
    %v524 = vld [vmem:[%s5 + $0x18] sm:$0xff]
    %v525 = vld [vmem:[%s5 + $0x20] sm:$0xf]
    %v526 = vld [vmem:[%s6] sm:$0xff]
    %v527 = vld [vmem:[%s6 + $0x8] sm:$0xf]
    %v528 = vld [vmem:[%s14] sm:$0xff]
    %v529 = vld [vmem:[%s14 + $0x8] sm:$0xff]
    %v530 = vld [vmem:[#allocation11] sm:$0x1]
    %v531 = vld [vmem:[%s16] sm:$0xff]
    %v532 = vld [vmem:[%s16 + $0x8] sm:$0xff]
    %v533 = vld [vmem:[%s17] sm:$0xff]
    %v534 = vld [vmem:[%s17 + $0x8] sm:$0xff]
    %v535 = vld [vmem:[#allocation13] sm:$0x1]
    %v537 = vlaneseq
    %v538 = vshrl.u32 %v537, 7
    %v539 = vsub.s32 0, %v538
    %v540 = vrot.slane %v530, %v539
    %vm542 = vcmask 130048
    %v544 = vsel %vm542, %v274, 0
    %v547 = vsel %vm542, %v275, 0
    %549 = vmatprep.subr.mxu0 0.0
    %550 = vmatpush1.msra.mxu0 0.0
    %551 = vmatprep.subr.mxu0 0.0
    %552 = vmatpush1.msra.mxu0 0.0
    %553 = vmatprep.subr.mxu0 0.0
    %554 = vmatpush1.msra.mxu0 0.0
    %555 = vmatprep.subr.mxu0 0.0
    %556 = vmatpush1.msra.mxu0 0.0
    %557 = vmatprep.subr.mxu0 0.0
    %558 = vmatpush1.msra.mxu0 0.0
    %559 = vmatprep.subr.mxu0 0.0
    %560 = vmatpush1.msra.mxu0 0.0
    %561 = vmatprep.subr.mxu0 0.0
    %562 = vmatpush1.msra.mxu0 0.0
    %563 = vmatprep.subr.mxu0 0.0
    %564 = vmatpush1.msra.mxu0 0.0
    %565 = vmatprep.subr.mxu0 0.0
    %566 = vmatpush1.msra.mxu0 0.0
    %567 = vmatprep.subr.mxu0 0.0
    %568 = vmatpush1.msra.mxu0 0.0
    %569 = vmatprep.subr.mxu0 0.0
    %570 = vmatpush1.msra.mxu0 0.0
    %571 = vmatprep.subr.mxu0 0.0
    %572 = vmatpush1.msra.mxu0 0.0
    %573 = vmatprep.subr.mxu0 0.0
    %574 = vmatpush1.msra.mxu0 0.0
    %575 = vmatprep.subr.mxu0 0.0
    %576 = vmatpush1.msra.mxu0 0.0
    %577 = vmatprep.subr.mxu0 0.0
    %578 = vmatpush1.msra.mxu0 %v529
    %579 = vmatprep.subr.mxu0 0.0
    %580 = vmatpush1.msra.mxu0 %v528
    %581 = vmatprep.subr.mxu0 0.0
    %582 = vmatpush2.msra.mxu0 0.0
    %583 = vmatprep.subr.mxu0 0.0
    %584 = vmatpush2.msra.mxu0 0.0
    %585 = vmatprep.subr.mxu0 0.0
    %586 = vmatpush2.msra.mxu0 0.0
    %587 = vmatprep.subr.mxu0 0.0
    %588 = vmatpush2.msra.mxu0 0.0
    %589 = vmatprep.subr.mxu0 0.0
    %590 = vmatpush2.msra.mxu0 0.0
    %591 = vmatprep.subr.mxu0 0.0
    %592 = vmatpush2.msra.mxu0 0.0
    %593 = vmatprep.subr.mxu0 0.0
    %594 = vmatpush2.msra.mxu0 0.0
    %595 = vmatprep.subr.mxu0 0.0
    %596 = vmatpush2.msra.mxu0 0.0
    %597 = vmatprep.subr.mxu0 0.0
    %598 = vmatpush2.msra.mxu0 0.0
    %599 = vmatprep.subr.mxu0 0.0
    %600 = vmatpush2.msra.mxu0 0.0
    %601 = vmatprep.subr.mxu0 0.0
    %602 = vmatpush2.msra.mxu0 0.0
    %603 = vmatprep.subr.mxu0 0.0
    %604 = vmatpush2.msra.mxu0 0.0
    %605 = vmatprep.subr.mxu0 0.0
    %606 = vmatpush2.msra.mxu0 0.0
    %607 = vmatprep.subr.mxu0 0.0
    %608 = vmatpush2.msra.mxu0 0.0
    %609 = vmatprep.subr.mxu0 0.0
    %610 = vmatpush2.msra.mxu0 0.0
    %611 = vmatprep.subr.mxu0 0.0
    %612 = vmatpush2.msra.mxu0 0.0
    %613 = vmatprep.mubr.f32.mxu0 0.0
    %614 = vmatmul.mubr.f32.gmra.mxu0 %v544
    %v615 = vpop.f32.mrf.mxu0
    %v616 = vadd.f32 %v540, %v615
    %v617 = vpop.f32.mrf.mxu0
    %618 = vmatprep.mubr.f32.mxu0 0.0
    %619 = vmatmul.mubr.f32.gmra.mxu0 %v547
    %v620 = vpop.f32.mrf.mxu0
    %v621 = vadd.f32 %v540, %v620
    %v622 = vpop.f32.mrf.mxu0
    %623 = vdwg.mxu0
    %vm624 = vcmask 97280
    %v626 = vsel %vm624, %v511, 0
    %v629 = vsel %vm624, %v512, 0
    %v632 = vsel %vm624, %v513, 0
    %vm634 = vcmask 1043456
    %v635 = vsel %vm634, %v275, 0
    %637 = vmatprep.subr.mxu0 0.0
    %638 = vmatpush1.msra.mxu0 0.0
    %639 = vmatprep.subr.mxu0 0.0
    %640 = vmatpush1.msra.mxu0 0.0
    %641 = vmatprep.subr.mxu0 0.0
    %642 = vmatpush1.msra.mxu0 0.0
    %643 = vmatprep.subr.mxu0 0.0
    %644 = vmatpush1.msra.mxu0 0.0
    %645 = vmatprep.subr.mxu0 0.0
    %646 = vmatpush1.msra.mxu0 0.0
    %647 = vmatprep.subr.mxu0 0.0
    %648 = vmatpush1.msra.mxu0 0.0
    %649 = vmatprep.subr.mxu0 0.0
    %650 = vmatpush1.msra.mxu0 0.0
    %651 = vmatprep.subr.mxu0 0.0
    %652 = vmatpush1.msra.mxu0 0.0
    %653 = vmatprep.subr.mxu0 0.0
    %654 = vmatpush1.msra.mxu0 0.0
    %655 = vmatprep.subr.mxu0 0.0
    %656 = vmatpush1.msra.mxu0 0.0
    %657 = vmatprep.subr.mxu0 0.0
    %658 = vmatpush1.msra.mxu0 0.0
    %659 = vmatprep.subr.mxu0 0.0
    %660 = vmatpush1.msra.mxu0 0.0
    %661 = vmatprep.subr.mxu0 0.0
    %662 = vmatpush1.msra.mxu0 0.0
    %663 = vmatprep.subr.mxu0 0.0
    %664 = vmatpush1.msra.mxu0 0.0
    %665 = vmatprep.subr.mxu0 0.0
    %666 = vmatpush1.msra.mxu0 %v635
    %667 = vmatprep.subr.mxu0 0.0
    %668 = vmatpush1.msra.mxu0 %v274
    %669 = vmatprep.subr.mxu0 0.0
    %670 = vmatpush2.msra.mxu0 0.0
    %671 = vmatprep.subr.mxu0 0.0
    %672 = vmatpush2.msra.mxu0 0.0
    %673 = vmatprep.subr.mxu0 0.0
    %674 = vmatpush2.msra.mxu0 0.0
    %675 = vmatprep.subr.mxu0 0.0
    %676 = vmatpush2.msra.mxu0 0.0
    %677 = vmatprep.subr.mxu0 0.0
    %678 = vmatpush2.msra.mxu0 0.0
    %679 = vmatprep.subr.mxu0 0.0
    %680 = vmatpush2.msra.mxu0 0.0
    %681 = vmatprep.subr.mxu0 0.0
    %682 = vmatpush2.msra.mxu0 0.0
    %683 = vmatprep.subr.mxu0 0.0
    %684 = vmatpush2.msra.mxu0 0.0
    %685 = vmatprep.subr.mxu0 0.0
    %686 = vmatpush2.msra.mxu0 0.0
    %687 = vmatprep.subr.mxu0 0.0
    %688 = vmatpush2.msra.mxu0 0.0
    %689 = vmatprep.subr.mxu0 0.0
    %690 = vmatpush2.msra.mxu0 0.0
    %691 = vmatprep.subr.mxu0 0.0
    %692 = vmatpush2.msra.mxu0 0.0
    %693 = vmatprep.subr.mxu0 0.0
    %694 = vmatpush2.msra.mxu0 0.0
    %695 = vmatprep.subr.mxu0 0.0
    %696 = vmatpush2.msra.mxu0 0.0
    %697 = vmatprep.subr.mxu0 0.0
    %698 = vmatpush2.msra.mxu0 0.0
    %699 = vmatprep.subr.mxu0 0.0
    %700 = vmatpush2.msra.mxu0 0.0
    %701 = vmatprep.mubr.f32.mxu0 0.0
    %702 = vmatmul.mubr.f32.gmra.mxu0 %v626
    %v703 = vpop.f32.mrf.mxu0
    %v704 = vadd.f32 0.0, %v703
    %v705 = vpop.f32.mrf.mxu0
    %706 = vmatprep.mubr.f32.mxu0 0.0
    %707 = vmatmul.mubr.f32.gmra.mxu0 %v629
    %v708 = vpop.f32.mrf.mxu0
    %v709 = vadd.f32 0.0, %v708
    %v710 = vpop.f32.mrf.mxu0
    %711 = vmatprep.mubr.f32.mxu0 0.0
    %712 = vmatmul.mubr.f32.gmra.mxu0 %v632
    %v713 = vpop.f32.mrf.mxu0
    %v714 = vadd.f32 0.0, %v713
    %v715 = vpop.f32.mrf.mxu0
    %716 = vdwg.mxu0
    %718 = vset.pattern.permute.xlu0 0
    %719 = vperm.xlu0 %718, %v704
    %v720 = vpop.permute.xlu0 %719
    %723 = vset.pattern.permute.xlu0 0
    %724 = vperm.xlu0 %723, %v709
    %v725 = vpop.permute.xlu0 %724
    %728 = vset.pattern.permute.xlu0 0
    %729 = vperm.xlu0 %728, %v714
    %v730 = vpop.permute.xlu0 %729
    %v732 = vmul.f32 %v720, %v495
    %v733 = vmul.f32 %v725, %v501
    %v734 = vmul.f32 %v730, %v507
    %735 = vset.pattern.permute.xlu0 1
    %736 = vperm.xlu0 %735, %v704
    %v737 = vpop.permute.xlu0 %736
    %739 = vset.pattern.permute.xlu0 1
    %740 = vperm.xlu0 %739, %v709
    %v741 = vpop.permute.xlu0 %740
    %743 = vset.pattern.permute.xlu0 1
    %744 = vperm.xlu0 %743, %v714
    %v745 = vpop.permute.xlu0 %744
    %v747 = vmul.f32 %v737, %v495
    %v748 = vmul.f32 %v741, %v501
    %v749 = vmul.f32 %v745, %v507
    %753 = vrot.lane.b32.xlu0 %v747, 112
    %v754 = vpop.permute.xlu0 %753
    %755 = vrot.lane.b32.xlu0 %v748, 112
    %v756 = vpop.permute.xlu0 %755
    %757 = vrot.lane.b32.xlu0 %v749, 112
    %v758 = vpop.permute.xlu0 %757
    %v762 = vadd.f32 %v732, %v754
    %v763 = vadd.f32 %v733, %v756
    %v764 = vadd.f32 %v734, %v758
    %765 = vset.pattern.permute.xlu0 2
    %766 = vperm.xlu0 %765, %v704
    %v767 = vpop.permute.xlu0 %766
    %769 = vset.pattern.permute.xlu0 2
    %770 = vperm.xlu0 %769, %v709
    %v771 = vpop.permute.xlu0 %770
    %773 = vset.pattern.permute.xlu0 2
    %774 = vperm.xlu0 %773, %v714
    %v775 = vpop.permute.xlu0 %774
    %v777 = vmul.f32 %v767, %v495
    %v778 = vmul.f32 %v771, %v501
    %v779 = vmul.f32 %v775, %v507
    %783 = vrot.lane.b32.xlu0 %v777, 96
    %v784 = vpop.permute.xlu0 %783
    %785 = vrot.lane.b32.xlu0 %v778, 96
    %v786 = vpop.permute.xlu0 %785
    %787 = vrot.lane.b32.xlu0 %v779, 96
    %v788 = vpop.permute.xlu0 %787
    %v792 = vadd.f32 %v762, %v784
    %v793 = vadd.f32 %v763, %v786
    %v794 = vadd.f32 %v764, %v788
    %795 = vset.pattern.permute.xlu0 3
    %796 = vperm.xlu0 %795, %v704
    %v797 = vpop.permute.xlu0 %796
    %799 = vset.pattern.permute.xlu0 3
    %800 = vperm.xlu0 %799, %v709
    %v801 = vpop.permute.xlu0 %800
    %803 = vset.pattern.permute.xlu0 3
    %804 = vperm.xlu0 %803, %v714
    %v805 = vpop.permute.xlu0 %804
    %v807 = vmul.f32 %v797, %v495
    %v808 = vmul.f32 %v801, %v501
    %v809 = vmul.f32 %v805, %v507
    %813 = vrot.lane.b32.xlu0 %v807, 80
    %v814 = vpop.permute.xlu0 %813
    %815 = vrot.lane.b32.xlu0 %v808, 80
    %v816 = vpop.permute.xlu0 %815
    %817 = vrot.lane.b32.xlu0 %v809, 80
    %v818 = vpop.permute.xlu0 %817
    %v822 = vadd.f32 %v792, %v814
    %v823 = vadd.f32 %v793, %v816
    %v824 = vadd.f32 %v794, %v818
    %825 = vset.pattern.permute.xlu0 4
    %826 = vperm.xlu0 %825, %v704
    %v827 = vpop.permute.xlu0 %826
    %829 = vset.pattern.permute.xlu0 4
    %830 = vperm.xlu0 %829, %v709
    %v831 = vpop.permute.xlu0 %830
    %833 = vset.pattern.permute.xlu0 4
    %834 = vperm.xlu0 %833, %v714
    %v835 = vpop.permute.xlu0 %834
    %v837 = vmul.f32 %v827, %v495
    %v838 = vmul.f32 %v831, %v501
    %v839 = vmul.f32 %v835, %v507
    %843 = vrot.lane.b32.xlu0 %v837, 64
    %v844 = vpop.permute.xlu0 %843
    %845 = vrot.lane.b32.xlu0 %v838, 64
    %v846 = vpop.permute.xlu0 %845
    %847 = vrot.lane.b32.xlu0 %v839, 64
    %v848 = vpop.permute.xlu0 %847
    %v852 = vadd.f32 %v822, %v844
    %v853 = vadd.f32 %v823, %v846
    %v854 = vadd.f32 %v824, %v848
    %855 = vset.pattern.permute.xlu0 5
    %856 = vperm.xlu0 %855, %v704
    %v857 = vpop.permute.xlu0 %856
    %859 = vset.pattern.permute.xlu0 5
    %860 = vperm.xlu0 %859, %v709
    %v861 = vpop.permute.xlu0 %860
    %863 = vset.pattern.permute.xlu0 5
    %864 = vperm.xlu0 %863, %v714
    %v865 = vpop.permute.xlu0 %864
    %v867 = vmul.f32 %v857, %v495
    %v868 = vmul.f32 %v861, %v501
    %v869 = vmul.f32 %v865, %v507
    %873 = vrot.lane.b32.xlu0 %v867, 48
    %v874 = vpop.permute.xlu0 %873
    %875 = vrot.lane.b32.xlu0 %v868, 48
    %v876 = vpop.permute.xlu0 %875
    %877 = vrot.lane.b32.xlu0 %v869, 48
    %v878 = vpop.permute.xlu0 %877
    %v882 = vadd.f32 %v852, %v874
    %v883 = vadd.f32 %v853, %v876
    %v884 = vadd.f32 %v854, %v878
    %885 = vset.pattern.permute.xlu0 6
    %886 = vperm.xlu0 %885, %v704
    %v887 = vpop.permute.xlu0 %886
    %889 = vset.pattern.permute.xlu0 6
    %890 = vperm.xlu0 %889, %v709
    %v891 = vpop.permute.xlu0 %890
    %893 = vset.pattern.permute.xlu0 6
    %894 = vperm.xlu0 %893, %v714
    %v895 = vpop.permute.xlu0 %894
    %v897 = vmul.f32 %v887, %v495
    %v898 = vmul.f32 %v891, %v501
    %v899 = vmul.f32 %v895, %v507
    %903 = vrot.lane.b32.xlu0 %v897, 32
    %v904 = vpop.permute.xlu0 %903
    %905 = vrot.lane.b32.xlu0 %v898, 32
    %v906 = vpop.permute.xlu0 %905
    %907 = vrot.lane.b32.xlu0 %v899, 32
    %v908 = vpop.permute.xlu0 %907
    %v912 = vadd.f32 %v882, %v904
    %v913 = vadd.f32 %v883, %v906
    %v914 = vadd.f32 %v884, %v908
    %915 = vset.pattern.permute.xlu0 7
    %916 = vperm.xlu0 %915, %v704
    %v917 = vpop.permute.xlu0 %916
    %919 = vset.pattern.permute.xlu0 7
    %920 = vperm.xlu0 %919, %v709
    %v921 = vpop.permute.xlu0 %920
    %923 = vset.pattern.permute.xlu0 7
    %924 = vperm.xlu0 %923, %v714
    %v925 = vpop.permute.xlu0 %924
    %v927 = vmul.f32 %v917, %v495
    %v928 = vmul.f32 %v921, %v501
    %v929 = vmul.f32 %v925, %v507
    %933 = vrot.lane.b32.xlu0 %v927, 16
    %v934 = vpop.permute.xlu0 %933
    %935 = vrot.lane.b32.xlu0 %v928, 16
    %v936 = vpop.permute.xlu0 %935
    %937 = vrot.lane.b32.xlu0 %v929, 16
    %v938 = vpop.permute.xlu0 %937
    %v942 = vadd.f32 %v912, %v934
    %v943 = vadd.f32 %v913, %v936
    %v944 = vadd.f32 %v914, %v938
    %945 = vset.pattern.permute.xlu0 8
    %946 = vperm.xlu0 %945, %v704
    %v947 = vpop.permute.xlu0 %946
    %949 = vset.pattern.permute.xlu0 8
    %950 = vperm.xlu0 %949, %v709
    %v951 = vpop.permute.xlu0 %950
    %953 = vset.pattern.permute.xlu0 8
    %954 = vperm.xlu0 %953, %v714
    %v955 = vpop.permute.xlu0 %954
    %v957 = vmul.f32 %v947, %v497
    %v958 = vmul.f32 %v951, %v503
    %v959 = vmul.f32 %v955, %v509
    %v960 = vadd.f32 %v942, %v957
    %v961 = vadd.f32 %v943, %v958
    %v962 = vadd.f32 %v944, %v959
    %963 = vset.pattern.permute.xlu0 9
    %964 = vperm.xlu0 %963, %v704
    %v965 = vpop.permute.xlu0 %964
    %967 = vset.pattern.permute.xlu0 9
    %968 = vperm.xlu0 %967, %v709
    %v969 = vpop.permute.xlu0 %968
    %971 = vset.pattern.permute.xlu0 9
    %972 = vperm.xlu0 %971, %v714
    %v973 = vpop.permute.xlu0 %972
    %v975 = vmul.f32 %v965, %v497
    %v976 = vmul.f32 %v969, %v503
    %v977 = vmul.f32 %v973, %v509
    %981 = vrot.lane.b32.xlu0 %v975, 112
    %v982 = vpop.permute.xlu0 %981
    %983 = vrot.lane.b32.xlu0 %v976, 112
    %v984 = vpop.permute.xlu0 %983
    %985 = vrot.lane.b32.xlu0 %v977, 112
    %v986 = vpop.permute.xlu0 %985
    %v990 = vadd.f32 %v960, %v982
    %v991 = vadd.f32 %v961, %v984
    %v992 = vadd.f32 %v962, %v986
    %993 = vset.pattern.permute.xlu0 10
    %994 = vperm.xlu0 %993, %v704
    %v995 = vpop.permute.xlu0 %994
    %997 = vset.pattern.permute.xlu0 10
    %998 = vperm.xlu0 %997, %v709
    %v999 = vpop.permute.xlu0 %998
    %1001 = vset.pattern.permute.xlu0 10
    %1002 = vperm.xlu0 %1001, %v714
    %v1003 = vpop.permute.xlu0 %1002
    %v1005 = vmul.f32 %v995, %v497
    %v1006 = vmul.f32 %v999, %v503
    %v1007 = vmul.f32 %v1003, %v509
    %1011 = vrot.lane.b32.xlu0 %v1005, 96
    %v1012 = vpop.permute.xlu0 %1011
    %1013 = vrot.lane.b32.xlu0 %v1006, 96
    %v1014 = vpop.permute.xlu0 %1013
    %1015 = vrot.lane.b32.xlu0 %v1007, 96
    %v1016 = vpop.permute.xlu0 %1015
    %v1020 = vadd.f32 %v990, %v1012
    %v1021 = vadd.f32 %v991, %v1014
    %v1022 = vadd.f32 %v992, %v1016
    %1023 = vset.pattern.permute.xlu0 11
    %1024 = vperm.xlu0 %1023, %v704
    %v1025 = vpop.permute.xlu0 %1024
    %1027 = vset.pattern.permute.xlu0 11
    %1028 = vperm.xlu0 %1027, %v709
    %v1029 = vpop.permute.xlu0 %1028
    %1031 = vset.pattern.permute.xlu0 11
    %1032 = vperm.xlu0 %1031, %v714
    %v1033 = vpop.permute.xlu0 %1032
    %v1035 = vmul.f32 %v1025, %v497
    %v1036 = vmul.f32 %v1029, %v503
    %v1037 = vmul.f32 %v1033, %v509
    %1041 = vrot.lane.b32.xlu0 %v1035, 80
    %v1042 = vpop.permute.xlu0 %1041
    %1043 = vrot.lane.b32.xlu0 %v1036, 80
    %v1044 = vpop.permute.xlu0 %1043
    %1045 = vrot.lane.b32.xlu0 %v1037, 80
    %v1046 = vpop.permute.xlu0 %1045
    %v1050 = vadd.f32 %v1020, %v1042
    %v1051 = vadd.f32 %v1021, %v1044
    %v1052 = vadd.f32 %v1022, %v1046
    %1053 = vset.pattern.permute.xlu0 12
    %1054 = vperm.xlu0 %1053, %v704
    %v1055 = vpop.permute.xlu0 %1054
    %1057 = vset.pattern.permute.xlu0 12
    %1058 = vperm.xlu0 %1057, %v709
    %v1059 = vpop.permute.xlu0 %1058
    %1061 = vset.pattern.permute.xlu0 12
    %1062 = vperm.xlu0 %1061, %v714
    %v1063 = vpop.permute.xlu0 %1062
    %v1065 = vmul.f32 %v1055, %v497
    %v1066 = vmul.f32 %v1059, %v503
    %v1067 = vmul.f32 %v1063, %v509
    %1071 = vrot.lane.b32.xlu0 %v1065, 64
    %v1072 = vpop.permute.xlu0 %1071
    %1073 = vrot.lane.b32.xlu0 %v1066, 64
    %v1074 = vpop.permute.xlu0 %1073
    %1075 = vrot.lane.b32.xlu0 %v1067, 64
    %v1076 = vpop.permute.xlu0 %1075
    %v1080 = vadd.f32 %v1050, %v1072
    %v1081 = vadd.f32 %v1051, %v1074
    %v1082 = vadd.f32 %v1052, %v1076
    %1083 = vset.pattern.permute.xlu0 13
    %1084 = vperm.xlu0 %1083, %v704
    %v1085 = vpop.permute.xlu0 %1084
    %1087 = vset.pattern.permute.xlu0 13
    %1088 = vperm.xlu0 %1087, %v709
    %v1089 = vpop.permute.xlu0 %1088
    %1091 = vset.pattern.permute.xlu0 13
    %1092 = vperm.xlu0 %1091, %v714
    %v1093 = vpop.permute.xlu0 %1092
    %v1095 = vmul.f32 %v1085, %v497
    %v1096 = vmul.f32 %v1089, %v503
    %v1097 = vmul.f32 %v1093, %v509
    %1101 = vrot.lane.b32.xlu0 %v1095, 48
    %v1102 = vpop.permute.xlu0 %1101
    %1103 = vrot.lane.b32.xlu0 %v1096, 48
    %v1104 = vpop.permute.xlu0 %1103
    %1105 = vrot.lane.b32.xlu0 %v1097, 48
    %v1106 = vpop.permute.xlu0 %1105
    %v1110 = vadd.f32 %v1080, %v1102
    %v1111 = vadd.f32 %v1081, %v1104
    %v1112 = vadd.f32 %v1082, %v1106
    %1113 = vset.pattern.permute.xlu0 14
    %1114 = vperm.xlu0 %1113, %v704
    %v1115 = vpop.permute.xlu0 %1114
    %1117 = vset.pattern.permute.xlu0 14
    %1118 = vperm.xlu0 %1117, %v709
    %v1119 = vpop.permute.xlu0 %1118
    %1121 = vset.pattern.permute.xlu0 14
    %1122 = vperm.xlu0 %1121, %v714
    %v1123 = vpop.permute.xlu0 %1122
    %v1125 = vmul.f32 %v1115, %v497
    %v1126 = vmul.f32 %v1119, %v503
    %v1127 = vmul.f32 %v1123, %v509
    %1131 = vrot.lane.b32.xlu0 %v1125, 32
    %v1132 = vpop.permute.xlu0 %1131
    %1133 = vrot.lane.b32.xlu0 %v1126, 32
    %v1134 = vpop.permute.xlu0 %1133
    %1135 = vrot.lane.b32.xlu0 %v1127, 32
    %v1136 = vpop.permute.xlu0 %1135
    %v1140 = vadd.f32 %v1110, %v1132
    %v1141 = vadd.f32 %v1111, %v1134
    %v1142 = vadd.f32 %v1112, %v1136
    %1143 = vset.pattern.permute.xlu0 15
    %1144 = vperm.xlu0 %1143, %v704
    %v1145 = vpop.permute.xlu0 %1144
    %1147 = vset.pattern.permute.xlu0 15
    %1148 = vperm.xlu0 %1147, %v709
    %v1149 = vpop.permute.xlu0 %1148
    %1151 = vset.pattern.permute.xlu0 15
    %1152 = vperm.xlu0 %1151, %v714
    %v1153 = vpop.permute.xlu0 %1152
    %v1155 = vmul.f32 %v1145, %v497
    %v1156 = vmul.f32 %v1149, %v503
    %v1157 = vmul.f32 %v1153, %v509
    %1161 = vrot.lane.b32.xlu0 %v1155, 16
    %v1162 = vpop.permute.xlu0 %1161
    %1163 = vrot.lane.b32.xlu0 %v1156, 16
    %v1164 = vpop.permute.xlu0 %1163
    %1165 = vrot.lane.b32.xlu0 %v1157, 16
    %v1166 = vpop.permute.xlu0 %1165
    %v1170 = vadd.f32 %v1140, %v1162
    %v1171 = vadd.f32 %v1141, %v1164
    %v1172 = vadd.f32 %v1142, %v1166
    %vm1173 = vcmask 195584
    %v1175 = vsel %vm1173, %v514, 0
    %v1178 = vsel %vm1173, %v515, 0
    %1180 = vmatprep.subr.mxu0 0.0
    %1181 = vmatpush1.msra.mxu0 0.0
    %1182 = vmatprep.subr.mxu0 0.0
    %1183 = vmatpush1.msra.mxu0 0.0
    %1184 = vmatprep.subr.mxu0 0.0
    %1185 = vmatpush1.msra.mxu0 0.0
    %1186 = vmatprep.subr.mxu0 0.0
    %1187 = vmatpush1.msra.mxu0 0.0
    %1188 = vmatprep.subr.mxu0 0.0
    %1189 = vmatpush1.msra.mxu0 0.0
    %1190 = vmatprep.subr.mxu0 0.0
    %1191 = vmatpush1.msra.mxu0 0.0
    %1192 = vmatprep.subr.mxu0 0.0
    %1193 = vmatpush1.msra.mxu0 0.0
    %1194 = vmatprep.subr.mxu0 0.0
    %1195 = vmatpush1.msra.mxu0 0.0
    %1196 = vmatprep.subr.mxu0 0.0
    %1197 = vmatpush1.msra.mxu0 0.0
    %1198 = vmatprep.subr.mxu0 0.0
    %1199 = vmatpush1.msra.mxu0 0.0
    %1200 = vmatprep.subr.mxu0 0.0
    %1201 = vmatpush1.msra.mxu0 0.0
    %1202 = vmatprep.subr.mxu0 0.0
    %1203 = vmatpush1.msra.mxu0 0.0
    %1204 = vmatprep.subr.mxu0 0.0
    %1205 = vmatpush1.msra.mxu0 0.0
    %1206 = vmatprep.subr.mxu0 0.0
    %1207 = vmatpush1.msra.mxu0 %v1172
    %1208 = vmatprep.subr.mxu0 0.0
    %1209 = vmatpush1.msra.mxu0 %v1171
    %1210 = vmatprep.subr.mxu0 0.0
    %1211 = vmatpush1.msra.mxu0 %v1170
    %1212 = vmatprep.subr.mxu0 0.0
    %1213 = vmatpush2.msra.mxu0 0.0
    %1214 = vmatprep.subr.mxu0 0.0
    %1215 = vmatpush2.msra.mxu0 0.0
    %1216 = vmatprep.subr.mxu0 0.0
    %1217 = vmatpush2.msra.mxu0 0.0
    %1218 = vmatprep.subr.mxu0 0.0
    %1219 = vmatpush2.msra.mxu0 0.0
    %1220 = vmatprep.subr.mxu0 0.0
    %1221 = vmatpush2.msra.mxu0 0.0
    %1222 = vmatprep.subr.mxu0 0.0
    %1223 = vmatpush2.msra.mxu0 0.0
    %1224 = vmatprep.subr.mxu0 0.0
    %1225 = vmatpush2.msra.mxu0 0.0
    %1226 = vmatprep.subr.mxu0 0.0
    %1227 = vmatpush2.msra.mxu0 0.0
    %1228 = vmatprep.subr.mxu0 0.0
    %1229 = vmatpush2.msra.mxu0 0.0
    %1230 = vmatprep.subr.mxu0 0.0
    %1231 = vmatpush2.msra.mxu0 0.0
    %1232 = vmatprep.subr.mxu0 0.0
    %1233 = vmatpush2.msra.mxu0 0.0
    %1234 = vmatprep.subr.mxu0 0.0
    %1235 = vmatpush2.msra.mxu0 0.0
    %1236 = vmatprep.subr.mxu0 0.0
    %1237 = vmatpush2.msra.mxu0 0.0
    %1238 = vmatprep.subr.mxu0 0.0
    %1239 = vmatpush2.msra.mxu0 0.0
    %1240 = vmatprep.subr.mxu0 0.0
    %1241 = vmatpush2.msra.mxu0 0.0
    %1242 = vmatprep.subr.mxu0 0.0
    %1243 = vmatpush2.msra.mxu0 0.0
    %1244 = vmatprep.mubr.f32.mxu0 0.0
    %1245 = vmatmul.mubr.f32.gmra.mxu0 %v1175
    %v1246 = vpop.f32.mrf.mxu0
    %v1247 = vadd.f32 %v616, %v1246
    %v1248 = vpop.f32.mrf.mxu0
    %1249 = vmatprep.mubr.f32.mxu0 0.0
    %1250 = vmatmul.mubr.f32.gmra.mxu0 %v1178
    %v1251 = vpop.f32.mrf.mxu0
    %v1252 = vadd.f32 %v621, %v1251
    %v1253 = vpop.f32.mrf.mxu0
    %1254 = vdwg.mxu0
    %v1255 = vmax.f32 %v1247, 0.0
    %v1256 = vmax.f32 %v1252, 0.0
    %v1258 = vsel %vm542, %v1255, 0
    %v1261 = vsel %vm542, %v1256, 0
    %1263 = vmatprep.subr.mxu0 0.0
    %1264 = vmatpush1.msra.mxu0 0.0
    %1265 = vmatprep.subr.mxu0 0.0
    %1266 = vmatpush1.msra.mxu0 0.0
    %1267 = vmatprep.subr.mxu0 0.0
    %1268 = vmatpush1.msra.mxu0 0.0
    %1269 = vmatprep.subr.mxu0 0.0
    %1270 = vmatpush1.msra.mxu0 0.0
    %1271 = vmatprep.subr.mxu0 0.0
    %1272 = vmatpush1.msra.mxu0 0.0
    %1273 = vmatprep.subr.mxu0 0.0
    %1274 = vmatpush1.msra.mxu0 0.0
    %1275 = vmatprep.subr.mxu0 0.0
    %1276 = vmatpush1.msra.mxu0 0.0
    %1277 = vmatprep.subr.mxu0 0.0
    %1278 = vmatpush1.msra.mxu0 0.0
    %1279 = vmatprep.subr.mxu0 0.0
    %1280 = vmatpush1.msra.mxu0 0.0
    %1281 = vmatprep.subr.mxu0 0.0
    %1282 = vmatpush1.msra.mxu0 0.0
    %1283 = vmatprep.subr.mxu0 0.0
    %1284 = vmatpush1.msra.mxu0 0.0
    %1285 = vmatprep.subr.mxu0 0.0
    %1286 = vmatpush1.msra.mxu0 0.0
    %1287 = vmatprep.subr.mxu0 0.0
    %1288 = vmatpush1.msra.mxu0 0.0
    %1289 = vmatprep.subr.mxu0 0.0
    %1290 = vmatpush1.msra.mxu0 0.0
    %1291 = vmatprep.subr.mxu0 0.0
    %1292 = vmatpush1.msra.mxu0 %v532
    %1293 = vmatprep.subr.mxu0 0.0
    %1294 = vmatpush1.msra.mxu0 %v531
    %1295 = vmatprep.subr.mxu0 0.0
    %1296 = vmatpush2.msra.mxu0 0.0
    %1297 = vmatprep.subr.mxu0 0.0
    %1298 = vmatpush2.msra.mxu0 0.0
    %1299 = vmatprep.subr.mxu0 0.0
    %1300 = vmatpush2.msra.mxu0 0.0
    %1301 = vmatprep.subr.mxu0 0.0
    %1302 = vmatpush2.msra.mxu0 0.0
    %1303 = vmatprep.subr.mxu0 0.0
    %1304 = vmatpush2.msra.mxu0 0.0
    %1305 = vmatprep.subr.mxu0 0.0
    %1306 = vmatpush2.msra.mxu0 0.0
    %1307 = vmatprep.subr.mxu0 0.0
    %1308 = vmatpush2.msra.mxu0 0.0
    %1309 = vmatprep.subr.mxu0 0.0
    %1310 = vmatpush2.msra.mxu0 0.0
    %1311 = vmatprep.subr.mxu0 0.0
    %1312 = vmatpush2.msra.mxu0 0.0
    %1313 = vmatprep.subr.mxu0 0.0
    %1314 = vmatpush2.msra.mxu0 0.0
    %1315 = vmatprep.subr.mxu0 0.0
    %1316 = vmatpush2.msra.mxu0 0.0
    %1317 = vmatprep.subr.mxu0 0.0
    %1318 = vmatpush2.msra.mxu0 0.0
    %1319 = vmatprep.subr.mxu0 0.0
    %1320 = vmatpush2.msra.mxu0 0.0
    %1321 = vmatprep.subr.mxu0 0.0
    %1322 = vmatpush2.msra.mxu0 0.0
    %1323 = vmatprep.subr.mxu0 0.0
    %1324 = vmatpush2.msra.mxu0 0.0
    %1325 = vmatprep.subr.mxu0 0.0
    %1326 = vmatpush2.msra.mxu0 0.0
    %1327 = vmatprep.mubr.f32.mxu0 0.0
    %1328 = vmatmul.mubr.f32.gmra.mxu0 %v1258
    %v1329 = vpop.f32.mrf.mxu0
    %v1330 = vadd.f32 0.0, %v1329
    %v1331 = vpop.f32.mrf.mxu0
    %1332 = vmatprep.mubr.f32.mxu0 0.0
    %1333 = vmatmul.mubr.f32.gmra.mxu0 %v1261
    %v1334 = vpop.f32.mrf.mxu0
    %v1335 = vadd.f32 0.0, %v1334
    %v1336 = vpop.f32.mrf.mxu0
    %1337 = vdwg.mxu0
    %v1339 = vsel %vm542, %v1330, 0
    %v1342 = vsel %vm542, %v1335, 0
    %1344 = vmatprep.subr.mxu0 0.0
    %1345 = vmatpush1.msra.mxu0 0.0
    %1346 = vmatprep.subr.mxu0 0.0
    %1347 = vmatpush1.msra.mxu0 0.0
    %1348 = vmatprep.subr.mxu0 0.0
    %1349 = vmatpush1.msra.mxu0 0.0
    %1350 = vmatprep.subr.mxu0 0.0
    %1351 = vmatpush1.msra.mxu0 0.0
    %1352 = vmatprep.subr.mxu0 0.0
    %1353 = vmatpush1.msra.mxu0 0.0
    %1354 = vmatprep.subr.mxu0 0.0
    %1355 = vmatpush1.msra.mxu0 0.0
    %1356 = vmatprep.subr.mxu0 0.0
    %1357 = vmatpush1.msra.mxu0 0.0
    %1358 = vmatprep.subr.mxu0 0.0
    %1359 = vmatpush1.msra.mxu0 0.0
    %1360 = vmatprep.subr.mxu0 0.0
    %1361 = vmatpush1.msra.mxu0 0.0
    %1362 = vmatprep.subr.mxu0 0.0
    %1363 = vmatpush1.msra.mxu0 0.0
    %1364 = vmatprep.subr.mxu0 0.0
    %1365 = vmatpush1.msra.mxu0 0.0
    %1366 = vmatprep.subr.mxu0 0.0
    %1367 = vmatpush1.msra.mxu0 0.0
    %1368 = vmatprep.subr.mxu0 0.0
    %1369 = vmatpush1.msra.mxu0 0.0
    %1370 = vmatprep.subr.mxu0 0.0
    %1371 = vmatpush1.msra.mxu0 0.0
    %1372 = vmatprep.subr.mxu0 0.0
    %1373 = vmatpush1.msra.mxu0 %v534
    %1374 = vmatprep.subr.mxu0 0.0
    %1375 = vmatpush1.msra.mxu0 %v533
    %1376 = vmatprep.subr.mxu0 0.0
    %1377 = vmatpush2.msra.mxu0 0.0
    %1378 = vmatprep.subr.mxu0 0.0
    %1379 = vmatpush2.msra.mxu0 0.0
    %1380 = vmatprep.subr.mxu0 0.0
    %1381 = vmatpush2.msra.mxu0 0.0
    %1382 = vmatprep.subr.mxu0 0.0
    %1383 = vmatpush2.msra.mxu0 0.0
    %1384 = vmatprep.subr.mxu0 0.0
    %1385 = vmatpush2.msra.mxu0 0.0
    %1386 = vmatprep.subr.mxu0 0.0
    %1387 = vmatpush2.msra.mxu0 0.0
    %1388 = vmatprep.subr.mxu0 0.0
    %1389 = vmatpush2.msra.mxu0 0.0
    %1390 = vmatprep.subr.mxu0 0.0
    %1391 = vmatpush2.msra.mxu0 0.0
    %1392 = vmatprep.subr.mxu0 0.0
    %1393 = vmatpush2.msra.mxu0 0.0
    %1394 = vmatprep.subr.mxu0 0.0
    %1395 = vmatpush2.msra.mxu0 0.0
    %1396 = vmatprep.subr.mxu0 0.0
    %1397 = vmatpush2.msra.mxu0 0.0
    %1398 = vmatprep.subr.mxu0 0.0
    %1399 = vmatpush2.msra.mxu0 0.0
    %1400 = vmatprep.subr.mxu0 0.0
    %1401 = vmatpush2.msra.mxu0 0.0
    %1402 = vmatprep.subr.mxu0 0.0
    %1403 = vmatpush2.msra.mxu0 0.0
    %1404 = vmatprep.subr.mxu0 0.0
    %1405 = vmatpush2.msra.mxu0 0.0
    %1406 = vmatprep.subr.mxu0 0.0
    %1407 = vmatpush2.msra.mxu0 0.0
    %1408 = vmatprep.mubr.f32.mxu0 0.0
    %1409 = vmatmul.mubr.f32.gmra.mxu0 %v1339
    %v1410 = vpop.f32.mrf.mxu0
    %v1411 = vadd.f32 0.0, %v1410
    %v1412 = vpop.f32.mrf.mxu0
    %1413 = vmatprep.mubr.f32.mxu0 0.0
    %1414 = vmatmul.mubr.f32.gmra.mxu0 %v1342
    %v1415 = vpop.f32.mrf.mxu0
    %v1416 = vadd.f32 0.0, %v1415
    %v1417 = vpop.f32.mrf.mxu0
    %1418 = vdwg.mxu0
    %v1420 = vsel %vm624, %v516, 0
    %v1423 = vsel %vm624, %v517, 0
    %v1426 = vsel %vm624, %v518, 0
    %v1429 = vsel %vm624, %v519, 0
    %v1432 = vsel %vm624, %v520, 0
    %v1434 = vsel %vm634, %v1335, 0
    %1436 = vmatprep.subr.mxu0 0.0
    %1437 = vmatpush1.msra.mxu0 0.0
    %1438 = vmatprep.subr.mxu0 0.0
    %1439 = vmatpush1.msra.mxu0 0.0
    %1440 = vmatprep.subr.mxu0 0.0
    %1441 = vmatpush1.msra.mxu0 0.0
    %1442 = vmatprep.subr.mxu0 0.0
    %1443 = vmatpush1.msra.mxu0 0.0
    %1444 = vmatprep.subr.mxu0 0.0
    %1445 = vmatpush1.msra.mxu0 0.0
    %1446 = vmatprep.subr.mxu0 0.0
    %1447 = vmatpush1.msra.mxu0 0.0
    %1448 = vmatprep.subr.mxu0 0.0
    %1449 = vmatpush1.msra.mxu0 0.0
    %1450 = vmatprep.subr.mxu0 0.0
    %1451 = vmatpush1.msra.mxu0 0.0
    %1452 = vmatprep.subr.mxu0 0.0
    %1453 = vmatpush1.msra.mxu0 0.0
    %1454 = vmatprep.subr.mxu0 0.0
    %1455 = vmatpush1.msra.mxu0 0.0
    %1456 = vmatprep.subr.mxu0 0.0
    %1457 = vmatpush1.msra.mxu0 0.0
    %1458 = vmatprep.subr.mxu0 0.0
    %1459 = vmatpush1.msra.mxu0 0.0
    %1460 = vmatprep.subr.mxu0 0.0
    %1461 = vmatpush1.msra.mxu0 0.0
    %1462 = vmatprep.subr.mxu0 0.0
    %1463 = vmatpush1.msra.mxu0 0.0
    %1464 = vmatprep.subr.mxu0 0.0
    %1465 = vmatpush1.msra.mxu0 %v1434
    %1466 = vmatprep.subr.mxu0 0.0
    %1467 = vmatpush1.msra.mxu0 %v1330
    %1468 = vmatprep.subr.mxu0 0.0
    %1469 = vmatpush2.msra.mxu0 0.0
    %1470 = vmatprep.subr.mxu0 0.0
    %1471 = vmatpush2.msra.mxu0 0.0
    %1472 = vmatprep.subr.mxu0 0.0
    %1473 = vmatpush2.msra.mxu0 0.0
    %1474 = vmatprep.subr.mxu0 0.0
    %1475 = vmatpush2.msra.mxu0 0.0
    %1476 = vmatprep.subr.mxu0 0.0
    %1477 = vmatpush2.msra.mxu0 0.0
    %1478 = vmatprep.subr.mxu0 0.0
    %1479 = vmatpush2.msra.mxu0 0.0
    %1480 = vmatprep.subr.mxu0 0.0
    %1481 = vmatpush2.msra.mxu0 0.0
    %1482 = vmatprep.subr.mxu0 0.0
    %1483 = vmatpush2.msra.mxu0 0.0
    %1484 = vmatprep.subr.mxu0 0.0
    %1485 = vmatpush2.msra.mxu0 0.0
    %1486 = vmatprep.subr.mxu0 0.0
    %1487 = vmatpush2.msra.mxu0 0.0
    %1488 = vmatprep.subr.mxu0 0.0
    %1489 = vmatpush2.msra.mxu0 0.0
    %1490 = vmatprep.subr.mxu0 0.0
    %1491 = vmatpush2.msra.mxu0 0.0
    %1492 = vmatprep.subr.mxu0 0.0
    %1493 = vmatpush2.msra.mxu0 0.0
    %1494 = vmatprep.subr.mxu0 0.0
    %1495 = vmatpush2.msra.mxu0 0.0
    %1496 = vmatprep.subr.mxu0 0.0
    %1497 = vmatpush2.msra.mxu0 0.0
    %1498 = vmatprep.subr.mxu0 0.0
    %1499 = vmatpush2.msra.mxu0 0.0
    %1500 = vmatprep.mubr.f32.mxu0 0.0
    %1501 = vmatmul.mubr.f32.gmra.mxu0 %v1420
    %v1502 = vpop.f32.mrf.mxu0
    %v1503 = vadd.f32 0.0, %v1502
    %v1504 = vpop.f32.mrf.mxu0
    %1505 = vmatprep.mubr.f32.mxu0 0.0
    %1506 = vmatmul.mubr.f32.gmra.mxu0 %v1423
    %v1507 = vpop.f32.mrf.mxu0
    %v1508 = vadd.f32 0.0, %v1507
    %v1509 = vpop.f32.mrf.mxu0
    %1510 = vmatprep.mubr.f32.mxu0 0.0
    %1511 = vmatmul.mubr.f32.gmra.mxu0 %v1426
    %v1512 = vpop.f32.mrf.mxu0
    %v1513 = vadd.f32 0.0, %v1512
    %v1514 = vpop.f32.mrf.mxu0
    %1515 = vmatprep.mubr.f32.mxu0 0.0
    %1516 = vmatmul.mubr.f32.gmra.mxu0 %v1429
    %v1517 = vpop.f32.mrf.mxu0
    %v1518 = vadd.f32 0.0, %v1517
    %v1519 = vpop.f32.mrf.mxu0
    %1520 = vmatprep.mubr.f32.mxu0 0.0
    %1521 = vmatmul.mubr.f32.gmra.mxu0 %v1432
    %v1522 = vpop.f32.mrf.mxu0
    %v1523 = vadd.f32 0.0, %v1522
    %v1524 = vpop.f32.mrf.mxu0
    %1525 = vdwg.mxu0
    %1528 = vrot.lane.b32.xlu0 %v1411, 127
    %v1529 = vpop.permute.xlu0 %1528
    %1530 = vrot.lane.b32.xlu0 %v1416, 127
    %v1531 = vpop.permute.xlu0 %1530
    %v1534 = vsel %vm624, %v521, 0
    %v1537 = vsel %vm624, %v522, 0
    %v1540 = vsel %vm624, %v523, 0
    %v1543 = vsel %vm624, %v524, 0
    %v1546 = vsel %vm624, %v525, 0
    %v1548 = vsel %vm634, %v1531, 0
    %1550 = vmatprep.subr.mxu0 0.0
    %1551 = vmatpush1.msra.mxu0 0.0
    %1552 = vmatprep.subr.mxu0 0.0
    %1553 = vmatpush1.msra.mxu0 0.0
    %1554 = vmatprep.subr.mxu0 0.0
    %1555 = vmatpush1.msra.mxu0 0.0
    %1556 = vmatprep.subr.mxu0 0.0
    %1557 = vmatpush1.msra.mxu0 0.0
    %1558 = vmatprep.subr.mxu0 0.0
    %1559 = vmatpush1.msra.mxu0 0.0
    %1560 = vmatprep.subr.mxu0 0.0
    %1561 = vmatpush1.msra.mxu0 0.0
    %1562 = vmatprep.subr.mxu0 0.0
    %1563 = vmatpush1.msra.mxu0 0.0
    %1564 = vmatprep.subr.mxu0 0.0
    %1565 = vmatpush1.msra.mxu0 0.0
    %1566 = vmatprep.subr.mxu0 0.0
    %1567 = vmatpush1.msra.mxu0 0.0
    %1568 = vmatprep.subr.mxu0 0.0
    %1569 = vmatpush1.msra.mxu0 0.0
    %1570 = vmatprep.subr.mxu0 0.0
    %1571 = vmatpush1.msra.mxu0 0.0
    %1572 = vmatprep.subr.mxu0 0.0
    %1573 = vmatpush1.msra.mxu0 0.0
    %1574 = vmatprep.subr.mxu0 0.0
    %1575 = vmatpush1.msra.mxu0 0.0
    %1576 = vmatprep.subr.mxu0 0.0
    %1577 = vmatpush1.msra.mxu0 0.0
    %1578 = vmatprep.subr.mxu0 0.0
    %1579 = vmatpush1.msra.mxu0 %v1548
    %1580 = vmatprep.subr.mxu0 0.0
    %1581 = vmatpush1.msra.mxu0 %v1529
    %1582 = vmatprep.subr.mxu0 0.0
    %1583 = vmatpush2.msra.mxu0 0.0
    %1584 = vmatprep.subr.mxu0 0.0
    %1585 = vmatpush2.msra.mxu0 0.0
    %1586 = vmatprep.subr.mxu0 0.0
    %1587 = vmatpush2.msra.mxu0 0.0
    %1588 = vmatprep.subr.mxu0 0.0
    %1589 = vmatpush2.msra.mxu0 0.0
    %1590 = vmatprep.subr.mxu0 0.0
    %1591 = vmatpush2.msra.mxu0 0.0
    %1592 = vmatprep.subr.mxu0 0.0
    %1593 = vmatpush2.msra.mxu0 0.0
    %1594 = vmatprep.subr.mxu0 0.0
    %1595 = vmatpush2.msra.mxu0 0.0
    %1596 = vmatprep.subr.mxu0 0.0
    %1597 = vmatpush2.msra.mxu0 0.0
    %1598 = vmatprep.subr.mxu0 0.0
    %1599 = vmatpush2.msra.mxu0 0.0
    %1600 = vmatprep.subr.mxu0 0.0
    %1601 = vmatpush2.msra.mxu0 0.0
    %1602 = vmatprep.subr.mxu0 0.0
    %1603 = vmatpush2.msra.mxu0 0.0
    %1604 = vmatprep.subr.mxu0 0.0
    %1605 = vmatpush2.msra.mxu0 0.0
    %1606 = vmatprep.subr.mxu0 0.0
    %1607 = vmatpush2.msra.mxu0 0.0
    %1608 = vmatprep.subr.mxu0 0.0
    %1609 = vmatpush2.msra.mxu0 0.0
    %1610 = vmatprep.subr.mxu0 0.0
    %1611 = vmatpush2.msra.mxu0 0.0
    %1612 = vmatprep.subr.mxu0 0.0
    %1613 = vmatpush2.msra.mxu0 0.0
    %1614 = vmatprep.mubr.f32.mxu0 0.0
    %1615 = vmatmul.mubr.f32.gmra.mxu0 %v1534
    %v1616 = vpop.f32.mrf.mxu0
    %v1617 = vadd.f32 0.0, %v1616
    %v1618 = vpop.f32.mrf.mxu0
    %1619 = vmatprep.mubr.f32.mxu0 0.0
    %1620 = vmatmul.mubr.f32.gmra.mxu0 %v1537
    %v1621 = vpop.f32.mrf.mxu0
    %v1622 = vadd.f32 0.0, %v1621
    %v1623 = vpop.f32.mrf.mxu0
    %1624 = vmatprep.mubr.f32.mxu0 0.0
    %1625 = vmatmul.mubr.f32.gmra.mxu0 %v1540
    %v1626 = vpop.f32.mrf.mxu0
    %v1627 = vadd.f32 0.0, %v1626
    %v1628 = vpop.f32.mrf.mxu0
    %1629 = vmatprep.mubr.f32.mxu0 0.0
    %1630 = vmatmul.mubr.f32.gmra.mxu0 %v1543
    %v1631 = vpop.f32.mrf.mxu0
    %v1632 = vadd.f32 0.0, %v1631
    %v1633 = vpop.f32.mrf.mxu0
    %1634 = vmatprep.mubr.f32.mxu0 0.0
    %1635 = vmatmul.mubr.f32.gmra.mxu0 %v1546
    %v1636 = vpop.f32.mrf.mxu0
    %v1637 = vadd.f32 0.0, %v1636
    %v1638 = vpop.f32.mrf.mxu0
    %1639 = vdwg.mxu0
    %v1640 = vsel %vm634, %v1416, 0
    %1642 = vmatprep.subr.mxu0 0.0
    %1643 = vmatpush1.msra.mxu0 0.0
    %1644 = vmatprep.subr.mxu0 0.0
    %1645 = vmatpush1.msra.mxu0 0.0
    %1646 = vmatprep.subr.mxu0 0.0
    %1647 = vmatpush1.msra.mxu0 0.0
    %1648 = vmatprep.subr.mxu0 0.0
    %1649 = vmatpush1.msra.mxu0 0.0
    %1650 = vmatprep.subr.mxu0 0.0
    %1651 = vmatpush1.msra.mxu0 0.0
    %1652 = vmatprep.subr.mxu0 0.0
    %1653 = vmatpush1.msra.mxu0 0.0
    %1654 = vmatprep.subr.mxu0 0.0
    %1655 = vmatpush1.msra.mxu0 0.0
    %1656 = vmatprep.subr.mxu0 0.0
    %1657 = vmatpush1.msra.mxu0 0.0
    %1658 = vmatprep.subr.mxu0 0.0
    %1659 = vmatpush1.msra.mxu0 0.0
    %1660 = vmatprep.subr.mxu0 0.0
    %1661 = vmatpush1.msra.mxu0 0.0
    %1662 = vmatprep.subr.mxu0 0.0
    %1663 = vmatpush1.msra.mxu0 0.0
    %1664 = vmatprep.subr.mxu0 0.0
    %1665 = vmatpush1.msra.mxu0 0.0
    %1666 = vmatprep.subr.mxu0 0.0
    %1667 = vmatpush1.msra.mxu0 0.0
    %1668 = vmatprep.subr.mxu0 0.0
    %1669 = vmatpush1.msra.mxu0 0.0
    %1670 = vmatprep.subr.mxu0 0.0
    %1671 = vmatpush1.msra.mxu0 %v1640
    %1672 = vmatprep.subr.mxu0 0.0
    %1673 = vmatpush1.msra.mxu0 %v1411
    %1674 = vmatprep.subr.mxu0 0.0
    %1675 = vmatpush2.msra.mxu0 0.0
    %1676 = vmatprep.subr.mxu0 0.0
    %1677 = vmatpush2.msra.mxu0 0.0
    %1678 = vmatprep.subr.mxu0 0.0
    %1679 = vmatpush2.msra.mxu0 0.0
    %1680 = vmatprep.subr.mxu0 0.0
    %1681 = vmatpush2.msra.mxu0 0.0
    %1682 = vmatprep.subr.mxu0 0.0
    %1683 = vmatpush2.msra.mxu0 0.0
    %1684 = vmatprep.subr.mxu0 0.0
    %1685 = vmatpush2.msra.mxu0 0.0
    %1686 = vmatprep.subr.mxu0 0.0
    %1687 = vmatpush2.msra.mxu0 0.0
    %1688 = vmatprep.subr.mxu0 0.0
    %1689 = vmatpush2.msra.mxu0 0.0
    %1690 = vmatprep.subr.mxu0 0.0
    %1691 = vmatpush2.msra.mxu0 0.0
    %1692 = vmatprep.subr.mxu0 0.0
    %1693 = vmatpush2.msra.mxu0 0.0
    %1694 = vmatprep.subr.mxu0 0.0
    %1695 = vmatpush2.msra.mxu0 0.0
    %1696 = vmatprep.subr.mxu0 0.0
    %1697 = vmatpush2.msra.mxu0 0.0
    %1698 = vmatprep.subr.mxu0 0.0
    %1699 = vmatpush2.msra.mxu0 0.0
    %1700 = vmatprep.subr.mxu0 0.0
    %1701 = vmatpush2.msra.mxu0 0.0
    %1702 = vmatprep.subr.mxu0 0.0
    %1703 = vmatpush2.msra.mxu0 0.0
    %1704 = vmatprep.subr.mxu0 0.0
    %1705 = vmatpush2.msra.mxu0 0.0
    %1706 = vmatprep.mubr.f32.mxu0 0.0
    %1707 = vmatmul.mubr.f32.gmra.mxu0 %v1420
    %v1708 = vpop.f32.mrf.mxu0
    %v1709 = vadd.f32 %v1617, %v1708
    %v1710 = vpop.f32.mrf.mxu0
    %1711 = vmatprep.mubr.f32.mxu0 0.0
    %1712 = vmatmul.mubr.f32.gmra.mxu0 %v1423
    %v1713 = vpop.f32.mrf.mxu0
    %v1714 = vadd.f32 %v1622, %v1713
    %v1715 = vpop.f32.mrf.mxu0
    %1716 = vmatprep.mubr.f32.mxu0 0.0
    %1717 = vmatmul.mubr.f32.gmra.mxu0 %v1426
    %v1718 = vpop.f32.mrf.mxu0
    %v1719 = vadd.f32 %v1627, %v1718
    %v1720 = vpop.f32.mrf.mxu0
    %1721 = vmatprep.mubr.f32.mxu0 0.0
    %1722 = vmatmul.mubr.f32.gmra.mxu0 %v1429
    %v1723 = vpop.f32.mrf.mxu0
    %v1724 = vadd.f32 %v1632, %v1723
    %v1725 = vpop.f32.mrf.mxu0
    %1726 = vmatprep.mubr.f32.mxu0 0.0
    %1727 = vmatmul.mubr.f32.gmra.mxu0 %v1432
    %v1728 = vpop.f32.mrf.mxu0
    %v1729 = vadd.f32 %v1637, %v1728
    %v1730 = vpop.f32.mrf.mxu0
    %1731 = vdwg.mxu0
    %vm1732 = vcmp.ge.f32.partialorder %v1709, 0.0
    %vm1733 = vcmp.ge.f32.partialorder %v1714, 0.0
    %vm1734 = vcmp.ge.f32.partialorder %v1719, 0.0
    %vm1735 = vcmp.ge.f32.partialorder %v1724, 0.0
    %vm1736 = vcmp.ge.f32.partialorder %v1729, 0.0
    %v1737 = vmul.f32 %v1709, 0.2
    %v1738 = vmul.f32 %v1714, 0.2
    %v1739 = vmul.f32 %v1719, 0.2
    %v1740 = vmul.f32 %v1724, 0.2
    %v1741 = vmul.f32 %v1729, 0.2
    %v1742 = vsel %vm1732, %v1709, %v1737
    %v1743 = vsel %vm1733, %v1714, %v1738
    %v1744 = vsel %vm1734, %v1719, %v1739
    %v1745 = vsel %vm1735, %v1724, %v1740
    %v1746 = vsel %vm1736, %v1729, %v1741
    %vm1747 = vcmask 7168
    %v1748 = vsel %vm1747, %v1742, -inf
    %v1749 = vsel %vm1747, %v1743, -inf
    %v1750 = vsel %vm1747, %v1744, -inf
    %v1751 = vsel %vm1747, %v1745, -inf
    %vm1752 = vcmask 3072
    %v1753 = vsel %vm1752, %v1746, -inf
    %v1754 = vmax.f32 %v1748, %v1753
    %v1755 = vmax.f32 %v1754, %v1749
    %v1756 = vmax.f32 %v1750, %v1751
    %v1757 = vmax.f32 %v1755, %v1756
    %1758 = vmax.xlane.f32.xlu0 %v1757
    %v1759 = vpop.xlane.xlu0 %1758
    %v1760 = vrot.slane %v1759, 4
    %v1761 = vmax.f32 %v1759, %v1760
    %v1762 = vrot.slane %v1761, 2
    %v1763 = vmax.f32 %v1761, %v1762
    %v1764 = vrot.slane %v1763, 1
    %v1765 = vmax.f32 %v1763, %v1764
    %s1766 = vtos %v1765
    %v1767 = vstv %s1766
    %v1768 = vsub.f32 %v1742, %v1767
    %v1769 = vsub.f32 %v1743, %v1767
    %v1770 = vsub.f32 %v1744, %v1767
    %v1771 = vsub.f32 %v1745, %v1767
    %v1772 = vsub.f32 %v1746, %v1767
    %v1773 = vmul.f32 %v1768, 1.442695
    %v1774 = vpow.pop %v1773
    %v1775 = vmul.f32 %v1769, 1.442695
    %v1776 = vpow.pop %v1775
    %v1777 = vmul.f32 %v1770, 1.442695
    %v1778 = vpow.pop %v1777
    %v1779 = vmul.f32 %v1771, 1.442695
    %v1780 = vpow.pop %v1779
    %v1781 = vmul.f32 %v1772, 1.442695
    %v1782 = vpow.pop %v1781
    %1784 = vset.pattern.permute.xlu0 0
    %1785 = vperm.xlu0 %1784, %v1774
    %v1786 = vpop.permute.xlu0 %1785
    %1789 = vset.pattern.permute.xlu0 0
    %1790 = vperm.xlu0 %1789, %v1776
    %v1791 = vpop.permute.xlu0 %1790
    %1794 = vset.pattern.permute.xlu0 0
    %1795 = vperm.xlu0 %1794, %v1778
    %v1796 = vpop.permute.xlu0 %1795
    %1799 = vset.pattern.permute.xlu0 0
    %1800 = vperm.xlu0 %1799, %v1780
    %v1801 = vpop.permute.xlu0 %1800
    %1804 = vset.pattern.permute.xlu0 0
    %1805 = vperm.xlu0 %1804, %v1782
    %v1806 = vpop.permute.xlu0 %1805
    %v1808 = vmul.f32 %v1786, %v1503
    %v1809 = vmul.f32 %v1791, %v1508
    %v1810 = vmul.f32 %v1796, %v1513
    %v1811 = vmul.f32 %v1801, %v1518
    %v1812 = vmul.f32 %v1806, %v1523
    %vm1813 = vcmask 293888
    %v1815 = vsel %vm1813, %v526, 0
    %v1818 = vsel %vm1813, %v527, 0
    %v1821 = vsel %vm634, %v1812, 0
    %1823 = vmatprep.subr.mxu0 0.0
    %1824 = vmatpush1.msra.mxu0 0.0
    %1825 = vmatprep.subr.mxu0 0.0
    %1826 = vmatpush1.msra.mxu0 0.0
    %1827 = vmatprep.subr.mxu0 0.0
    %1828 = vmatpush1.msra.mxu0 0.0
    %1829 = vmatprep.subr.mxu0 0.0
    %1830 = vmatpush1.msra.mxu0 0.0
    %1831 = vmatprep.subr.mxu0 0.0
    %1832 = vmatpush1.msra.mxu0 0.0
    %1833 = vmatprep.subr.mxu0 0.0
    %1834 = vmatpush1.msra.mxu0 0.0
    %1835 = vmatprep.subr.mxu0 0.0
    %1836 = vmatpush1.msra.mxu0 0.0
    %1837 = vmatprep.subr.mxu0 0.0
    %1838 = vmatpush1.msra.mxu0 0.0
    %1839 = vmatprep.subr.mxu0 0.0
    %1840 = vmatpush1.msra.mxu0 0.0
    %1841 = vmatprep.subr.mxu0 0.0
    %1842 = vmatpush1.msra.mxu0 0.0
    %1843 = vmatprep.subr.mxu0 0.0
    %1844 = vmatpush1.msra.mxu0 0.0
    %1845 = vmatprep.subr.mxu0 0.0
    %1846 = vmatpush1.msra.mxu0 %v1821
    %1847 = vmatprep.subr.mxu0 0.0
    %1848 = vmatpush1.msra.mxu0 %v1811
    %1849 = vmatprep.subr.mxu0 0.0
    %1850 = vmatpush1.msra.mxu0 %v1810
    %1851 = vmatprep.subr.mxu0 0.0
    %1852 = vmatpush1.msra.mxu0 %v1809
    %1853 = vmatprep.subr.mxu0 0.0
    %1854 = vmatpush1.msra.mxu0 %v1808
    %1855 = vmatprep.subr.mxu0 0.0
    %1856 = vmatpush2.msra.mxu0 0.0
    %1857 = vmatprep.subr.mxu0 0.0
    %1858 = vmatpush2.msra.mxu0 0.0
    %1859 = vmatprep.subr.mxu0 0.0
    %1860 = vmatpush2.msra.mxu0 0.0
    %1861 = vmatprep.subr.mxu0 0.0
    %1862 = vmatpush2.msra.mxu0 0.0
    %1863 = vmatprep.subr.mxu0 0.0
    %1864 = vmatpush2.msra.mxu0 0.0
    %1865 = vmatprep.subr.mxu0 0.0
    %1866 = vmatpush2.msra.mxu0 0.0
    %1867 = vmatprep.subr.mxu0 0.0
    %1868 = vmatpush2.msra.mxu0 0.0
    %1869 = vmatprep.subr.mxu0 0.0
    %1870 = vmatpush2.msra.mxu0 0.0
    %1871 = vmatprep.subr.mxu0 0.0
    %1872 = vmatpush2.msra.mxu0 0.0
    %1873 = vmatprep.subr.mxu0 0.0
    %1874 = vmatpush2.msra.mxu0 0.0
    %1875 = vmatprep.subr.mxu0 0.0
    %1876 = vmatpush2.msra.mxu0 0.0
    %1877 = vmatprep.subr.mxu0 0.0
    %1878 = vmatpush2.msra.mxu0 0.0
    %1879 = vmatprep.subr.mxu0 0.0
    %1880 = vmatpush2.msra.mxu0 0.0
    %1881 = vmatprep.subr.mxu0 0.0
    %1882 = vmatpush2.msra.mxu0 0.0
    %1883 = vmatprep.subr.mxu0 0.0
    %1884 = vmatpush2.msra.mxu0 0.0
    %1885 = vmatprep.subr.mxu0 0.0
    %1886 = vmatpush2.msra.mxu0 0.0
    %1887 = vmatprep.mubr.f32.mxu0 0.0
    %1888 = vmatmul.mubr.f32.gmra.mxu0 %v1815
    %v1889 = vpop.f32.mrf.mxu0
    %v1890 = vadd.f32 0.0, %v1889
    %v1891 = vpop.f32.mrf.mxu0
    %1892 = vmatprep.mubr.f32.mxu0 0.0
    %1893 = vmatmul.mubr.f32.gmra.mxu0 %v1818
    %v1894 = vpop.f32.mrf.mxu0
    %v1895 = vadd.f32 0.0, %v1894
    %v1896 = vpop.f32.mrf.mxu0
    %1897 = vdwg.mxu0
    %v1898 = vsel %vm634, %v1782, 0
    %1900 = vmatprep.subr.mxu0 0.0
    %1901 = vmatpush1.msra.mxu0 0.0
    %1902 = vmatprep.subr.mxu0 0.0
    %1903 = vmatpush1.msra.mxu0 0.0
    %1904 = vmatprep.subr.mxu0 0.0
    %1905 = vmatpush1.msra.mxu0 0.0
    %1906 = vmatprep.subr.mxu0 0.0
    %1907 = vmatpush1.msra.mxu0 0.0
    %1908 = vmatprep.subr.mxu0 0.0
    %1909 = vmatpush1.msra.mxu0 0.0
    %1910 = vmatprep.subr.mxu0 0.0
    %1911 = vmatpush1.msra.mxu0 0.0
    %1912 = vmatprep.subr.mxu0 0.0
    %1913 = vmatpush1.msra.mxu0 0.0
    %1914 = vmatprep.subr.mxu0 0.0
    %1915 = vmatpush1.msra.mxu0 0.0
    %1916 = vmatprep.subr.mxu0 0.0
    %1917 = vmatpush1.msra.mxu0 0.0
    %1918 = vmatprep.subr.mxu0 0.0
    %1919 = vmatpush1.msra.mxu0 0.0
    %1920 = vmatprep.subr.mxu0 0.0
    %1921 = vmatpush1.msra.mxu0 0.0
    %1922 = vmatprep.subr.mxu0 0.0
    %1923 = vmatpush1.msra.mxu0 %v1898
    %1924 = vmatprep.subr.mxu0 0.0
    %1925 = vmatpush1.msra.mxu0 %v1780
    %1926 = vmatprep.subr.mxu0 0.0
    %1927 = vmatpush1.msra.mxu0 %v1778
    %1928 = vmatprep.subr.mxu0 0.0
    %1929 = vmatpush1.msra.mxu0 %v1776
    %1930 = vmatprep.subr.mxu0 0.0
    %1931 = vmatpush1.msra.mxu0 %v1774
    %1932 = vmatprep.subr.mxu0 0.0
    %1933 = vmatpush2.msra.mxu0 0.0
    %1934 = vmatprep.subr.mxu0 0.0
    %1935 = vmatpush2.msra.mxu0 0.0
    %1936 = vmatprep.subr.mxu0 0.0
    %1937 = vmatpush2.msra.mxu0 0.0
    %1938 = vmatprep.subr.mxu0 0.0
    %1939 = vmatpush2.msra.mxu0 0.0
    %1940 = vmatprep.subr.mxu0 0.0
    %1941 = vmatpush2.msra.mxu0 0.0
    %1942 = vmatprep.subr.mxu0 0.0
    %1943 = vmatpush2.msra.mxu0 0.0
    %1944 = vmatprep.subr.mxu0 0.0
    %1945 = vmatpush2.msra.mxu0 0.0
    %1946 = vmatprep.subr.mxu0 0.0
    %1947 = vmatpush2.msra.mxu0 0.0
    %1948 = vmatprep.subr.mxu0 0.0
    %1949 = vmatpush2.msra.mxu0 0.0
    %1950 = vmatprep.subr.mxu0 0.0
    %1951 = vmatpush2.msra.mxu0 0.0
    %1952 = vmatprep.subr.mxu0 0.0
    %1953 = vmatpush2.msra.mxu0 0.0
    %1954 = vmatprep.subr.mxu0 0.0
    %1955 = vmatpush2.msra.mxu0 0.0
    %1956 = vmatprep.subr.mxu0 0.0
    %1957 = vmatpush2.msra.mxu0 0.0
    %1958 = vmatprep.subr.mxu0 0.0
    %1959 = vmatpush2.msra.mxu0 0.0
    %1960 = vmatprep.subr.mxu0 0.0
    %1961 = vmatpush2.msra.mxu0 0.0
    %1962 = vmatprep.subr.mxu0 0.0
    %1963 = vmatpush2.msra.mxu0 0.0
    %1964 = vmatprep.mubr.f32.mxu0 0.0
    %1965 = vmatmul.mubr.f32.gmra.mxu0 %v1815
    %v1966 = vpop.f32.mrf.mxu0
    %v1967 = vadd.f32 0.0, %v1966
    %v1968 = vpop.f32.mrf.mxu0
    %1969 = vmatprep.mubr.f32.mxu0 0.0
    %1970 = vmatmul.mubr.f32.gmra.mxu0 %v1818
    %v1971 = vpop.f32.mrf.mxu0
    %v1972 = vadd.f32 0.0, %v1971
    %v1973 = vpop.f32.mrf.mxu0
    %1974 = vdwg.mxu0
    %v1975 = vmax.f32 %v1967, 1e-30
    %v1976 = vmax.f32 %v1972, 1e-30
    %1978 = vset.pattern.permute.xlu0 0
    %1979 = vperm.xlu0 %1978, %v1975
    %v1980 = vpop.permute.xlu0 %1979
    %1983 = vset.pattern.permute.xlu0 0
    %1984 = vperm.xlu0 %1983, %v1976
    %v1985 = vpop.permute.xlu0 %1984
    %v1987 = vrcp.pop %v1980
    %v1988 = vmul.f32 %v1890, %v1987
    %v1989 = vrcp.pop %v1985
    %v1990 = vmul.f32 %v1895, %v1989
    %v1992 = vlaneseq
    %v1993 = vshrl.u32 %v1992, 7
    %v1994 = vsub.s32 0, %v1993
    %v1995 = vrot.slane %v535, %v1994
    %v1997 = vadd.f32 %v1988, %v1995
    %v1998 = vadd.f32 %v1990, %v1995
    %v1999 = vmax.f32 %v1997, 0.0
    %v2000 = vmax.f32 %v1998, 0.0
    %v2002 = vsel %vm542, %v1999, 0
    %v2005 = vsel %vm542, %v2000, 0
    %2007 = vmatprep.subr.mxu0 0.0
    %2008 = vmatpush1.msra.mxu0 0.0
    %2009 = vmatprep.subr.mxu0 0.0
    %2010 = vmatpush1.msra.mxu0 0.0
    %2011 = vmatprep.subr.mxu0 0.0
    %2012 = vmatpush1.msra.mxu0 0.0
    %2013 = vmatprep.subr.mxu0 0.0
    %2014 = vmatpush1.msra.mxu0 0.0
    %2015 = vmatprep.subr.mxu0 0.0
    %2016 = vmatpush1.msra.mxu0 0.0
    %2017 = vmatprep.subr.mxu0 0.0
    %2018 = vmatpush1.msra.mxu0 0.0
    %2019 = vmatprep.subr.mxu0 0.0
    %2020 = vmatpush1.msra.mxu0 0.0
    %2021 = vmatprep.subr.mxu0 0.0
    %2022 = vmatpush1.msra.mxu0 0.0
    %2023 = vmatprep.subr.mxu0 0.0
    %2024 = vmatpush1.msra.mxu0 0.0
    %2025 = vmatprep.subr.mxu0 0.0
    %2026 = vmatpush1.msra.mxu0 0.0
    %2027 = vmatprep.subr.mxu0 0.0
    %2028 = vmatpush1.msra.mxu0 0.0
    %2029 = vmatprep.subr.mxu0 0.0
    %2030 = vmatpush1.msra.mxu0 0.0
    %2031 = vmatprep.subr.mxu0 0.0
    %2032 = vmatpush1.msra.mxu0 0.0
    %2033 = vmatprep.subr.mxu0 0.0
    %2034 = vmatpush1.msra.mxu0 0.0
    %2035 = vmatprep.subr.mxu0 0.0
    %2036 = vmatpush1.msra.mxu0 %v529
    %2037 = vmatprep.subr.mxu0 0.0
    %2038 = vmatpush1.msra.mxu0 %v528
    %2039 = vmatprep.subr.mxu0 0.0
    %2040 = vmatpush2.msra.mxu0 0.0
    %2041 = vmatprep.subr.mxu0 0.0
    %2042 = vmatpush2.msra.mxu0 0.0
    %2043 = vmatprep.subr.mxu0 0.0
    %2044 = vmatpush2.msra.mxu0 0.0
    %2045 = vmatprep.subr.mxu0 0.0
    %2046 = vmatpush2.msra.mxu0 0.0
    %2047 = vmatprep.subr.mxu0 0.0
    %2048 = vmatpush2.msra.mxu0 0.0
    %2049 = vmatprep.subr.mxu0 0.0
    %2050 = vmatpush2.msra.mxu0 0.0
    %2051 = vmatprep.subr.mxu0 0.0
    %2052 = vmatpush2.msra.mxu0 0.0
    %2053 = vmatprep.subr.mxu0 0.0
    %2054 = vmatpush2.msra.mxu0 0.0
    %2055 = vmatprep.subr.mxu0 0.0
    %2056 = vmatpush2.msra.mxu0 0.0
    %2057 = vmatprep.subr.mxu0 0.0
    %2058 = vmatpush2.msra.mxu0 0.0
    %2059 = vmatprep.subr.mxu0 0.0
    %2060 = vmatpush2.msra.mxu0 0.0
    %2061 = vmatprep.subr.mxu0 0.0
    %2062 = vmatpush2.msra.mxu0 0.0
    %2063 = vmatprep.subr.mxu0 0.0
    %2064 = vmatpush2.msra.mxu0 0.0
    %2065 = vmatprep.subr.mxu0 0.0
    %2066 = vmatpush2.msra.mxu0 0.0
    %2067 = vmatprep.subr.mxu0 0.0
    %2068 = vmatpush2.msra.mxu0 0.0
    %2069 = vmatprep.subr.mxu0 0.0
    %2070 = vmatpush2.msra.mxu0 0.0
    %2071 = vmatprep.mubr.f32.mxu0 0.0
    %2072 = vmatmul.mubr.f32.gmra.mxu0 %v2002
    %v2073 = vpop.f32.mrf.mxu0
    %v2074 = vadd.f32 %v540, %v2073
    %v2075 = vpop.f32.mrf.mxu0
    %2076 = vmatprep.mubr.f32.mxu0 0.0
    %2077 = vmatmul.mubr.f32.gmra.mxu0 %v2005
    %v2078 = vpop.f32.mrf.mxu0
    %v2079 = vadd.f32 %v540, %v2078
    %v2080 = vpop.f32.mrf.mxu0
    %2081 = vdwg.mxu0
    %v2082 = vsel %vm634, %v2000, 0
    %2084 = vmatprep.subr.mxu0 0.0
    %2085 = vmatpush1.msra.mxu0 0.0
    %2086 = vmatprep.subr.mxu0 0.0
    %2087 = vmatpush1.msra.mxu0 0.0
    %2088 = vmatprep.subr.mxu0 0.0
    %2089 = vmatpush1.msra.mxu0 0.0
    %2090 = vmatprep.subr.mxu0 0.0
    %2091 = vmatpush1.msra.mxu0 0.0
    %2092 = vmatprep.subr.mxu0 0.0
    %2093 = vmatpush1.msra.mxu0 0.0
    %2094 = vmatprep.subr.mxu0 0.0
    %2095 = vmatpush1.msra.mxu0 0.0
    %2096 = vmatprep.subr.mxu0 0.0
    %2097 = vmatpush1.msra.mxu0 0.0
    %2098 = vmatprep.subr.mxu0 0.0
    %2099 = vmatpush1.msra.mxu0 0.0
    %2100 = vmatprep.subr.mxu0 0.0
    %2101 = vmatpush1.msra.mxu0 0.0
    %2102 = vmatprep.subr.mxu0 0.0
    %2103 = vmatpush1.msra.mxu0 0.0
    %2104 = vmatprep.subr.mxu0 0.0
    %2105 = vmatpush1.msra.mxu0 0.0
    %2106 = vmatprep.subr.mxu0 0.0
    %2107 = vmatpush1.msra.mxu0 0.0
    %2108 = vmatprep.subr.mxu0 0.0
    %2109 = vmatpush1.msra.mxu0 0.0
    %2110 = vmatprep.subr.mxu0 0.0
    %2111 = vmatpush1.msra.mxu0 0.0
    %2112 = vmatprep.subr.mxu0 0.0
    %2113 = vmatpush1.msra.mxu0 %v2082
    %2114 = vmatprep.subr.mxu0 0.0
    %2115 = vmatpush1.msra.mxu0 %v1999
    %2116 = vmatprep.subr.mxu0 0.0
    %2117 = vmatpush2.msra.mxu0 0.0
    %2118 = vmatprep.subr.mxu0 0.0
    %2119 = vmatpush2.msra.mxu0 0.0
    %2120 = vmatprep.subr.mxu0 0.0
    %2121 = vmatpush2.msra.mxu0 0.0
    %2122 = vmatprep.subr.mxu0 0.0
    %2123 = vmatpush2.msra.mxu0 0.0
    %2124 = vmatprep.subr.mxu0 0.0
    %2125 = vmatpush2.msra.mxu0 0.0
    %2126 = vmatprep.subr.mxu0 0.0
    %2127 = vmatpush2.msra.mxu0 0.0
    %2128 = vmatprep.subr.mxu0 0.0
    %2129 = vmatpush2.msra.mxu0 0.0
    %2130 = vmatprep.subr.mxu0 0.0
    %2131 = vmatpush2.msra.mxu0 0.0
    %2132 = vmatprep.subr.mxu0 0.0
    %2133 = vmatpush2.msra.mxu0 0.0
    %2134 = vmatprep.subr.mxu0 0.0
    %2135 = vmatpush2.msra.mxu0 0.0
    %2136 = vmatprep.subr.mxu0 0.0
    %2137 = vmatpush2.msra.mxu0 0.0
    %2138 = vmatprep.subr.mxu0 0.0
    %2139 = vmatpush2.msra.mxu0 0.0
    %2140 = vmatprep.subr.mxu0 0.0
    %2141 = vmatpush2.msra.mxu0 0.0
    %2142 = vmatprep.subr.mxu0 0.0
    %2143 = vmatpush2.msra.mxu0 0.0
    %2144 = vmatprep.subr.mxu0 0.0
    %2145 = vmatpush2.msra.mxu0 0.0
    %2146 = vmatprep.subr.mxu0 0.0
    %2147 = vmatpush2.msra.mxu0 0.0
    %2148 = vmatprep.mubr.f32.mxu0 0.0
    %2149 = vmatmul.mubr.f32.gmra.mxu0 %v626
    %v2150 = vpop.f32.mrf.mxu0
    %v2151 = vadd.f32 0.0, %v2150
    %v2152 = vpop.f32.mrf.mxu0
    %2153 = vmatprep.mubr.f32.mxu0 0.0
    %2154 = vmatmul.mubr.f32.gmra.mxu0 %v629
    %v2155 = vpop.f32.mrf.mxu0
    %v2156 = vadd.f32 0.0, %v2155
    %v2157 = vpop.f32.mrf.mxu0
    %2158 = vmatprep.mubr.f32.mxu0 0.0
    %2159 = vmatmul.mubr.f32.gmra.mxu0 %v632
    %v2160 = vpop.f32.mrf.mxu0
    %v2161 = vadd.f32 0.0, %v2160
    %v2162 = vpop.f32.mrf.mxu0
    %2163 = vdwg.mxu0
    %2165 = vset.pattern.permute.xlu0 0
    %2166 = vperm.xlu0 %2165, %v2151
    %v2167 = vpop.permute.xlu0 %2166
    %2170 = vset.pattern.permute.xlu0 0
    %2171 = vperm.xlu0 %2170, %v2156
    %v2172 = vpop.permute.xlu0 %2171
    %2175 = vset.pattern.permute.xlu0 0
    %2176 = vperm.xlu0 %2175, %v2161
    %v2177 = vpop.permute.xlu0 %2176
    %v2179 = vmul.f32 %v2167, %v495
    %v2180 = vmul.f32 %v2172, %v501
    %v2181 = vmul.f32 %v2177, %v507
    %2182 = vset.pattern.permute.xlu0 1
    %2183 = vperm.xlu0 %2182, %v2151
    %v2184 = vpop.permute.xlu0 %2183
    %2186 = vset.pattern.permute.xlu0 1
    %2187 = vperm.xlu0 %2186, %v2156
    %v2188 = vpop.permute.xlu0 %2187
    %2190 = vset.pattern.permute.xlu0 1
    %2191 = vperm.xlu0 %2190, %v2161
    %v2192 = vpop.permute.xlu0 %2191
    %v2194 = vmul.f32 %v2184, %v495
    %v2195 = vmul.f32 %v2188, %v501
    %v2196 = vmul.f32 %v2192, %v507
    %2200 = vrot.lane.b32.xlu0 %v2194, 112
    %v2201 = vpop.permute.xlu0 %2200
    %2202 = vrot.lane.b32.xlu0 %v2195, 112
    %v2203 = vpop.permute.xlu0 %2202
    %2204 = vrot.lane.b32.xlu0 %v2196, 112
    %v2205 = vpop.permute.xlu0 %2204
    %v2209 = vadd.f32 %v2179, %v2201
    %v2210 = vadd.f32 %v2180, %v2203
    %v2211 = vadd.f32 %v2181, %v2205
    %2212 = vset.pattern.permute.xlu0 2
    %2213 = vperm.xlu0 %2212, %v2151
    %v2214 = vpop.permute.xlu0 %2213
    %2216 = vset.pattern.permute.xlu0 2
    %2217 = vperm.xlu0 %2216, %v2156
    %v2218 = vpop.permute.xlu0 %2217
    %2220 = vset.pattern.permute.xlu0 2
    %2221 = vperm.xlu0 %2220, %v2161
    %v2222 = vpop.permute.xlu0 %2221
    %v2224 = vmul.f32 %v2214, %v495
    %v2225 = vmul.f32 %v2218, %v501
    %v2226 = vmul.f32 %v2222, %v507
    %2230 = vrot.lane.b32.xlu0 %v2224, 96
    %v2231 = vpop.permute.xlu0 %2230
    %2232 = vrot.lane.b32.xlu0 %v2225, 96
    %v2233 = vpop.permute.xlu0 %2232
    %2234 = vrot.lane.b32.xlu0 %v2226, 96
    %v2235 = vpop.permute.xlu0 %2234
    %v2239 = vadd.f32 %v2209, %v2231
    %v2240 = vadd.f32 %v2210, %v2233
    %v2241 = vadd.f32 %v2211, %v2235
    %2242 = vset.pattern.permute.xlu0 3
    %2243 = vperm.xlu0 %2242, %v2151
    %v2244 = vpop.permute.xlu0 %2243
    %2246 = vset.pattern.permute.xlu0 3
    %2247 = vperm.xlu0 %2246, %v2156
    %v2248 = vpop.permute.xlu0 %2247
    %2250 = vset.pattern.permute.xlu0 3
    %2251 = vperm.xlu0 %2250, %v2161
    %v2252 = vpop.permute.xlu0 %2251
    %v2254 = vmul.f32 %v2244, %v495
    %v2255 = vmul.f32 %v2248, %v501
    %v2256 = vmul.f32 %v2252, %v507
    %2260 = vrot.lane.b32.xlu0 %v2254, 80
    %v2261 = vpop.permute.xlu0 %2260
    %2262 = vrot.lane.b32.xlu0 %v2255, 80
    %v2263 = vpop.permute.xlu0 %2262
    %2264 = vrot.lane.b32.xlu0 %v2256, 80
    %v2265 = vpop.permute.xlu0 %2264
    %v2269 = vadd.f32 %v2239, %v2261
    %v2270 = vadd.f32 %v2240, %v2263
    %v2271 = vadd.f32 %v2241, %v2265
    %2272 = vset.pattern.permute.xlu0 4
    %2273 = vperm.xlu0 %2272, %v2151
    %v2274 = vpop.permute.xlu0 %2273
    %2276 = vset.pattern.permute.xlu0 4
    %2277 = vperm.xlu0 %2276, %v2156
    %v2278 = vpop.permute.xlu0 %2277
    %2280 = vset.pattern.permute.xlu0 4
    %2281 = vperm.xlu0 %2280, %v2161
    %v2282 = vpop.permute.xlu0 %2281
    %v2284 = vmul.f32 %v2274, %v495
    %v2285 = vmul.f32 %v2278, %v501
    %v2286 = vmul.f32 %v2282, %v507
    %2290 = vrot.lane.b32.xlu0 %v2284, 64
    %v2291 = vpop.permute.xlu0 %2290
    %2292 = vrot.lane.b32.xlu0 %v2285, 64
    %v2293 = vpop.permute.xlu0 %2292
    %2294 = vrot.lane.b32.xlu0 %v2286, 64
    %v2295 = vpop.permute.xlu0 %2294
    %v2299 = vadd.f32 %v2269, %v2291
    %v2300 = vadd.f32 %v2270, %v2293
    %v2301 = vadd.f32 %v2271, %v2295
    %2302 = vset.pattern.permute.xlu0 5
    %2303 = vperm.xlu0 %2302, %v2151
    %v2304 = vpop.permute.xlu0 %2303
    %2306 = vset.pattern.permute.xlu0 5
    %2307 = vperm.xlu0 %2306, %v2156
    %v2308 = vpop.permute.xlu0 %2307
    %2310 = vset.pattern.permute.xlu0 5
    %2311 = vperm.xlu0 %2310, %v2161
    %v2312 = vpop.permute.xlu0 %2311
    %v2314 = vmul.f32 %v2304, %v495
    %v2315 = vmul.f32 %v2308, %v501
    %v2316 = vmul.f32 %v2312, %v507
    %2320 = vrot.lane.b32.xlu0 %v2314, 48
    %v2321 = vpop.permute.xlu0 %2320
    %2322 = vrot.lane.b32.xlu0 %v2315, 48
    %v2323 = vpop.permute.xlu0 %2322
    %2324 = vrot.lane.b32.xlu0 %v2316, 48
    %v2325 = vpop.permute.xlu0 %2324
    %v2329 = vadd.f32 %v2299, %v2321
    %v2330 = vadd.f32 %v2300, %v2323
    %v2331 = vadd.f32 %v2301, %v2325
    %2332 = vset.pattern.permute.xlu0 6
    %2333 = vperm.xlu0 %2332, %v2151
    %v2334 = vpop.permute.xlu0 %2333
    %2336 = vset.pattern.permute.xlu0 6
    %2337 = vperm.xlu0 %2336, %v2156
    %v2338 = vpop.permute.xlu0 %2337
    %2340 = vset.pattern.permute.xlu0 6
    %2341 = vperm.xlu0 %2340, %v2161
    %v2342 = vpop.permute.xlu0 %2341
    %v2344 = vmul.f32 %v2334, %v495
    %v2345 = vmul.f32 %v2338, %v501
    %v2346 = vmul.f32 %v2342, %v507
    %2350 = vrot.lane.b32.xlu0 %v2344, 32
    %v2351 = vpop.permute.xlu0 %2350
    %2352 = vrot.lane.b32.xlu0 %v2345, 32
    %v2353 = vpop.permute.xlu0 %2352
    %2354 = vrot.lane.b32.xlu0 %v2346, 32
    %v2355 = vpop.permute.xlu0 %2354
    %v2359 = vadd.f32 %v2329, %v2351
    %v2360 = vadd.f32 %v2330, %v2353
    %v2361 = vadd.f32 %v2331, %v2355
    %2362 = vset.pattern.permute.xlu0 7
    %2363 = vperm.xlu0 %2362, %v2151
    %v2364 = vpop.permute.xlu0 %2363
    %2366 = vset.pattern.permute.xlu0 7
    %2367 = vperm.xlu0 %2366, %v2156
    %v2368 = vpop.permute.xlu0 %2367
    %2370 = vset.pattern.permute.xlu0 7
    %2371 = vperm.xlu0 %2370, %v2161
    %v2372 = vpop.permute.xlu0 %2371
    %v2374 = vmul.f32 %v2364, %v495
    %v2375 = vmul.f32 %v2368, %v501
    %v2376 = vmul.f32 %v2372, %v507
    %2380 = vrot.lane.b32.xlu0 %v2374, 16
    %v2381 = vpop.permute.xlu0 %2380
    %2382 = vrot.lane.b32.xlu0 %v2375, 16
    %v2383 = vpop.permute.xlu0 %2382
    %2384 = vrot.lane.b32.xlu0 %v2376, 16
    %v2385 = vpop.permute.xlu0 %2384
    %v2389 = vadd.f32 %v2359, %v2381
    %v2390 = vadd.f32 %v2360, %v2383
    %v2391 = vadd.f32 %v2361, %v2385
    %2392 = vset.pattern.permute.xlu0 8
    %2393 = vperm.xlu0 %2392, %v2151
    %v2394 = vpop.permute.xlu0 %2393
    %2396 = vset.pattern.permute.xlu0 8
    %2397 = vperm.xlu0 %2396, %v2156
    %v2398 = vpop.permute.xlu0 %2397
    %2400 = vset.pattern.permute.xlu0 8
    %2401 = vperm.xlu0 %2400, %v2161
    %v2402 = vpop.permute.xlu0 %2401
    %v2404 = vmul.f32 %v2394, %v497
    %v2405 = vmul.f32 %v2398, %v503
    %v2406 = vmul.f32 %v2402, %v509
    %v2407 = vadd.f32 %v2389, %v2404
    %v2408 = vadd.f32 %v2390, %v2405
    %v2409 = vadd.f32 %v2391, %v2406
    %2410 = vset.pattern.permute.xlu0 9
    %2411 = vperm.xlu0 %2410, %v2151
    %v2412 = vpop.permute.xlu0 %2411
    %2414 = vset.pattern.permute.xlu0 9
    %2415 = vperm.xlu0 %2414, %v2156
    %v2416 = vpop.permute.xlu0 %2415
    %2418 = vset.pattern.permute.xlu0 9
    %2419 = vperm.xlu0 %2418, %v2161
    %v2420 = vpop.permute.xlu0 %2419
    %v2422 = vmul.f32 %v2412, %v497
    %v2423 = vmul.f32 %v2416, %v503
    %v2424 = vmul.f32 %v2420, %v509
    %2428 = vrot.lane.b32.xlu0 %v2422, 112
    %v2429 = vpop.permute.xlu0 %2428
    %2430 = vrot.lane.b32.xlu0 %v2423, 112
    %v2431 = vpop.permute.xlu0 %2430
    %2432 = vrot.lane.b32.xlu0 %v2424, 112
    %v2433 = vpop.permute.xlu0 %2432
    %v2437 = vadd.f32 %v2407, %v2429
    %v2438 = vadd.f32 %v2408, %v2431
    %v2439 = vadd.f32 %v2409, %v2433
    %2440 = vset.pattern.permute.xlu0 10
    %2441 = vperm.xlu0 %2440, %v2151
    %v2442 = vpop.permute.xlu0 %2441
    %2444 = vset.pattern.permute.xlu0 10
    %2445 = vperm.xlu0 %2444, %v2156
    %v2446 = vpop.permute.xlu0 %2445
    %2448 = vset.pattern.permute.xlu0 10
    %2449 = vperm.xlu0 %2448, %v2161
    %v2450 = vpop.permute.xlu0 %2449
    %v2452 = vmul.f32 %v2442, %v497
    %v2453 = vmul.f32 %v2446, %v503
    %v2454 = vmul.f32 %v2450, %v509
    %2458 = vrot.lane.b32.xlu0 %v2452, 96
    %v2459 = vpop.permute.xlu0 %2458
    %2460 = vrot.lane.b32.xlu0 %v2453, 96
    %v2461 = vpop.permute.xlu0 %2460
    %2462 = vrot.lane.b32.xlu0 %v2454, 96
    %v2463 = vpop.permute.xlu0 %2462
    %v2467 = vadd.f32 %v2437, %v2459
    %v2468 = vadd.f32 %v2438, %v2461
    %v2469 = vadd.f32 %v2439, %v2463
    %2470 = vset.pattern.permute.xlu0 11
    %2471 = vperm.xlu0 %2470, %v2151
    %v2472 = vpop.permute.xlu0 %2471
    %2474 = vset.pattern.permute.xlu0 11
    %2475 = vperm.xlu0 %2474, %v2156
    %v2476 = vpop.permute.xlu0 %2475
    %2478 = vset.pattern.permute.xlu0 11
    %2479 = vperm.xlu0 %2478, %v2161
    %v2480 = vpop.permute.xlu0 %2479
    %v2482 = vmul.f32 %v2472, %v497
    %v2483 = vmul.f32 %v2476, %v503
    %v2484 = vmul.f32 %v2480, %v509
    %2488 = vrot.lane.b32.xlu0 %v2482, 80
    %v2489 = vpop.permute.xlu0 %2488
    %2490 = vrot.lane.b32.xlu0 %v2483, 80
    %v2491 = vpop.permute.xlu0 %2490
    %2492 = vrot.lane.b32.xlu0 %v2484, 80
    %v2493 = vpop.permute.xlu0 %2492
    %v2497 = vadd.f32 %v2467, %v2489
    %v2498 = vadd.f32 %v2468, %v2491
    %v2499 = vadd.f32 %v2469, %v2493
    %2500 = vset.pattern.permute.xlu0 12
    %2501 = vperm.xlu0 %2500, %v2151
    %v2502 = vpop.permute.xlu0 %2501
    %2504 = vset.pattern.permute.xlu0 12
    %2505 = vperm.xlu0 %2504, %v2156
    %v2506 = vpop.permute.xlu0 %2505
    %2508 = vset.pattern.permute.xlu0 12
    %2509 = vperm.xlu0 %2508, %v2161
    %v2510 = vpop.permute.xlu0 %2509
    %v2512 = vmul.f32 %v2502, %v497
    %v2513 = vmul.f32 %v2506, %v503
    %v2514 = vmul.f32 %v2510, %v509
    %2518 = vrot.lane.b32.xlu0 %v2512, 64
    %v2519 = vpop.permute.xlu0 %2518
    %2520 = vrot.lane.b32.xlu0 %v2513, 64
    %v2521 = vpop.permute.xlu0 %2520
    %2522 = vrot.lane.b32.xlu0 %v2514, 64
    %v2523 = vpop.permute.xlu0 %2522
    %v2527 = vadd.f32 %v2497, %v2519
    %v2528 = vadd.f32 %v2498, %v2521
    %v2529 = vadd.f32 %v2499, %v2523
    %2530 = vset.pattern.permute.xlu0 13
    %2531 = vperm.xlu0 %2530, %v2151
    %v2532 = vpop.permute.xlu0 %2531
    %2534 = vset.pattern.permute.xlu0 13
    %2535 = vperm.xlu0 %2534, %v2156
    %v2536 = vpop.permute.xlu0 %2535
    %2538 = vset.pattern.permute.xlu0 13
    %2539 = vperm.xlu0 %2538, %v2161
    %v2540 = vpop.permute.xlu0 %2539
    %v2542 = vmul.f32 %v2532, %v497
    %v2543 = vmul.f32 %v2536, %v503
    %v2544 = vmul.f32 %v2540, %v509
    %2548 = vrot.lane.b32.xlu0 %v2542, 48
    %v2549 = vpop.permute.xlu0 %2548
    %2550 = vrot.lane.b32.xlu0 %v2543, 48
    %v2551 = vpop.permute.xlu0 %2550
    %2552 = vrot.lane.b32.xlu0 %v2544, 48
    %v2553 = vpop.permute.xlu0 %2552
    %v2557 = vadd.f32 %v2527, %v2549
    %v2558 = vadd.f32 %v2528, %v2551
    %v2559 = vadd.f32 %v2529, %v2553
    %2560 = vset.pattern.permute.xlu0 14
    %2561 = vperm.xlu0 %2560, %v2151
    %v2562 = vpop.permute.xlu0 %2561
    %2564 = vset.pattern.permute.xlu0 14
    %2565 = vperm.xlu0 %2564, %v2156
    %v2566 = vpop.permute.xlu0 %2565
    %2568 = vset.pattern.permute.xlu0 14
    %2569 = vperm.xlu0 %2568, %v2161
    %v2570 = vpop.permute.xlu0 %2569
    %v2572 = vmul.f32 %v2562, %v497
    %v2573 = vmul.f32 %v2566, %v503
    %v2574 = vmul.f32 %v2570, %v509
    %2578 = vrot.lane.b32.xlu0 %v2572, 32
    %v2579 = vpop.permute.xlu0 %2578
    %2580 = vrot.lane.b32.xlu0 %v2573, 32
    %v2581 = vpop.permute.xlu0 %2580
    %2582 = vrot.lane.b32.xlu0 %v2574, 32
    %v2583 = vpop.permute.xlu0 %2582
    %v2587 = vadd.f32 %v2557, %v2579
    %v2588 = vadd.f32 %v2558, %v2581
    %v2589 = vadd.f32 %v2559, %v2583
    %2590 = vset.pattern.permute.xlu0 15
    %2591 = vperm.xlu0 %2590, %v2151
    %v2592 = vpop.permute.xlu0 %2591
    %2594 = vset.pattern.permute.xlu0 15
    %2595 = vperm.xlu0 %2594, %v2156
    %v2596 = vpop.permute.xlu0 %2595
    %2598 = vset.pattern.permute.xlu0 15
    %2599 = vperm.xlu0 %2598, %v2161
    %v2600 = vpop.permute.xlu0 %2599
    %v2602 = vmul.f32 %v2592, %v497
    %v2603 = vmul.f32 %v2596, %v503
    %v2604 = vmul.f32 %v2600, %v509
    %2608 = vrot.lane.b32.xlu0 %v2602, 16
    %v2609 = vpop.permute.xlu0 %2608
    %2610 = vrot.lane.b32.xlu0 %v2603, 16
    %v2611 = vpop.permute.xlu0 %2610
    %2612 = vrot.lane.b32.xlu0 %v2604, 16
    %v2613 = vpop.permute.xlu0 %2612
    %v2617 = vadd.f32 %v2587, %v2609
    %v2618 = vadd.f32 %v2588, %v2611
    %v2619 = vadd.f32 %v2589, %v2613
    %2620 = vmatprep.subr.mxu0 0.0
    %2621 = vmatpush1.msra.mxu0 0.0
    %2622 = vmatprep.subr.mxu0 0.0
    %2623 = vmatpush1.msra.mxu0 0.0
    %2624 = vmatprep.subr.mxu0 0.0
    %2625 = vmatpush1.msra.mxu0 0.0
    %2626 = vmatprep.subr.mxu0 0.0
    %2627 = vmatpush1.msra.mxu0 0.0
    %2628 = vmatprep.subr.mxu0 0.0
    %2629 = vmatpush1.msra.mxu0 0.0
    %2630 = vmatprep.subr.mxu0 0.0
    %2631 = vmatpush1.msra.mxu0 0.0
    %2632 = vmatprep.subr.mxu0 0.0
    %2633 = vmatpush1.msra.mxu0 0.0
    %2634 = vmatprep.subr.mxu0 0.0
    %2635 = vmatpush1.msra.mxu0 0.0
    %2636 = vmatprep.subr.mxu0 0.0
    %2637 = vmatpush1.msra.mxu0 0.0
    %2638 = vmatprep.subr.mxu0 0.0
    %2639 = vmatpush1.msra.mxu0 0.0
    %2640 = vmatprep.subr.mxu0 0.0
    %2641 = vmatpush1.msra.mxu0 0.0
    %2642 = vmatprep.subr.mxu0 0.0
    %2643 = vmatpush1.msra.mxu0 0.0
    %2644 = vmatprep.subr.mxu0 0.0
    %2645 = vmatpush1.msra.mxu0 0.0
    %2646 = vmatprep.subr.mxu0 0.0
    %2647 = vmatpush1.msra.mxu0 %v2619
    %2648 = vmatprep.subr.mxu0 0.0
    %2649 = vmatpush1.msra.mxu0 %v2618
    %2650 = vmatprep.subr.mxu0 0.0
    %2651 = vmatpush1.msra.mxu0 %v2617
    %2652 = vmatprep.subr.mxu0 0.0
    %2653 = vmatpush2.msra.mxu0 0.0
    %2654 = vmatprep.subr.mxu0 0.0
    %2655 = vmatpush2.msra.mxu0 0.0
    %2656 = vmatprep.subr.mxu0 0.0
    %2657 = vmatpush2.msra.mxu0 0.0
    %2658 = vmatprep.subr.mxu0 0.0
    %2659 = vmatpush2.msra.mxu0 0.0
    %2660 = vmatprep.subr.mxu0 0.0
    %2661 = vmatpush2.msra.mxu0 0.0
    %2662 = vmatprep.subr.mxu0 0.0
    %2663 = vmatpush2.msra.mxu0 0.0
    %2664 = vmatprep.subr.mxu0 0.0
    %2665 = vmatpush2.msra.mxu0 0.0
    %2666 = vmatprep.subr.mxu0 0.0
    %2667 = vmatpush2.msra.mxu0 0.0
    %2668 = vmatprep.subr.mxu0 0.0
    %2669 = vmatpush2.msra.mxu0 0.0
    %2670 = vmatprep.subr.mxu0 0.0
    %2671 = vmatpush2.msra.mxu0 0.0
    %2672 = vmatprep.subr.mxu0 0.0
    %2673 = vmatpush2.msra.mxu0 0.0
    %2674 = vmatprep.subr.mxu0 0.0
    %2675 = vmatpush2.msra.mxu0 0.0
    %2676 = vmatprep.subr.mxu0 0.0
    %2677 = vmatpush2.msra.mxu0 0.0
    %2678 = vmatprep.subr.mxu0 0.0
    %2679 = vmatpush2.msra.mxu0 0.0
    %2680 = vmatprep.subr.mxu0 0.0
    %2681 = vmatpush2.msra.mxu0 0.0
    %2682 = vmatprep.subr.mxu0 0.0
    %2683 = vmatpush2.msra.mxu0 0.0
    %2684 = vmatprep.mubr.f32.mxu0 0.0
    %2685 = vmatmul.mubr.f32.gmra.mxu0 %v1175
    %v2686 = vpop.f32.mrf.mxu0
    %v2687 = vadd.f32 %v2074, %v2686
    %v2688 = vpop.f32.mrf.mxu0
    %2689 = vmatprep.mubr.f32.mxu0 0.0
    %2690 = vmatmul.mubr.f32.gmra.mxu0 %v1178
    %v2691 = vpop.f32.mrf.mxu0
    %v2692 = vadd.f32 %v2079, %v2691
    %v2693 = vpop.f32.mrf.mxu0
    %2694 = vdwg.mxu0
    %v2695 = vmax.f32 %v2687, 0.0
    %v2696 = vmax.f32 %v2692, 0.0
    %v2698 = vsel %vm542, %v2695, 0
    %v2701 = vsel %vm542, %v2696, 0
    %2703 = vmatprep.subr.mxu0 0.0
    %2704 = vmatpush1.msra.mxu0 0.0
    %2705 = vmatprep.subr.mxu0 0.0
    %2706 = vmatpush1.msra.mxu0 0.0
    %2707 = vmatprep.subr.mxu0 0.0
    %2708 = vmatpush1.msra.mxu0 0.0
    %2709 = vmatprep.subr.mxu0 0.0
    %2710 = vmatpush1.msra.mxu0 0.0
    %2711 = vmatprep.subr.mxu0 0.0
    %2712 = vmatpush1.msra.mxu0 0.0
    %2713 = vmatprep.subr.mxu0 0.0
    %2714 = vmatpush1.msra.mxu0 0.0
    %2715 = vmatprep.subr.mxu0 0.0
    %2716 = vmatpush1.msra.mxu0 0.0
    %2717 = vmatprep.subr.mxu0 0.0
    %2718 = vmatpush1.msra.mxu0 0.0
    %2719 = vmatprep.subr.mxu0 0.0
    %2720 = vmatpush1.msra.mxu0 0.0
    %2721 = vmatprep.subr.mxu0 0.0
    %2722 = vmatpush1.msra.mxu0 0.0
    %2723 = vmatprep.subr.mxu0 0.0
    %2724 = vmatpush1.msra.mxu0 0.0
    %2725 = vmatprep.subr.mxu0 0.0
    %2726 = vmatpush1.msra.mxu0 0.0
    %2727 = vmatprep.subr.mxu0 0.0
    %2728 = vmatpush1.msra.mxu0 0.0
    %2729 = vmatprep.subr.mxu0 0.0
    %2730 = vmatpush1.msra.mxu0 0.0
    %2731 = vmatprep.subr.mxu0 0.0
    %2732 = vmatpush1.msra.mxu0 %v532
    %2733 = vmatprep.subr.mxu0 0.0
    %2734 = vmatpush1.msra.mxu0 %v531
    %2735 = vmatprep.subr.mxu0 0.0
    %2736 = vmatpush2.msra.mxu0 0.0
    %2737 = vmatprep.subr.mxu0 0.0
    %2738 = vmatpush2.msra.mxu0 0.0
    %2739 = vmatprep.subr.mxu0 0.0
    %2740 = vmatpush2.msra.mxu0 0.0
    %2741 = vmatprep.subr.mxu0 0.0
    %2742 = vmatpush2.msra.mxu0 0.0
    %2743 = vmatprep.subr.mxu0 0.0
    %2744 = vmatpush2.msra.mxu0 0.0
    %2745 = vmatprep.subr.mxu0 0.0
    %2746 = vmatpush2.msra.mxu0 0.0
    %2747 = vmatprep.subr.mxu0 0.0
    %2748 = vmatpush2.msra.mxu0 0.0
    %2749 = vmatprep.subr.mxu0 0.0
    %2750 = vmatpush2.msra.mxu0 0.0
    %2751 = vmatprep.subr.mxu0 0.0
    %2752 = vmatpush2.msra.mxu0 0.0
    %2753 = vmatprep.subr.mxu0 0.0
    %2754 = vmatpush2.msra.mxu0 0.0
    %2755 = vmatprep.subr.mxu0 0.0
    %2756 = vmatpush2.msra.mxu0 0.0
    %2757 = vmatprep.subr.mxu0 0.0
    %2758 = vmatpush2.msra.mxu0 0.0
    %2759 = vmatprep.subr.mxu0 0.0
    %2760 = vmatpush2.msra.mxu0 0.0
    %2761 = vmatprep.subr.mxu0 0.0
    %2762 = vmatpush2.msra.mxu0 0.0
    %2763 = vmatprep.subr.mxu0 0.0
    %2764 = vmatpush2.msra.mxu0 0.0
    %2765 = vmatprep.subr.mxu0 0.0
    %2766 = vmatpush2.msra.mxu0 0.0
    %2767 = vmatprep.mubr.f32.mxu0 0.0
    %2768 = vmatmul.mubr.f32.gmra.mxu0 %v2698
    %v2769 = vpop.f32.mrf.mxu0
    %v2770 = vadd.f32 0.0, %v2769
    %v2771 = vpop.f32.mrf.mxu0
    %2772 = vmatprep.mubr.f32.mxu0 0.0
    %2773 = vmatmul.mubr.f32.gmra.mxu0 %v2701
    %v2774 = vpop.f32.mrf.mxu0
    %v2775 = vadd.f32 0.0, %v2774
    %v2776 = vpop.f32.mrf.mxu0
    %2777 = vdwg.mxu0
    %v2779 = vsel %vm542, %v2770, 0
    %v2782 = vsel %vm542, %v2775, 0
    %2784 = vmatprep.subr.mxu0 0.0
    %2785 = vmatpush1.msra.mxu0 0.0
    %2786 = vmatprep.subr.mxu0 0.0
    %2787 = vmatpush1.msra.mxu0 0.0
    %2788 = vmatprep.subr.mxu0 0.0
    %2789 = vmatpush1.msra.mxu0 0.0
    %2790 = vmatprep.subr.mxu0 0.0
    %2791 = vmatpush1.msra.mxu0 0.0
    %2792 = vmatprep.subr.mxu0 0.0
    %2793 = vmatpush1.msra.mxu0 0.0
    %2794 = vmatprep.subr.mxu0 0.0
    %2795 = vmatpush1.msra.mxu0 0.0
    %2796 = vmatprep.subr.mxu0 0.0
    %2797 = vmatpush1.msra.mxu0 0.0
    %2798 = vmatprep.subr.mxu0 0.0
    %2799 = vmatpush1.msra.mxu0 0.0
    %2800 = vmatprep.subr.mxu0 0.0
    %2801 = vmatpush1.msra.mxu0 0.0
    %2802 = vmatprep.subr.mxu0 0.0
    %2803 = vmatpush1.msra.mxu0 0.0
    %2804 = vmatprep.subr.mxu0 0.0
    %2805 = vmatpush1.msra.mxu0 0.0
    %2806 = vmatprep.subr.mxu0 0.0
    %2807 = vmatpush1.msra.mxu0 0.0
    %2808 = vmatprep.subr.mxu0 0.0
    %2809 = vmatpush1.msra.mxu0 0.0
    %2810 = vmatprep.subr.mxu0 0.0
    %2811 = vmatpush1.msra.mxu0 0.0
    %2812 = vmatprep.subr.mxu0 0.0
    %2813 = vmatpush1.msra.mxu0 %v534
    %2814 = vmatprep.subr.mxu0 0.0
    %2815 = vmatpush1.msra.mxu0 %v533
    %2816 = vmatprep.subr.mxu0 0.0
    %2817 = vmatpush2.msra.mxu0 0.0
    %2818 = vmatprep.subr.mxu0 0.0
    %2819 = vmatpush2.msra.mxu0 0.0
    %2820 = vmatprep.subr.mxu0 0.0
    %2821 = vmatpush2.msra.mxu0 0.0
    %2822 = vmatprep.subr.mxu0 0.0
    %2823 = vmatpush2.msra.mxu0 0.0
    %2824 = vmatprep.subr.mxu0 0.0
    %2825 = vmatpush2.msra.mxu0 0.0
    %2826 = vmatprep.subr.mxu0 0.0
    %2827 = vmatpush2.msra.mxu0 0.0
    %2828 = vmatprep.subr.mxu0 0.0
    %2829 = vmatpush2.msra.mxu0 0.0
    %2830 = vmatprep.subr.mxu0 0.0
    %2831 = vmatpush2.msra.mxu0 0.0
    %2832 = vmatprep.subr.mxu0 0.0
    %2833 = vmatpush2.msra.mxu0 0.0
    %2834 = vmatprep.subr.mxu0 0.0
    %2835 = vmatpush2.msra.mxu0 0.0
    %2836 = vmatprep.subr.mxu0 0.0
    %2837 = vmatpush2.msra.mxu0 0.0
    %2838 = vmatprep.subr.mxu0 0.0
    %2839 = vmatpush2.msra.mxu0 0.0
    %2840 = vmatprep.subr.mxu0 0.0
    %2841 = vmatpush2.msra.mxu0 0.0
    %2842 = vmatprep.subr.mxu0 0.0
    %2843 = vmatpush2.msra.mxu0 0.0
    %2844 = vmatprep.subr.mxu0 0.0
    %2845 = vmatpush2.msra.mxu0 0.0
    %2846 = vmatprep.subr.mxu0 0.0
    %2847 = vmatpush2.msra.mxu0 0.0
    %2848 = vmatprep.mubr.f32.mxu0 0.0
    %2849 = vmatmul.mubr.f32.gmra.mxu0 %v2779
    %v2850 = vpop.f32.mrf.mxu0
    %v2851 = vadd.f32 0.0, %v2850
    %v2852 = vpop.f32.mrf.mxu0
    %2853 = vmatprep.mubr.f32.mxu0 0.0
    %2854 = vmatmul.mubr.f32.gmra.mxu0 %v2782
    %v2855 = vpop.f32.mrf.mxu0
    %v2856 = vadd.f32 0.0, %v2855
    %v2857 = vpop.f32.mrf.mxu0
    %2858 = vdwg.mxu0
    %v2859 = vsel %vm634, %v2775, 0
    %2861 = vmatprep.subr.mxu0 0.0
    %2862 = vmatpush1.msra.mxu0 0.0
    %2863 = vmatprep.subr.mxu0 0.0
    %2864 = vmatpush1.msra.mxu0 0.0
    %2865 = vmatprep.subr.mxu0 0.0
    %2866 = vmatpush1.msra.mxu0 0.0
    %2867 = vmatprep.subr.mxu0 0.0
    %2868 = vmatpush1.msra.mxu0 0.0
    %2869 = vmatprep.subr.mxu0 0.0
    %2870 = vmatpush1.msra.mxu0 0.0
    %2871 = vmatprep.subr.mxu0 0.0
    %2872 = vmatpush1.msra.mxu0 0.0
    %2873 = vmatprep.subr.mxu0 0.0
    %2874 = vmatpush1.msra.mxu0 0.0
    %2875 = vmatprep.subr.mxu0 0.0
    %2876 = vmatpush1.msra.mxu0 0.0
    %2877 = vmatprep.subr.mxu0 0.0
    %2878 = vmatpush1.msra.mxu0 0.0
    %2879 = vmatprep.subr.mxu0 0.0
    %2880 = vmatpush1.msra.mxu0 0.0
    %2881 = vmatprep.subr.mxu0 0.0
    %2882 = vmatpush1.msra.mxu0 0.0
    %2883 = vmatprep.subr.mxu0 0.0
    %2884 = vmatpush1.msra.mxu0 0.0
    %2885 = vmatprep.subr.mxu0 0.0
    %2886 = vmatpush1.msra.mxu0 0.0
    %2887 = vmatprep.subr.mxu0 0.0
    %2888 = vmatpush1.msra.mxu0 0.0
    %2889 = vmatprep.subr.mxu0 0.0
    %2890 = vmatpush1.msra.mxu0 %v2859
    %2891 = vmatprep.subr.mxu0 0.0
    %2892 = vmatpush1.msra.mxu0 %v2770
    %2893 = vmatprep.subr.mxu0 0.0
    %2894 = vmatpush2.msra.mxu0 0.0
    %2895 = vmatprep.subr.mxu0 0.0
    %2896 = vmatpush2.msra.mxu0 0.0
    %2897 = vmatprep.subr.mxu0 0.0
    %2898 = vmatpush2.msra.mxu0 0.0
    %2899 = vmatprep.subr.mxu0 0.0
    %2900 = vmatpush2.msra.mxu0 0.0
    %2901 = vmatprep.subr.mxu0 0.0
    %2902 = vmatpush2.msra.mxu0 0.0
    %2903 = vmatprep.subr.mxu0 0.0
    %2904 = vmatpush2.msra.mxu0 0.0
    %2905 = vmatprep.subr.mxu0 0.0
    %2906 = vmatpush2.msra.mxu0 0.0
    %2907 = vmatprep.subr.mxu0 0.0
    %2908 = vmatpush2.msra.mxu0 0.0
    %2909 = vmatprep.subr.mxu0 0.0
    %2910 = vmatpush2.msra.mxu0 0.0
    %2911 = vmatprep.subr.mxu0 0.0
    %2912 = vmatpush2.msra.mxu0 0.0
    %2913 = vmatprep.subr.mxu0 0.0
    %2914 = vmatpush2.msra.mxu0 0.0
    %2915 = vmatprep.subr.mxu0 0.0
    %2916 = vmatpush2.msra.mxu0 0.0
    %2917 = vmatprep.subr.mxu0 0.0
    %2918 = vmatpush2.msra.mxu0 0.0
    %2919 = vmatprep.subr.mxu0 0.0
    %2920 = vmatpush2.msra.mxu0 0.0
    %2921 = vmatprep.subr.mxu0 0.0
    %2922 = vmatpush2.msra.mxu0 0.0
    %2923 = vmatprep.subr.mxu0 0.0
    %2924 = vmatpush2.msra.mxu0 0.0
    %2925 = vmatprep.mubr.f32.mxu0 0.0
    %2926 = vmatmul.mubr.f32.gmra.mxu0 %v1420
    %v2927 = vpop.f32.mrf.mxu0
    %v2928 = vadd.f32 0.0, %v2927
    %v2929 = vpop.f32.mrf.mxu0
    %2930 = vmatprep.mubr.f32.mxu0 0.0
    %2931 = vmatmul.mubr.f32.gmra.mxu0 %v1423
    %v2932 = vpop.f32.mrf.mxu0
    %v2933 = vadd.f32 0.0, %v2932
    %v2934 = vpop.f32.mrf.mxu0
    %2935 = vmatprep.mubr.f32.mxu0 0.0
    %2936 = vmatmul.mubr.f32.gmra.mxu0 %v1426
    %v2937 = vpop.f32.mrf.mxu0
    %v2938 = vadd.f32 0.0, %v2937
    %v2939 = vpop.f32.mrf.mxu0
    %2940 = vmatprep.mubr.f32.mxu0 0.0
    %2941 = vmatmul.mubr.f32.gmra.mxu0 %v1429
    %v2942 = vpop.f32.mrf.mxu0
    %v2943 = vadd.f32 0.0, %v2942
    %v2944 = vpop.f32.mrf.mxu0
    %2945 = vmatprep.mubr.f32.mxu0 0.0
    %2946 = vmatmul.mubr.f32.gmra.mxu0 %v1432
    %v2947 = vpop.f32.mrf.mxu0
    %v2948 = vadd.f32 0.0, %v2947
    %v2949 = vpop.f32.mrf.mxu0
    %2950 = vdwg.mxu0
    %2953 = vrot.lane.b32.xlu0 %v2851, 127
    %v2954 = vpop.permute.xlu0 %2953
    %2955 = vrot.lane.b32.xlu0 %v2856, 127
    %v2956 = vpop.permute.xlu0 %2955
    %v2958 = vsel %vm634, %v2956, 0
    %2960 = vmatprep.subr.mxu0 0.0
    %2961 = vmatpush1.msra.mxu0 0.0
    %2962 = vmatprep.subr.mxu0 0.0
    %2963 = vmatpush1.msra.mxu0 0.0
    %2964 = vmatprep.subr.mxu0 0.0
    %2965 = vmatpush1.msra.mxu0 0.0
    %2966 = vmatprep.subr.mxu0 0.0
    %2967 = vmatpush1.msra.mxu0 0.0
    %2968 = vmatprep.subr.mxu0 0.0
    %2969 = vmatpush1.msra.mxu0 0.0
    %2970 = vmatprep.subr.mxu0 0.0
    %2971 = vmatpush1.msra.mxu0 0.0
    %2972 = vmatprep.subr.mxu0 0.0
    %2973 = vmatpush1.msra.mxu0 0.0
    %2974 = vmatprep.subr.mxu0 0.0
    %2975 = vmatpush1.msra.mxu0 0.0
    %2976 = vmatprep.subr.mxu0 0.0
    %2977 = vmatpush1.msra.mxu0 0.0
    %2978 = vmatprep.subr.mxu0 0.0
    %2979 = vmatpush1.msra.mxu0 0.0
    %2980 = vmatprep.subr.mxu0 0.0
    %2981 = vmatpush1.msra.mxu0 0.0
    %2982 = vmatprep.subr.mxu0 0.0
    %2983 = vmatpush1.msra.mxu0 0.0
    %2984 = vmatprep.subr.mxu0 0.0
    %2985 = vmatpush1.msra.mxu0 0.0
    %2986 = vmatprep.subr.mxu0 0.0
    %2987 = vmatpush1.msra.mxu0 0.0
    %2988 = vmatprep.subr.mxu0 0.0
    %2989 = vmatpush1.msra.mxu0 %v2958
    %2990 = vmatprep.subr.mxu0 0.0
    %2991 = vmatpush1.msra.mxu0 %v2954
    %2992 = vmatprep.subr.mxu0 0.0
    %2993 = vmatpush2.msra.mxu0 0.0
    %2994 = vmatprep.subr.mxu0 0.0
    %2995 = vmatpush2.msra.mxu0 0.0
    %2996 = vmatprep.subr.mxu0 0.0
    %2997 = vmatpush2.msra.mxu0 0.0
    %2998 = vmatprep.subr.mxu0 0.0
    %2999 = vmatpush2.msra.mxu0 0.0
    %3000 = vmatprep.subr.mxu0 0.0
    %3001 = vmatpush2.msra.mxu0 0.0
    %3002 = vmatprep.subr.mxu0 0.0
    %3003 = vmatpush2.msra.mxu0 0.0
    %3004 = vmatprep.subr.mxu0 0.0
    %3005 = vmatpush2.msra.mxu0 0.0
    %3006 = vmatprep.subr.mxu0 0.0
    %3007 = vmatpush2.msra.mxu0 0.0
    %3008 = vmatprep.subr.mxu0 0.0
    %3009 = vmatpush2.msra.mxu0 0.0
    %3010 = vmatprep.subr.mxu0 0.0
    %3011 = vmatpush2.msra.mxu0 0.0
    %3012 = vmatprep.subr.mxu0 0.0
    %3013 = vmatpush2.msra.mxu0 0.0
    %3014 = vmatprep.subr.mxu0 0.0
    %3015 = vmatpush2.msra.mxu0 0.0
    %3016 = vmatprep.subr.mxu0 0.0
    %3017 = vmatpush2.msra.mxu0 0.0
    %3018 = vmatprep.subr.mxu0 0.0
    %3019 = vmatpush2.msra.mxu0 0.0
    %3020 = vmatprep.subr.mxu0 0.0
    %3021 = vmatpush2.msra.mxu0 0.0
    %3022 = vmatprep.subr.mxu0 0.0
    %3023 = vmatpush2.msra.mxu0 0.0
    %3024 = vmatprep.mubr.f32.mxu0 0.0
    %3025 = vmatmul.mubr.f32.gmra.mxu0 %v1534
    %v3026 = vpop.f32.mrf.mxu0
    %v3027 = vadd.f32 0.0, %v3026
    %v3028 = vpop.f32.mrf.mxu0
    %3029 = vmatprep.mubr.f32.mxu0 0.0
    %3030 = vmatmul.mubr.f32.gmra.mxu0 %v1537
    %v3031 = vpop.f32.mrf.mxu0
    %v3032 = vadd.f32 0.0, %v3031
    %v3033 = vpop.f32.mrf.mxu0
    %3034 = vmatprep.mubr.f32.mxu0 0.0
    %3035 = vmatmul.mubr.f32.gmra.mxu0 %v1540
    %v3036 = vpop.f32.mrf.mxu0
    %v3037 = vadd.f32 0.0, %v3036
    %v3038 = vpop.f32.mrf.mxu0
    %3039 = vmatprep.mubr.f32.mxu0 0.0
    %3040 = vmatmul.mubr.f32.gmra.mxu0 %v1543
    %v3041 = vpop.f32.mrf.mxu0
    %v3042 = vadd.f32 0.0, %v3041
    %v3043 = vpop.f32.mrf.mxu0
    %3044 = vmatprep.mubr.f32.mxu0 0.0
    %3045 = vmatmul.mubr.f32.gmra.mxu0 %v1546
    %v3046 = vpop.f32.mrf.mxu0
    %v3047 = vadd.f32 0.0, %v3046
    %v3048 = vpop.f32.mrf.mxu0
    %3049 = vdwg.mxu0
    %v3050 = vsel %vm634, %v2856, 0
    %3052 = vmatprep.subr.mxu0 0.0
    %3053 = vmatpush1.msra.mxu0 0.0
    %3054 = vmatprep.subr.mxu0 0.0
    %3055 = vmatpush1.msra.mxu0 0.0
    %3056 = vmatprep.subr.mxu0 0.0
    %3057 = vmatpush1.msra.mxu0 0.0
    %3058 = vmatprep.subr.mxu0 0.0
    %3059 = vmatpush1.msra.mxu0 0.0
    %3060 = vmatprep.subr.mxu0 0.0
    %3061 = vmatpush1.msra.mxu0 0.0
    %3062 = vmatprep.subr.mxu0 0.0
    %3063 = vmatpush1.msra.mxu0 0.0
    %3064 = vmatprep.subr.mxu0 0.0
    %3065 = vmatpush1.msra.mxu0 0.0
    %3066 = vmatprep.subr.mxu0 0.0
    %3067 = vmatpush1.msra.mxu0 0.0
    %3068 = vmatprep.subr.mxu0 0.0
    %3069 = vmatpush1.msra.mxu0 0.0
    %3070 = vmatprep.subr.mxu0 0.0
    %3071 = vmatpush1.msra.mxu0 0.0
    %3072 = vmatprep.subr.mxu0 0.0
    %3073 = vmatpush1.msra.mxu0 0.0
    %3074 = vmatprep.subr.mxu0 0.0
    %3075 = vmatpush1.msra.mxu0 0.0
    %3076 = vmatprep.subr.mxu0 0.0
    %3077 = vmatpush1.msra.mxu0 0.0
    %3078 = vmatprep.subr.mxu0 0.0
    %3079 = vmatpush1.msra.mxu0 0.0
    %3080 = vmatprep.subr.mxu0 0.0
    %3081 = vmatpush1.msra.mxu0 %v3050
    %3082 = vmatprep.subr.mxu0 0.0
    %3083 = vmatpush1.msra.mxu0 %v2851
    %3084 = vmatprep.subr.mxu0 0.0
    %3085 = vmatpush2.msra.mxu0 0.0
    %3086 = vmatprep.subr.mxu0 0.0
    %3087 = vmatpush2.msra.mxu0 0.0
    %3088 = vmatprep.subr.mxu0 0.0
    %3089 = vmatpush2.msra.mxu0 0.0
    %3090 = vmatprep.subr.mxu0 0.0
    %3091 = vmatpush2.msra.mxu0 0.0
    %3092 = vmatprep.subr.mxu0 0.0
    %3093 = vmatpush2.msra.mxu0 0.0
    %3094 = vmatprep.subr.mxu0 0.0
    %3095 = vmatpush2.msra.mxu0 0.0
    %3096 = vmatprep.subr.mxu0 0.0
    %3097 = vmatpush2.msra.mxu0 0.0
    %3098 = vmatprep.subr.mxu0 0.0
    %3099 = vmatpush2.msra.mxu0 0.0
    %3100 = vmatprep.subr.mxu0 0.0
    %3101 = vmatpush2.msra.mxu0 0.0
    %3102 = vmatprep.subr.mxu0 0.0
    %3103 = vmatpush2.msra.mxu0 0.0
    %3104 = vmatprep.subr.mxu0 0.0
    %3105 = vmatpush2.msra.mxu0 0.0
    %3106 = vmatprep.subr.mxu0 0.0
    %3107 = vmatpush2.msra.mxu0 0.0
    %3108 = vmatprep.subr.mxu0 0.0
    %3109 = vmatpush2.msra.mxu0 0.0
    %3110 = vmatprep.subr.mxu0 0.0
    %3111 = vmatpush2.msra.mxu0 0.0
    %3112 = vmatprep.subr.mxu0 0.0
    %3113 = vmatpush2.msra.mxu0 0.0
    %3114 = vmatprep.subr.mxu0 0.0
    %3115 = vmatpush2.msra.mxu0 0.0
    %3116 = vmatprep.mubr.f32.mxu0 0.0
    %3117 = vmatmul.mubr.f32.gmra.mxu0 %v1420
    %v3118 = vpop.f32.mrf.mxu0
    %v3119 = vadd.f32 %v3027, %v3118
    %v3120 = vpop.f32.mrf.mxu0
    %3121 = vmatprep.mubr.f32.mxu0 0.0
    %3122 = vmatmul.mubr.f32.gmra.mxu0 %v1423
    %v3123 = vpop.f32.mrf.mxu0
    %v3124 = vadd.f32 %v3032, %v3123
    %v3125 = vpop.f32.mrf.mxu0
    %3126 = vmatprep.mubr.f32.mxu0 0.0
    %3127 = vmatmul.mubr.f32.gmra.mxu0 %v1426
    %v3128 = vpop.f32.mrf.mxu0
    %v3129 = vadd.f32 %v3037, %v3128
    %v3130 = vpop.f32.mrf.mxu0
    %3131 = vmatprep.mubr.f32.mxu0 0.0
    %3132 = vmatmul.mubr.f32.gmra.mxu0 %v1429
    %v3133 = vpop.f32.mrf.mxu0
    %v3134 = vadd.f32 %v3042, %v3133
    %v3135 = vpop.f32.mrf.mxu0
    %3136 = vmatprep.mubr.f32.mxu0 0.0
    %3137 = vmatmul.mubr.f32.gmra.mxu0 %v1432
    %v3138 = vpop.f32.mrf.mxu0
    %v3139 = vadd.f32 %v3047, %v3138
    %v3140 = vpop.f32.mrf.mxu0
    %3141 = vdwg.mxu0
    %vm3142 = vcmp.ge.f32.partialorder %v3119, 0.0
    %vm3143 = vcmp.ge.f32.partialorder %v3124, 0.0
    %vm3144 = vcmp.ge.f32.partialorder %v3129, 0.0
    %vm3145 = vcmp.ge.f32.partialorder %v3134, 0.0
    %vm3146 = vcmp.ge.f32.partialorder %v3139, 0.0
    %v3147 = vmul.f32 %v3119, 0.2
    %v3148 = vmul.f32 %v3124, 0.2
    %v3149 = vmul.f32 %v3129, 0.2
    %v3150 = vmul.f32 %v3134, 0.2
    %v3151 = vmul.f32 %v3139, 0.2
    %v3152 = vsel %vm3142, %v3119, %v3147
    %v3153 = vsel %vm3143, %v3124, %v3148
    %v3154 = vsel %vm3144, %v3129, %v3149
    %v3155 = vsel %vm3145, %v3134, %v3150
    %v3156 = vsel %vm3146, %v3139, %v3151
    %v3157 = vsel %vm1747, %v3152, -inf
    %v3158 = vsel %vm1747, %v3153, -inf
    %v3159 = vsel %vm1747, %v3154, -inf
    %v3160 = vsel %vm1747, %v3155, -inf
    %v3161 = vsel %vm1752, %v3156, -inf
    %v3162 = vmax.f32 %v3157, %v3161
    %v3163 = vmax.f32 %v3162, %v3158
    %v3164 = vmax.f32 %v3159, %v3160
    %v3165 = vmax.f32 %v3163, %v3164
    %3166 = vmax.xlane.f32.xlu0 %v3165
    %v3167 = vpop.xlane.xlu0 %3166
    %v3168 = vrot.slane %v3167, 4
    %v3169 = vmax.f32 %v3167, %v3168
    %v3170 = vrot.slane %v3169, 2
    %v3171 = vmax.f32 %v3169, %v3170
    %v3172 = vrot.slane %v3171, 1
    %v3173 = vmax.f32 %v3171, %v3172
    %s3174 = vtos %v3173
    %v3175 = vstv %s3174
    %v3176 = vsub.f32 %v3152, %v3175
    %v3177 = vsub.f32 %v3153, %v3175
    %v3178 = vsub.f32 %v3154, %v3175
    %v3179 = vsub.f32 %v3155, %v3175
    %v3180 = vsub.f32 %v3156, %v3175
    %v3181 = vmul.f32 %v3176, 1.442695
    %v3182 = vpow.pop %v3181
    %v3183 = vmul.f32 %v3177, 1.442695
    %v3184 = vpow.pop %v3183
    %v3185 = vmul.f32 %v3178, 1.442695
    %v3186 = vpow.pop %v3185
    %v3187 = vmul.f32 %v3179, 1.442695
    %v3188 = vpow.pop %v3187
    %v3189 = vmul.f32 %v3180, 1.442695
    %v3190 = vpow.pop %v3189
    %3192 = vset.pattern.permute.xlu0 0
    %3193 = vperm.xlu0 %3192, %v3182
    %v3194 = vpop.permute.xlu0 %3193
    %3197 = vset.pattern.permute.xlu0 0
    %3198 = vperm.xlu0 %3197, %v3184
    %v3199 = vpop.permute.xlu0 %3198
    %3202 = vset.pattern.permute.xlu0 0
    %3203 = vperm.xlu0 %3202, %v3186
    %v3204 = vpop.permute.xlu0 %3203
    %3207 = vset.pattern.permute.xlu0 0
    %3208 = vperm.xlu0 %3207, %v3188
    %v3209 = vpop.permute.xlu0 %3208
    %3212 = vset.pattern.permute.xlu0 0
    %3213 = vperm.xlu0 %3212, %v3190
    %v3214 = vpop.permute.xlu0 %3213
    %v3216 = vmul.f32 %v3194, %v2928
    %v3217 = vmul.f32 %v3199, %v2933
    %v3218 = vmul.f32 %v3204, %v2938
    %v3219 = vmul.f32 %v3209, %v2943
    %v3220 = vmul.f32 %v3214, %v2948
    %v3222 = vsel %vm634, %v3220, 0
    %3224 = vmatprep.subr.mxu0 0.0
    %3225 = vmatpush1.msra.mxu0 0.0
    %3226 = vmatprep.subr.mxu0 0.0
    %3227 = vmatpush1.msra.mxu0 0.0
    %3228 = vmatprep.subr.mxu0 0.0
    %3229 = vmatpush1.msra.mxu0 0.0
    %3230 = vmatprep.subr.mxu0 0.0
    %3231 = vmatpush1.msra.mxu0 0.0
    %3232 = vmatprep.subr.mxu0 0.0
    %3233 = vmatpush1.msra.mxu0 0.0
    %3234 = vmatprep.subr.mxu0 0.0
    %3235 = vmatpush1.msra.mxu0 0.0
    %3236 = vmatprep.subr.mxu0 0.0
    %3237 = vmatpush1.msra.mxu0 0.0
    %3238 = vmatprep.subr.mxu0 0.0
    %3239 = vmatpush1.msra.mxu0 0.0
    %3240 = vmatprep.subr.mxu0 0.0
    %3241 = vmatpush1.msra.mxu0 0.0
    %3242 = vmatprep.subr.mxu0 0.0
    %3243 = vmatpush1.msra.mxu0 0.0
    %3244 = vmatprep.subr.mxu0 0.0
    %3245 = vmatpush1.msra.mxu0 0.0
    %3246 = vmatprep.subr.mxu0 0.0
    %3247 = vmatpush1.msra.mxu0 %v3222
    %3248 = vmatprep.subr.mxu0 0.0
    %3249 = vmatpush1.msra.mxu0 %v3219
    %3250 = vmatprep.subr.mxu0 0.0
    %3251 = vmatpush1.msra.mxu0 %v3218
    %3252 = vmatprep.subr.mxu0 0.0
    %3253 = vmatpush1.msra.mxu0 %v3217
    %3254 = vmatprep.subr.mxu0 0.0
    %3255 = vmatpush1.msra.mxu0 %v3216
    %3256 = vmatprep.subr.mxu0 0.0
    %3257 = vmatpush2.msra.mxu0 0.0
    %3258 = vmatprep.subr.mxu0 0.0
    %3259 = vmatpush2.msra.mxu0 0.0
    %3260 = vmatprep.subr.mxu0 0.0
    %3261 = vmatpush2.msra.mxu0 0.0
    %3262 = vmatprep.subr.mxu0 0.0
    %3263 = vmatpush2.msra.mxu0 0.0
    %3264 = vmatprep.subr.mxu0 0.0
    %3265 = vmatpush2.msra.mxu0 0.0
    %3266 = vmatprep.subr.mxu0 0.0
    %3267 = vmatpush2.msra.mxu0 0.0
    %3268 = vmatprep.subr.mxu0 0.0
    %3269 = vmatpush2.msra.mxu0 0.0
    %3270 = vmatprep.subr.mxu0 0.0
    %3271 = vmatpush2.msra.mxu0 0.0
    %3272 = vmatprep.subr.mxu0 0.0
    %3273 = vmatpush2.msra.mxu0 0.0
    %3274 = vmatprep.subr.mxu0 0.0
    %3275 = vmatpush2.msra.mxu0 0.0
    %3276 = vmatprep.subr.mxu0 0.0
    %3277 = vmatpush2.msra.mxu0 0.0
    %3278 = vmatprep.subr.mxu0 0.0
    %3279 = vmatpush2.msra.mxu0 0.0
    %3280 = vmatprep.subr.mxu0 0.0
    %3281 = vmatpush2.msra.mxu0 0.0
    %3282 = vmatprep.subr.mxu0 0.0
    %3283 = vmatpush2.msra.mxu0 0.0
    %3284 = vmatprep.subr.mxu0 0.0
    %3285 = vmatpush2.msra.mxu0 0.0
    %3286 = vmatprep.subr.mxu0 0.0
    %3287 = vmatpush2.msra.mxu0 0.0
    %3288 = vmatprep.mubr.f32.mxu0 0.0
    %3289 = vmatmul.mubr.f32.gmra.mxu0 %v1815
    %v3290 = vpop.f32.mrf.mxu0
    %v3291 = vadd.f32 0.0, %v3290
    %v3292 = vpop.f32.mrf.mxu0
    %3293 = vmatprep.mubr.f32.mxu0 0.0
    %3294 = vmatmul.mubr.f32.gmra.mxu0 %v1818
    %v3295 = vpop.f32.mrf.mxu0
    %v3296 = vadd.f32 0.0, %v3295
    %v3297 = vpop.f32.mrf.mxu0
    %3298 = vdwg.mxu0
    %v3299 = vsel %vm634, %v3190, 0
    %3301 = vmatprep.subr.mxu0 0.0
    %3302 = vmatpush1.msra.mxu0 0.0
    %3303 = vmatprep.subr.mxu0 0.0
    %3304 = vmatpush1.msra.mxu0 0.0
    %3305 = vmatprep.subr.mxu0 0.0
    %3306 = vmatpush1.msra.mxu0 0.0
    %3307 = vmatprep.subr.mxu0 0.0
    %3308 = vmatpush1.msra.mxu0 0.0
    %3309 = vmatprep.subr.mxu0 0.0
    %3310 = vmatpush1.msra.mxu0 0.0
    %3311 = vmatprep.subr.mxu0 0.0
    %3312 = vmatpush1.msra.mxu0 0.0
    %3313 = vmatprep.subr.mxu0 0.0
    %3314 = vmatpush1.msra.mxu0 0.0
    %3315 = vmatprep.subr.mxu0 0.0
    %3316 = vmatpush1.msra.mxu0 0.0
    %3317 = vmatprep.subr.mxu0 0.0
    %3318 = vmatpush1.msra.mxu0 0.0
    %3319 = vmatprep.subr.mxu0 0.0
    %3320 = vmatpush1.msra.mxu0 0.0
    %3321 = vmatprep.subr.mxu0 0.0
    %3322 = vmatpush1.msra.mxu0 0.0
    %3323 = vmatprep.subr.mxu0 0.0
    %3324 = vmatpush1.msra.mxu0 %v3299
    %3325 = vmatprep.subr.mxu0 0.0
    %3326 = vmatpush1.msra.mxu0 %v3188
    %3327 = vmatprep.subr.mxu0 0.0
    %3328 = vmatpush1.msra.mxu0 %v3186
    %3329 = vmatprep.subr.mxu0 0.0
    %3330 = vmatpush1.msra.mxu0 %v3184
    %3331 = vmatprep.subr.mxu0 0.0
    %3332 = vmatpush1.msra.mxu0 %v3182
    %3333 = vmatprep.subr.mxu0 0.0
    %3334 = vmatpush2.msra.mxu0 0.0
    %3335 = vmatprep.subr.mxu0 0.0
    %3336 = vmatpush2.msra.mxu0 0.0
    %3337 = vmatprep.subr.mxu0 0.0
    %3338 = vmatpush2.msra.mxu0 0.0
    %3339 = vmatprep.subr.mxu0 0.0
    %3340 = vmatpush2.msra.mxu0 0.0
    %3341 = vmatprep.subr.mxu0 0.0
    %3342 = vmatpush2.msra.mxu0 0.0
    %3343 = vmatprep.subr.mxu0 0.0
    %3344 = vmatpush2.msra.mxu0 0.0
    %3345 = vmatprep.subr.mxu0 0.0
    %3346 = vmatpush2.msra.mxu0 0.0
    %3347 = vmatprep.subr.mxu0 0.0
    %3348 = vmatpush2.msra.mxu0 0.0
    %3349 = vmatprep.subr.mxu0 0.0
    %3350 = vmatpush2.msra.mxu0 0.0
    %3351 = vmatprep.subr.mxu0 0.0
    %3352 = vmatpush2.msra.mxu0 0.0
    %3353 = vmatprep.subr.mxu0 0.0
    %3354 = vmatpush2.msra.mxu0 0.0
    %3355 = vmatprep.subr.mxu0 0.0
    %3356 = vmatpush2.msra.mxu0 0.0
    %3357 = vmatprep.subr.mxu0 0.0
    %3358 = vmatpush2.msra.mxu0 0.0
    %3359 = vmatprep.subr.mxu0 0.0
    %3360 = vmatpush2.msra.mxu0 0.0
    %3361 = vmatprep.subr.mxu0 0.0
    %3362 = vmatpush2.msra.mxu0 0.0
    %3363 = vmatprep.subr.mxu0 0.0
    %3364 = vmatpush2.msra.mxu0 0.0
    %3365 = vmatprep.mubr.f32.mxu0 0.0
    %3366 = vmatmul.mubr.f32.gmra.mxu0 %v1815
    %v3367 = vpop.f32.mrf.mxu0
    %v3368 = vadd.f32 0.0, %v3367
    %v3369 = vpop.f32.mrf.mxu0
    %3370 = vmatprep.mubr.f32.mxu0 0.0
    %3371 = vmatmul.mubr.f32.gmra.mxu0 %v1818
    %v3372 = vpop.f32.mrf.mxu0
    %v3373 = vadd.f32 0.0, %v3372
    %v3374 = vpop.f32.mrf.mxu0
    %3375 = vdwg.mxu0
    %v3376 = vmax.f32 %v3368, 1e-30
    %v3377 = vmax.f32 %v3373, 1e-30
    %3379 = vset.pattern.permute.xlu0 0
    %3380 = vperm.xlu0 %3379, %v3376
    %v3381 = vpop.permute.xlu0 %3380
    %3384 = vset.pattern.permute.xlu0 0
    %3385 = vperm.xlu0 %3384, %v3377
    %v3386 = vpop.permute.xlu0 %3385
    %v3388 = vrcp.pop %v3381
    %v3389 = vmul.f32 %v3291, %v3388
    %v3390 = vrcp.pop %v3386
    %v3391 = vmul.f32 %v3296, %v3390
    %v3392 = vadd.f32 %v3389, %v1995
    %v3393 = vadd.f32 %v3391, %v1995
    %v3394 = vmax.f32 %v3392, 0.0
    %v3395 = vmax.f32 %v3393, 0.0
    %v3397 = vsel %vm542, %v3394, 0
    %v3400 = vsel %vm542, %v3395, 0
    %3402 = vmatprep.subr.mxu0 0.0
    %3403 = vmatpush1.msra.mxu0 0.0
    %3404 = vmatprep.subr.mxu0 0.0
    %3405 = vmatpush1.msra.mxu0 0.0
    %3406 = vmatprep.subr.mxu0 0.0
    %3407 = vmatpush1.msra.mxu0 0.0
    %3408 = vmatprep.subr.mxu0 0.0
    %3409 = vmatpush1.msra.mxu0 0.0
    %3410 = vmatprep.subr.mxu0 0.0
    %3411 = vmatpush1.msra.mxu0 0.0
    %3412 = vmatprep.subr.mxu0 0.0
    %3413 = vmatpush1.msra.mxu0 0.0
    %3414 = vmatprep.subr.mxu0 0.0
    %3415 = vmatpush1.msra.mxu0 0.0
    %3416 = vmatprep.subr.mxu0 0.0
    %3417 = vmatpush1.msra.mxu0 0.0
    %3418 = vmatprep.subr.mxu0 0.0
    %3419 = vmatpush1.msra.mxu0 0.0
    %3420 = vmatprep.subr.mxu0 0.0
    %3421 = vmatpush1.msra.mxu0 0.0
    %3422 = vmatprep.subr.mxu0 0.0
    %3423 = vmatpush1.msra.mxu0 0.0
    %3424 = vmatprep.subr.mxu0 0.0
    %3425 = vmatpush1.msra.mxu0 0.0
    %3426 = vmatprep.subr.mxu0 0.0
    %3427 = vmatpush1.msra.mxu0 0.0
    %3428 = vmatprep.subr.mxu0 0.0
    %3429 = vmatpush1.msra.mxu0 0.0
    %3430 = vmatprep.subr.mxu0 0.0
    %3431 = vmatpush1.msra.mxu0 %v529
    %3432 = vmatprep.subr.mxu0 0.0
    %3433 = vmatpush1.msra.mxu0 %v528
    %3434 = vmatprep.subr.mxu0 0.0
    %3435 = vmatpush2.msra.mxu0 0.0
    %3436 = vmatprep.subr.mxu0 0.0
    %3437 = vmatpush2.msra.mxu0 0.0
    %3438 = vmatprep.subr.mxu0 0.0
    %3439 = vmatpush2.msra.mxu0 0.0
    %3440 = vmatprep.subr.mxu0 0.0
    %3441 = vmatpush2.msra.mxu0 0.0
    %3442 = vmatprep.subr.mxu0 0.0
    %3443 = vmatpush2.msra.mxu0 0.0
    %3444 = vmatprep.subr.mxu0 0.0
    %3445 = vmatpush2.msra.mxu0 0.0
    %3446 = vmatprep.subr.mxu0 0.0
    %3447 = vmatpush2.msra.mxu0 0.0
    %3448 = vmatprep.subr.mxu0 0.0
    %3449 = vmatpush2.msra.mxu0 0.0
    %3450 = vmatprep.subr.mxu0 0.0
    %3451 = vmatpush2.msra.mxu0 0.0
    %3452 = vmatprep.subr.mxu0 0.0
    %3453 = vmatpush2.msra.mxu0 0.0
    %3454 = vmatprep.subr.mxu0 0.0
    %3455 = vmatpush2.msra.mxu0 0.0
    %3456 = vmatprep.subr.mxu0 0.0
    %3457 = vmatpush2.msra.mxu0 0.0
    %3458 = vmatprep.subr.mxu0 0.0
    %3459 = vmatpush2.msra.mxu0 0.0
    %3460 = vmatprep.subr.mxu0 0.0
    %3461 = vmatpush2.msra.mxu0 0.0
    %3462 = vmatprep.subr.mxu0 0.0
    %3463 = vmatpush2.msra.mxu0 0.0
    %3464 = vmatprep.subr.mxu0 0.0
    %3465 = vmatpush2.msra.mxu0 0.0
    %3466 = vmatprep.mubr.f32.mxu0 0.0
    %3467 = vmatmul.mubr.f32.gmra.mxu0 %v3397
    %v3468 = vpop.f32.mrf.mxu0
    %v3469 = vadd.f32 %v540, %v3468
    %v3470 = vpop.f32.mrf.mxu0
    %3471 = vmatprep.mubr.f32.mxu0 0.0
    %3472 = vmatmul.mubr.f32.gmra.mxu0 %v3400
    %v3473 = vpop.f32.mrf.mxu0
    %v3474 = vadd.f32 %v540, %v3473
    %v3475 = vpop.f32.mrf.mxu0
    %3476 = vdwg.mxu0
    %v3477 = vsel %vm634, %v3395, 0
    %3479 = vmatprep.subr.mxu0 0.0
    %3480 = vmatpush1.msra.mxu0 0.0
    %3481 = vmatprep.subr.mxu0 0.0
    %3482 = vmatpush1.msra.mxu0 0.0
    %3483 = vmatprep.subr.mxu0 0.0
    %3484 = vmatpush1.msra.mxu0 0.0
    %3485 = vmatprep.subr.mxu0 0.0
    %3486 = vmatpush1.msra.mxu0 0.0
    %3487 = vmatprep.subr.mxu0 0.0
    %3488 = vmatpush1.msra.mxu0 0.0
    %3489 = vmatprep.subr.mxu0 0.0
    %3490 = vmatpush1.msra.mxu0 0.0
    %3491 = vmatprep.subr.mxu0 0.0
    %3492 = vmatpush1.msra.mxu0 0.0
    %3493 = vmatprep.subr.mxu0 0.0
    %3494 = vmatpush1.msra.mxu0 0.0
    %3495 = vmatprep.subr.mxu0 0.0
    %3496 = vmatpush1.msra.mxu0 0.0
    %3497 = vmatprep.subr.mxu0 0.0
    %3498 = vmatpush1.msra.mxu0 0.0
    %3499 = vmatprep.subr.mxu0 0.0
    %3500 = vmatpush1.msra.mxu0 0.0
    %3501 = vmatprep.subr.mxu0 0.0
    %3502 = vmatpush1.msra.mxu0 0.0
    %3503 = vmatprep.subr.mxu0 0.0
    %3504 = vmatpush1.msra.mxu0 0.0
    %3505 = vmatprep.subr.mxu0 0.0
    %3506 = vmatpush1.msra.mxu0 0.0
    %3507 = vmatprep.subr.mxu0 0.0
    %3508 = vmatpush1.msra.mxu0 %v3477
    %3509 = vmatprep.subr.mxu0 0.0
    %3510 = vmatpush1.msra.mxu0 %v3394
    %3511 = vmatprep.subr.mxu0 0.0
    %3512 = vmatpush2.msra.mxu0 0.0
    %3513 = vmatprep.subr.mxu0 0.0
    %3514 = vmatpush2.msra.mxu0 0.0
    %3515 = vmatprep.subr.mxu0 0.0
    %3516 = vmatpush2.msra.mxu0 0.0
    %3517 = vmatprep.subr.mxu0 0.0
    %3518 = vmatpush2.msra.mxu0 0.0
    %3519 = vmatprep.subr.mxu0 0.0
    %3520 = vmatpush2.msra.mxu0 0.0
    %3521 = vmatprep.subr.mxu0 0.0
    %3522 = vmatpush2.msra.mxu0 0.0
    %3523 = vmatprep.subr.mxu0 0.0
    %3524 = vmatpush2.msra.mxu0 0.0
    %3525 = vmatprep.subr.mxu0 0.0
    %3526 = vmatpush2.msra.mxu0 0.0
    %3527 = vmatprep.subr.mxu0 0.0
    %3528 = vmatpush2.msra.mxu0 0.0
    %3529 = vmatprep.subr.mxu0 0.0
    %3530 = vmatpush2.msra.mxu0 0.0
    %3531 = vmatprep.subr.mxu0 0.0
    %3532 = vmatpush2.msra.mxu0 0.0
    %3533 = vmatprep.subr.mxu0 0.0
    %3534 = vmatpush2.msra.mxu0 0.0
    %3535 = vmatprep.subr.mxu0 0.0
    %3536 = vmatpush2.msra.mxu0 0.0
    %3537 = vmatprep.subr.mxu0 0.0
    %3538 = vmatpush2.msra.mxu0 0.0
    %3539 = vmatprep.subr.mxu0 0.0
    %3540 = vmatpush2.msra.mxu0 0.0
    %3541 = vmatprep.subr.mxu0 0.0
    %3542 = vmatpush2.msra.mxu0 0.0
    %3543 = vmatprep.mubr.f32.mxu0 0.0
    %3544 = vmatmul.mubr.f32.gmra.mxu0 %v626
    %v3545 = vpop.f32.mrf.mxu0
    %v3546 = vadd.f32 0.0, %v3545
    %v3547 = vpop.f32.mrf.mxu0
    %3548 = vmatprep.mubr.f32.mxu0 0.0
    %3549 = vmatmul.mubr.f32.gmra.mxu0 %v629
    %v3550 = vpop.f32.mrf.mxu0
    %v3551 = vadd.f32 0.0, %v3550
    %v3552 = vpop.f32.mrf.mxu0
    %3553 = vmatprep.mubr.f32.mxu0 0.0
    %3554 = vmatmul.mubr.f32.gmra.mxu0 %v632
    %v3555 = vpop.f32.mrf.mxu0
    %v3556 = vadd.f32 0.0, %v3555
    %v3557 = vpop.f32.mrf.mxu0
    %3558 = vdwg.mxu0
    %3560 = vset.pattern.permute.xlu0 0
    %3561 = vperm.xlu0 %3560, %v3546
    %v3562 = vpop.permute.xlu0 %3561
    %3565 = vset.pattern.permute.xlu0 0
    %3566 = vperm.xlu0 %3565, %v3551
    %v3567 = vpop.permute.xlu0 %3566
    %3570 = vset.pattern.permute.xlu0 0
    %3571 = vperm.xlu0 %3570, %v3556
    %v3572 = vpop.permute.xlu0 %3571
    %v3574 = vmul.f32 %v3562, %v495
    %v3575 = vmul.f32 %v3567, %v501
    %v3576 = vmul.f32 %v3572, %v507
    %3577 = vset.pattern.permute.xlu0 1
    %3578 = vperm.xlu0 %3577, %v3546
    %v3579 = vpop.permute.xlu0 %3578
    %3581 = vset.pattern.permute.xlu0 1
    %3582 = vperm.xlu0 %3581, %v3551
    %v3583 = vpop.permute.xlu0 %3582
    %3585 = vset.pattern.permute.xlu0 1
    %3586 = vperm.xlu0 %3585, %v3556
    %v3587 = vpop.permute.xlu0 %3586
    %v3589 = vmul.f32 %v3579, %v495
    %v3590 = vmul.f32 %v3583, %v501
    %v3591 = vmul.f32 %v3587, %v507
    %3595 = vrot.lane.b32.xlu0 %v3589, 112
    %v3596 = vpop.permute.xlu0 %3595
    %3597 = vrot.lane.b32.xlu0 %v3590, 112
    %v3598 = vpop.permute.xlu0 %3597
    %3599 = vrot.lane.b32.xlu0 %v3591, 112
    %v3600 = vpop.permute.xlu0 %3599
    %v3604 = vadd.f32 %v3574, %v3596
    %v3605 = vadd.f32 %v3575, %v3598
    %v3606 = vadd.f32 %v3576, %v3600
    %3607 = vset.pattern.permute.xlu0 2
    %3608 = vperm.xlu0 %3607, %v3546
    %v3609 = vpop.permute.xlu0 %3608
    %3611 = vset.pattern.permute.xlu0 2
    %3612 = vperm.xlu0 %3611, %v3551
    %v3613 = vpop.permute.xlu0 %3612
    %3615 = vset.pattern.permute.xlu0 2
    %3616 = vperm.xlu0 %3615, %v3556
    %v3617 = vpop.permute.xlu0 %3616
    %v3619 = vmul.f32 %v3609, %v495
    %v3620 = vmul.f32 %v3613, %v501
    %v3621 = vmul.f32 %v3617, %v507
    %3625 = vrot.lane.b32.xlu0 %v3619, 96
    %v3626 = vpop.permute.xlu0 %3625
    %3627 = vrot.lane.b32.xlu0 %v3620, 96
    %v3628 = vpop.permute.xlu0 %3627
    %3629 = vrot.lane.b32.xlu0 %v3621, 96
    %v3630 = vpop.permute.xlu0 %3629
    %v3634 = vadd.f32 %v3604, %v3626
    %v3635 = vadd.f32 %v3605, %v3628
    %v3636 = vadd.f32 %v3606, %v3630
    %3637 = vset.pattern.permute.xlu0 3
    %3638 = vperm.xlu0 %3637, %v3546
    %v3639 = vpop.permute.xlu0 %3638
    %3641 = vset.pattern.permute.xlu0 3
    %3642 = vperm.xlu0 %3641, %v3551
    %v3643 = vpop.permute.xlu0 %3642
    %3645 = vset.pattern.permute.xlu0 3
    %3646 = vperm.xlu0 %3645, %v3556
    %v3647 = vpop.permute.xlu0 %3646
    %v3649 = vmul.f32 %v3639, %v495
    %v3650 = vmul.f32 %v3643, %v501
    %v3651 = vmul.f32 %v3647, %v507
    %3655 = vrot.lane.b32.xlu0 %v3649, 80
    %v3656 = vpop.permute.xlu0 %3655
    %3657 = vrot.lane.b32.xlu0 %v3650, 80
    %v3658 = vpop.permute.xlu0 %3657
    %3659 = vrot.lane.b32.xlu0 %v3651, 80
    %v3660 = vpop.permute.xlu0 %3659
    %v3664 = vadd.f32 %v3634, %v3656
    %v3665 = vadd.f32 %v3635, %v3658
    %v3666 = vadd.f32 %v3636, %v3660
    %3667 = vset.pattern.permute.xlu0 4
    %3668 = vperm.xlu0 %3667, %v3546
    %v3669 = vpop.permute.xlu0 %3668
    %3671 = vset.pattern.permute.xlu0 4
    %3672 = vperm.xlu0 %3671, %v3551
    %v3673 = vpop.permute.xlu0 %3672
    %3675 = vset.pattern.permute.xlu0 4
    %3676 = vperm.xlu0 %3675, %v3556
    %v3677 = vpop.permute.xlu0 %3676
    %v3679 = vmul.f32 %v3669, %v495
    %v3680 = vmul.f32 %v3673, %v501
    %v3681 = vmul.f32 %v3677, %v507
    %3685 = vrot.lane.b32.xlu0 %v3679, 64
    %v3686 = vpop.permute.xlu0 %3685
    %3687 = vrot.lane.b32.xlu0 %v3680, 64
    %v3688 = vpop.permute.xlu0 %3687
    %3689 = vrot.lane.b32.xlu0 %v3681, 64
    %v3690 = vpop.permute.xlu0 %3689
    %v3694 = vadd.f32 %v3664, %v3686
    %v3695 = vadd.f32 %v3665, %v3688
    %v3696 = vadd.f32 %v3666, %v3690
    %3697 = vset.pattern.permute.xlu0 5
    %3698 = vperm.xlu0 %3697, %v3546
    %v3699 = vpop.permute.xlu0 %3698
    %3701 = vset.pattern.permute.xlu0 5
    %3702 = vperm.xlu0 %3701, %v3551
    %v3703 = vpop.permute.xlu0 %3702
    %3705 = vset.pattern.permute.xlu0 5
    %3706 = vperm.xlu0 %3705, %v3556
    %v3707 = vpop.permute.xlu0 %3706
    %v3709 = vmul.f32 %v3699, %v495
    %v3710 = vmul.f32 %v3703, %v501
    %v3711 = vmul.f32 %v3707, %v507
    %3715 = vrot.lane.b32.xlu0 %v3709, 48
    %v3716 = vpop.permute.xlu0 %3715
    %3717 = vrot.lane.b32.xlu0 %v3710, 48
    %v3718 = vpop.permute.xlu0 %3717
    %3719 = vrot.lane.b32.xlu0 %v3711, 48
    %v3720 = vpop.permute.xlu0 %3719
    %v3724 = vadd.f32 %v3694, %v3716
    %v3725 = vadd.f32 %v3695, %v3718
    %v3726 = vadd.f32 %v3696, %v3720
    %3727 = vset.pattern.permute.xlu0 6
    %3728 = vperm.xlu0 %3727, %v3546
    %v3729 = vpop.permute.xlu0 %3728
    %3731 = vset.pattern.permute.xlu0 6
    %3732 = vperm.xlu0 %3731, %v3551
    %v3733 = vpop.permute.xlu0 %3732
    %3735 = vset.pattern.permute.xlu0 6
    %3736 = vperm.xlu0 %3735, %v3556
    %v3737 = vpop.permute.xlu0 %3736
    %v3739 = vmul.f32 %v3729, %v495
    %v3740 = vmul.f32 %v3733, %v501
    %v3741 = vmul.f32 %v3737, %v507
    %3745 = vrot.lane.b32.xlu0 %v3739, 32
    %v3746 = vpop.permute.xlu0 %3745
    %3747 = vrot.lane.b32.xlu0 %v3740, 32
    %v3748 = vpop.permute.xlu0 %3747
    %3749 = vrot.lane.b32.xlu0 %v3741, 32
    %v3750 = vpop.permute.xlu0 %3749
    %v3754 = vadd.f32 %v3724, %v3746
    %v3755 = vadd.f32 %v3725, %v3748
    %v3756 = vadd.f32 %v3726, %v3750
    %3757 = vset.pattern.permute.xlu0 7
    %3758 = vperm.xlu0 %3757, %v3546
    %v3759 = vpop.permute.xlu0 %3758
    %3761 = vset.pattern.permute.xlu0 7
    %3762 = vperm.xlu0 %3761, %v3551
    %v3763 = vpop.permute.xlu0 %3762
    %3765 = vset.pattern.permute.xlu0 7
    %3766 = vperm.xlu0 %3765, %v3556
    %v3767 = vpop.permute.xlu0 %3766
    %v3769 = vmul.f32 %v3759, %v495
    %v3770 = vmul.f32 %v3763, %v501
    %v3771 = vmul.f32 %v3767, %v507
    %3775 = vrot.lane.b32.xlu0 %v3769, 16
    %v3776 = vpop.permute.xlu0 %3775
    %3777 = vrot.lane.b32.xlu0 %v3770, 16
    %v3778 = vpop.permute.xlu0 %3777
    %3779 = vrot.lane.b32.xlu0 %v3771, 16
    %v3780 = vpop.permute.xlu0 %3779
    %v3784 = vadd.f32 %v3754, %v3776
    %v3785 = vadd.f32 %v3755, %v3778
    %v3786 = vadd.f32 %v3756, %v3780
    %3787 = vset.pattern.permute.xlu0 8
    %3788 = vperm.xlu0 %3787, %v3546
    %v3789 = vpop.permute.xlu0 %3788
    %3791 = vset.pattern.permute.xlu0 8
    %3792 = vperm.xlu0 %3791, %v3551
    %v3793 = vpop.permute.xlu0 %3792
    %3795 = vset.pattern.permute.xlu0 8
    %3796 = vperm.xlu0 %3795, %v3556
    %v3797 = vpop.permute.xlu0 %3796
    %v3799 = vmul.f32 %v3789, %v497
    %v3800 = vmul.f32 %v3793, %v503
    %v3801 = vmul.f32 %v3797, %v509
    %v3802 = vadd.f32 %v3784, %v3799
    %v3803 = vadd.f32 %v3785, %v3800
    %v3804 = vadd.f32 %v3786, %v3801
    %3805 = vset.pattern.permute.xlu0 9
    %3806 = vperm.xlu0 %3805, %v3546
    %v3807 = vpop.permute.xlu0 %3806
    %3809 = vset.pattern.permute.xlu0 9
    %3810 = vperm.xlu0 %3809, %v3551
    %v3811 = vpop.permute.xlu0 %3810
    %3813 = vset.pattern.permute.xlu0 9
    %3814 = vperm.xlu0 %3813, %v3556
    %v3815 = vpop.permute.xlu0 %3814
    %v3817 = vmul.f32 %v3807, %v497
    %v3818 = vmul.f32 %v3811, %v503
    %v3819 = vmul.f32 %v3815, %v509
    %3823 = vrot.lane.b32.xlu0 %v3817, 112
    %v3824 = vpop.permute.xlu0 %3823
    %3825 = vrot.lane.b32.xlu0 %v3818, 112
    %v3826 = vpop.permute.xlu0 %3825
    %3827 = vrot.lane.b32.xlu0 %v3819, 112
    %v3828 = vpop.permute.xlu0 %3827
    %v3832 = vadd.f32 %v3802, %v3824
    %v3833 = vadd.f32 %v3803, %v3826
    %v3834 = vadd.f32 %v3804, %v3828
    %3835 = vset.pattern.permute.xlu0 10
    %3836 = vperm.xlu0 %3835, %v3546
    %v3837 = vpop.permute.xlu0 %3836
    %3839 = vset.pattern.permute.xlu0 10
    %3840 = vperm.xlu0 %3839, %v3551
    %v3841 = vpop.permute.xlu0 %3840
    %3843 = vset.pattern.permute.xlu0 10
    %3844 = vperm.xlu0 %3843, %v3556
    %v3845 = vpop.permute.xlu0 %3844
    %v3847 = vmul.f32 %v3837, %v497
    %v3848 = vmul.f32 %v3841, %v503
    %v3849 = vmul.f32 %v3845, %v509
    %3853 = vrot.lane.b32.xlu0 %v3847, 96
    %v3854 = vpop.permute.xlu0 %3853
    %3855 = vrot.lane.b32.xlu0 %v3848, 96
    %v3856 = vpop.permute.xlu0 %3855
    %3857 = vrot.lane.b32.xlu0 %v3849, 96
    %v3858 = vpop.permute.xlu0 %3857
    %v3862 = vadd.f32 %v3832, %v3854
    %v3863 = vadd.f32 %v3833, %v3856
    %v3864 = vadd.f32 %v3834, %v3858
    %3865 = vset.pattern.permute.xlu0 11
    %3866 = vperm.xlu0 %3865, %v3546
    %v3867 = vpop.permute.xlu0 %3866
    %3869 = vset.pattern.permute.xlu0 11
    %3870 = vperm.xlu0 %3869, %v3551
    %v3871 = vpop.permute.xlu0 %3870
    %3873 = vset.pattern.permute.xlu0 11
    %3874 = vperm.xlu0 %3873, %v3556
    %v3875 = vpop.permute.xlu0 %3874
    %v3877 = vmul.f32 %v3867, %v497
    %v3878 = vmul.f32 %v3871, %v503
    %v3879 = vmul.f32 %v3875, %v509
    %3883 = vrot.lane.b32.xlu0 %v3877, 80
    %v3884 = vpop.permute.xlu0 %3883
    %3885 = vrot.lane.b32.xlu0 %v3878, 80
    %v3886 = vpop.permute.xlu0 %3885
    %3887 = vrot.lane.b32.xlu0 %v3879, 80
    %v3888 = vpop.permute.xlu0 %3887
    %v3892 = vadd.f32 %v3862, %v3884
    %v3893 = vadd.f32 %v3863, %v3886
    %v3894 = vadd.f32 %v3864, %v3888
    %3895 = vset.pattern.permute.xlu0 12
    %3896 = vperm.xlu0 %3895, %v3546
    %v3897 = vpop.permute.xlu0 %3896
    %3899 = vset.pattern.permute.xlu0 12
    %3900 = vperm.xlu0 %3899, %v3551
    %v3901 = vpop.permute.xlu0 %3900
    %3903 = vset.pattern.permute.xlu0 12
    %3904 = vperm.xlu0 %3903, %v3556
    %v3905 = vpop.permute.xlu0 %3904
    %v3907 = vmul.f32 %v3897, %v497
    %v3908 = vmul.f32 %v3901, %v503
    %v3909 = vmul.f32 %v3905, %v509
    %3913 = vrot.lane.b32.xlu0 %v3907, 64
    %v3914 = vpop.permute.xlu0 %3913
    %3915 = vrot.lane.b32.xlu0 %v3908, 64
    %v3916 = vpop.permute.xlu0 %3915
    %3917 = vrot.lane.b32.xlu0 %v3909, 64
    %v3918 = vpop.permute.xlu0 %3917
    %v3922 = vadd.f32 %v3892, %v3914
    %v3923 = vadd.f32 %v3893, %v3916
    %v3924 = vadd.f32 %v3894, %v3918
    %3925 = vset.pattern.permute.xlu0 13
    %3926 = vperm.xlu0 %3925, %v3546
    %v3927 = vpop.permute.xlu0 %3926
    %3929 = vset.pattern.permute.xlu0 13
    %3930 = vperm.xlu0 %3929, %v3551
    %v3931 = vpop.permute.xlu0 %3930
    %3933 = vset.pattern.permute.xlu0 13
    %3934 = vperm.xlu0 %3933, %v3556
    %v3935 = vpop.permute.xlu0 %3934
    %v3937 = vmul.f32 %v3927, %v497
    %v3938 = vmul.f32 %v3931, %v503
    %v3939 = vmul.f32 %v3935, %v509
    %3943 = vrot.lane.b32.xlu0 %v3937, 48
    %v3944 = vpop.permute.xlu0 %3943
    %3945 = vrot.lane.b32.xlu0 %v3938, 48
    %v3946 = vpop.permute.xlu0 %3945
    %3947 = vrot.lane.b32.xlu0 %v3939, 48
    %v3948 = vpop.permute.xlu0 %3947
    %v3952 = vadd.f32 %v3922, %v3944
    %v3953 = vadd.f32 %v3923, %v3946
    %v3954 = vadd.f32 %v3924, %v3948
    %3955 = vset.pattern.permute.xlu0 14
    %3956 = vperm.xlu0 %3955, %v3546
    %v3957 = vpop.permute.xlu0 %3956
    %3959 = vset.pattern.permute.xlu0 14
    %3960 = vperm.xlu0 %3959, %v3551
    %v3961 = vpop.permute.xlu0 %3960
    %3963 = vset.pattern.permute.xlu0 14
    %3964 = vperm.xlu0 %3963, %v3556
    %v3965 = vpop.permute.xlu0 %3964
    %v3967 = vmul.f32 %v3957, %v497
    %v3968 = vmul.f32 %v3961, %v503
    %v3969 = vmul.f32 %v3965, %v509
    %3973 = vrot.lane.b32.xlu0 %v3967, 32
    %v3974 = vpop.permute.xlu0 %3973
    %3975 = vrot.lane.b32.xlu0 %v3968, 32
    %v3976 = vpop.permute.xlu0 %3975
    %3977 = vrot.lane.b32.xlu0 %v3969, 32
    %v3978 = vpop.permute.xlu0 %3977
    %v3982 = vadd.f32 %v3952, %v3974
    %v3983 = vadd.f32 %v3953, %v3976
    %v3984 = vadd.f32 %v3954, %v3978
    %3985 = vset.pattern.permute.xlu0 15
    %3986 = vperm.xlu0 %3985, %v3546
    %v3987 = vpop.permute.xlu0 %3986
    %3989 = vset.pattern.permute.xlu0 15
    %3990 = vperm.xlu0 %3989, %v3551
    %v3991 = vpop.permute.xlu0 %3990
    %3993 = vset.pattern.permute.xlu0 15
    %3994 = vperm.xlu0 %3993, %v3556
    %v3995 = vpop.permute.xlu0 %3994
    %v3997 = vmul.f32 %v3987, %v497
    %v3998 = vmul.f32 %v3991, %v503
    %v3999 = vmul.f32 %v3995, %v509
    %4003 = vrot.lane.b32.xlu0 %v3997, 16
    %v4004 = vpop.permute.xlu0 %4003
    %4005 = vrot.lane.b32.xlu0 %v3998, 16
    %v4006 = vpop.permute.xlu0 %4005
    %4007 = vrot.lane.b32.xlu0 %v3999, 16
    %v4008 = vpop.permute.xlu0 %4007
    %v4012 = vadd.f32 %v3982, %v4004
    %v4013 = vadd.f32 %v3983, %v4006
    %v4014 = vadd.f32 %v3984, %v4008
    %4015 = vmatprep.subr.mxu0 0.0
    %4016 = vmatpush1.msra.mxu0 0.0
    %4017 = vmatprep.subr.mxu0 0.0
    %4018 = vmatpush1.msra.mxu0 0.0
    %4019 = vmatprep.subr.mxu0 0.0
    %4020 = vmatpush1.msra.mxu0 0.0
    %4021 = vmatprep.subr.mxu0 0.0
    %4022 = vmatpush1.msra.mxu0 0.0
    %4023 = vmatprep.subr.mxu0 0.0
    %4024 = vmatpush1.msra.mxu0 0.0
    %4025 = vmatprep.subr.mxu0 0.0
    %4026 = vmatpush1.msra.mxu0 0.0
    %4027 = vmatprep.subr.mxu0 0.0
    %4028 = vmatpush1.msra.mxu0 0.0
    %4029 = vmatprep.subr.mxu0 0.0
    %4030 = vmatpush1.msra.mxu0 0.0
    %4031 = vmatprep.subr.mxu0 0.0
    %4032 = vmatpush1.msra.mxu0 0.0
    %4033 = vmatprep.subr.mxu0 0.0
    %4034 = vmatpush1.msra.mxu0 0.0
    %4035 = vmatprep.subr.mxu0 0.0
    %4036 = vmatpush1.msra.mxu0 0.0
    %4037 = vmatprep.subr.mxu0 0.0
    %4038 = vmatpush1.msra.mxu0 0.0
    %4039 = vmatprep.subr.mxu0 0.0
    %4040 = vmatpush1.msra.mxu0 0.0
    %4041 = vmatprep.subr.mxu0 0.0
    %4042 = vmatpush1.msra.mxu0 %v4014
    %4043 = vmatprep.subr.mxu0 0.0
    %4044 = vmatpush1.msra.mxu0 %v4013
    %4045 = vmatprep.subr.mxu0 0.0
    %4046 = vmatpush1.msra.mxu0 %v4012
    %4047 = vmatprep.subr.mxu0 0.0
    %4048 = vmatpush2.msra.mxu0 0.0
    %4049 = vmatprep.subr.mxu0 0.0
    %4050 = vmatpush2.msra.mxu0 0.0
    %4051 = vmatprep.subr.mxu0 0.0
    %4052 = vmatpush2.msra.mxu0 0.0
    %4053 = vmatprep.subr.mxu0 0.0
    %4054 = vmatpush2.msra.mxu0 0.0
    %4055 = vmatprep.subr.mxu0 0.0
    %4056 = vmatpush2.msra.mxu0 0.0
    %4057 = vmatprep.subr.mxu0 0.0
    %4058 = vmatpush2.msra.mxu0 0.0
    %4059 = vmatprep.subr.mxu0 0.0
    %4060 = vmatpush2.msra.mxu0 0.0
    %4061 = vmatprep.subr.mxu0 0.0
    %4062 = vmatpush2.msra.mxu0 0.0
    %4063 = vmatprep.subr.mxu0 0.0
    %4064 = vmatpush2.msra.mxu0 0.0
    %4065 = vmatprep.subr.mxu0 0.0
    %4066 = vmatpush2.msra.mxu0 0.0
    %4067 = vmatprep.subr.mxu0 0.0
    %4068 = vmatpush2.msra.mxu0 0.0
    %4069 = vmatprep.subr.mxu0 0.0
    %4070 = vmatpush2.msra.mxu0 0.0
    %4071 = vmatprep.subr.mxu0 0.0
    %4072 = vmatpush2.msra.mxu0 0.0
    %4073 = vmatprep.subr.mxu0 0.0
    %4074 = vmatpush2.msra.mxu0 0.0
    %4075 = vmatprep.subr.mxu0 0.0
    %4076 = vmatpush2.msra.mxu0 0.0
    %4077 = vmatprep.subr.mxu0 0.0
    %4078 = vmatpush2.msra.mxu0 0.0
    %4079 = vmatprep.mubr.f32.mxu0 0.0
    %4080 = vmatmul.mubr.f32.gmra.mxu0 %v1175
    %v4081 = vpop.f32.mrf.mxu0
    %v4082 = vadd.f32 %v3469, %v4081
    %v4083 = vpop.f32.mrf.mxu0
    %4084 = vmatprep.mubr.f32.mxu0 0.0
    %4085 = vmatmul.mubr.f32.gmra.mxu0 %v1178
    %v4086 = vpop.f32.mrf.mxu0
    %v4087 = vadd.f32 %v3474, %v4086
    %v4088 = vpop.f32.mrf.mxu0
    %4089 = vdwg.mxu0
    %v4090 = vmax.f32 %v4082, 0.0
    %v4091 = vmax.f32 %v4087, 0.0
    %v4093 = vsel %vm542, %v4090, 0
    %v4096 = vsel %vm542, %v4091, 0
    %4098 = vmatprep.subr.mxu0 0.0
    %4099 = vmatpush1.msra.mxu0 0.0
    %4100 = vmatprep.subr.mxu0 0.0
    %4101 = vmatpush1.msra.mxu0 0.0
    %4102 = vmatprep.subr.mxu0 0.0
    %4103 = vmatpush1.msra.mxu0 0.0
    %4104 = vmatprep.subr.mxu0 0.0
    %4105 = vmatpush1.msra.mxu0 0.0
    %4106 = vmatprep.subr.mxu0 0.0
    %4107 = vmatpush1.msra.mxu0 0.0
    %4108 = vmatprep.subr.mxu0 0.0
    %4109 = vmatpush1.msra.mxu0 0.0
    %4110 = vmatprep.subr.mxu0 0.0
    %4111 = vmatpush1.msra.mxu0 0.0
    %4112 = vmatprep.subr.mxu0 0.0
    %4113 = vmatpush1.msra.mxu0 0.0
    %4114 = vmatprep.subr.mxu0 0.0
    %4115 = vmatpush1.msra.mxu0 0.0
    %4116 = vmatprep.subr.mxu0 0.0
    %4117 = vmatpush1.msra.mxu0 0.0
    %4118 = vmatprep.subr.mxu0 0.0
    %4119 = vmatpush1.msra.mxu0 0.0
    %4120 = vmatprep.subr.mxu0 0.0
    %4121 = vmatpush1.msra.mxu0 0.0
    %4122 = vmatprep.subr.mxu0 0.0
    %4123 = vmatpush1.msra.mxu0 0.0
    %4124 = vmatprep.subr.mxu0 0.0
    %4125 = vmatpush1.msra.mxu0 0.0
    %4126 = vmatprep.subr.mxu0 0.0
    %4127 = vmatpush1.msra.mxu0 %v532
    %4128 = vmatprep.subr.mxu0 0.0
    %4129 = vmatpush1.msra.mxu0 %v531
    %4130 = vmatprep.subr.mxu0 0.0
    %4131 = vmatpush2.msra.mxu0 0.0
    %4132 = vmatprep.subr.mxu0 0.0
    %4133 = vmatpush2.msra.mxu0 0.0
    %4134 = vmatprep.subr.mxu0 0.0
    %4135 = vmatpush2.msra.mxu0 0.0
    %4136 = vmatprep.subr.mxu0 0.0
    %4137 = vmatpush2.msra.mxu0 0.0
    %4138 = vmatprep.subr.mxu0 0.0
    %4139 = vmatpush2.msra.mxu0 0.0
    %4140 = vmatprep.subr.mxu0 0.0
    %4141 = vmatpush2.msra.mxu0 0.0
    %4142 = vmatprep.subr.mxu0 0.0
    %4143 = vmatpush2.msra.mxu0 0.0
    %4144 = vmatprep.subr.mxu0 0.0
    %4145 = vmatpush2.msra.mxu0 0.0
    %4146 = vmatprep.subr.mxu0 0.0
    %4147 = vmatpush2.msra.mxu0 0.0
    %4148 = vmatprep.subr.mxu0 0.0
    %4149 = vmatpush2.msra.mxu0 0.0
    %4150 = vmatprep.subr.mxu0 0.0
    %4151 = vmatpush2.msra.mxu0 0.0
    %4152 = vmatprep.subr.mxu0 0.0
    %4153 = vmatpush2.msra.mxu0 0.0
    %4154 = vmatprep.subr.mxu0 0.0
    %4155 = vmatpush2.msra.mxu0 0.0
    %4156 = vmatprep.subr.mxu0 0.0
    %4157 = vmatpush2.msra.mxu0 0.0
    %4158 = vmatprep.subr.mxu0 0.0
    %4159 = vmatpush2.msra.mxu0 0.0
    %4160 = vmatprep.subr.mxu0 0.0
    %4161 = vmatpush2.msra.mxu0 0.0
    %4162 = vmatprep.mubr.f32.mxu0 0.0
    %4163 = vmatmul.mubr.f32.gmra.mxu0 %v4093
    %v4164 = vpop.f32.mrf.mxu0
    %v4165 = vadd.f32 0.0, %v4164
    %v4166 = vpop.f32.mrf.mxu0
    %4167 = vmatprep.mubr.f32.mxu0 0.0
    %4168 = vmatmul.mubr.f32.gmra.mxu0 %v4096
    %v4169 = vpop.f32.mrf.mxu0
    %v4170 = vadd.f32 0.0, %v4169
    %v4171 = vpop.f32.mrf.mxu0
    %4172 = vdwg.mxu0
    %v4174 = vsel %vm542, %v4165, 0
    %v4177 = vsel %vm542, %v4170, 0
    %4179 = vmatprep.subr.mxu0 0.0
    %4180 = vmatpush1.msra.mxu0 0.0
    %4181 = vmatprep.subr.mxu0 0.0
    %4182 = vmatpush1.msra.mxu0 0.0
    %4183 = vmatprep.subr.mxu0 0.0
    %4184 = vmatpush1.msra.mxu0 0.0
    %4185 = vmatprep.subr.mxu0 0.0
    %4186 = vmatpush1.msra.mxu0 0.0
    %4187 = vmatprep.subr.mxu0 0.0
    %4188 = vmatpush1.msra.mxu0 0.0
    %4189 = vmatprep.subr.mxu0 0.0
    %4190 = vmatpush1.msra.mxu0 0.0
    %4191 = vmatprep.subr.mxu0 0.0
    %4192 = vmatpush1.msra.mxu0 0.0
    %4193 = vmatprep.subr.mxu0 0.0
    %4194 = vmatpush1.msra.mxu0 0.0
    %4195 = vmatprep.subr.mxu0 0.0
    %4196 = vmatpush1.msra.mxu0 0.0
    %4197 = vmatprep.subr.mxu0 0.0
    %4198 = vmatpush1.msra.mxu0 0.0
    %4199 = vmatprep.subr.mxu0 0.0
    %4200 = vmatpush1.msra.mxu0 0.0
    %4201 = vmatprep.subr.mxu0 0.0
    %4202 = vmatpush1.msra.mxu0 0.0
    %4203 = vmatprep.subr.mxu0 0.0
    %4204 = vmatpush1.msra.mxu0 0.0
    %4205 = vmatprep.subr.mxu0 0.0
    %4206 = vmatpush1.msra.mxu0 0.0
    %4207 = vmatprep.subr.mxu0 0.0
    %4208 = vmatpush1.msra.mxu0 %v534
    %4209 = vmatprep.subr.mxu0 0.0
    %4210 = vmatpush1.msra.mxu0 %v533
    %4211 = vmatprep.subr.mxu0 0.0
    %4212 = vmatpush2.msra.mxu0 0.0
    %4213 = vmatprep.subr.mxu0 0.0
    %4214 = vmatpush2.msra.mxu0 0.0
    %4215 = vmatprep.subr.mxu0 0.0
    %4216 = vmatpush2.msra.mxu0 0.0
    %4217 = vmatprep.subr.mxu0 0.0
    %4218 = vmatpush2.msra.mxu0 0.0
    %4219 = vmatprep.subr.mxu0 0.0
    %4220 = vmatpush2.msra.mxu0 0.0
    %4221 = vmatprep.subr.mxu0 0.0
    %4222 = vmatpush2.msra.mxu0 0.0
    %4223 = vmatprep.subr.mxu0 0.0
    %4224 = vmatpush2.msra.mxu0 0.0
    %4225 = vmatprep.subr.mxu0 0.0
    %4226 = vmatpush2.msra.mxu0 0.0
    %4227 = vmatprep.subr.mxu0 0.0
    %4228 = vmatpush2.msra.mxu0 0.0
    %4229 = vmatprep.subr.mxu0 0.0
    %4230 = vmatpush2.msra.mxu0 0.0
    %4231 = vmatprep.subr.mxu0 0.0
    %4232 = vmatpush2.msra.mxu0 0.0
    %4233 = vmatprep.subr.mxu0 0.0
    %4234 = vmatpush2.msra.mxu0 0.0
    %4235 = vmatprep.subr.mxu0 0.0
    %4236 = vmatpush2.msra.mxu0 0.0
    %4237 = vmatprep.subr.mxu0 0.0
    %4238 = vmatpush2.msra.mxu0 0.0
    %4239 = vmatprep.subr.mxu0 0.0
    %4240 = vmatpush2.msra.mxu0 0.0
    %4241 = vmatprep.subr.mxu0 0.0
    %4242 = vmatpush2.msra.mxu0 0.0
    %4243 = vmatprep.mubr.f32.mxu0 0.0
    %4244 = vmatmul.mubr.f32.gmra.mxu0 %v4174
    %v4245 = vpop.f32.mrf.mxu0
    %v4246 = vadd.f32 0.0, %v4245
    %v4247 = vpop.f32.mrf.mxu0
    %4248 = vmatprep.mubr.f32.mxu0 0.0
    %4249 = vmatmul.mubr.f32.gmra.mxu0 %v4177
    %v4250 = vpop.f32.mrf.mxu0
    %v4251 = vadd.f32 0.0, %v4250
    %v4252 = vpop.f32.mrf.mxu0
    %4253 = vdwg.mxu0
    %v4254 = vsel %vm634, %v4170, 0
    %4256 = vmatprep.subr.mxu0 0.0
    %4257 = vmatpush1.msra.mxu0 0.0
    %4258 = vmatprep.subr.mxu0 0.0
    %4259 = vmatpush1.msra.mxu0 0.0
    %4260 = vmatprep.subr.mxu0 0.0
    %4261 = vmatpush1.msra.mxu0 0.0
    %4262 = vmatprep.subr.mxu0 0.0
    %4263 = vmatpush1.msra.mxu0 0.0
    %4264 = vmatprep.subr.mxu0 0.0
    %4265 = vmatpush1.msra.mxu0 0.0
    %4266 = vmatprep.subr.mxu0 0.0
    %4267 = vmatpush1.msra.mxu0 0.0
    %4268 = vmatprep.subr.mxu0 0.0
    %4269 = vmatpush1.msra.mxu0 0.0
    %4270 = vmatprep.subr.mxu0 0.0
    %4271 = vmatpush1.msra.mxu0 0.0
    %4272 = vmatprep.subr.mxu0 0.0
    %4273 = vmatpush1.msra.mxu0 0.0
    %4274 = vmatprep.subr.mxu0 0.0
    %4275 = vmatpush1.msra.mxu0 0.0
    %4276 = vmatprep.subr.mxu0 0.0
    %4277 = vmatpush1.msra.mxu0 0.0
    %4278 = vmatprep.subr.mxu0 0.0
    %4279 = vmatpush1.msra.mxu0 0.0
    %4280 = vmatprep.subr.mxu0 0.0
    %4281 = vmatpush1.msra.mxu0 0.0
    %4282 = vmatprep.subr.mxu0 0.0
    %4283 = vmatpush1.msra.mxu0 0.0
    %4284 = vmatprep.subr.mxu0 0.0
    %4285 = vmatpush1.msra.mxu0 %v4254
    %4286 = vmatprep.subr.mxu0 0.0
    %4287 = vmatpush1.msra.mxu0 %v4165
    %4288 = vmatprep.subr.mxu0 0.0
    %4289 = vmatpush2.msra.mxu0 0.0
    %4290 = vmatprep.subr.mxu0 0.0
    %4291 = vmatpush2.msra.mxu0 0.0
    %4292 = vmatprep.subr.mxu0 0.0
    %4293 = vmatpush2.msra.mxu0 0.0
    %4294 = vmatprep.subr.mxu0 0.0
    %4295 = vmatpush2.msra.mxu0 0.0
    %4296 = vmatprep.subr.mxu0 0.0
    %4297 = vmatpush2.msra.mxu0 0.0
    %4298 = vmatprep.subr.mxu0 0.0
    %4299 = vmatpush2.msra.mxu0 0.0
    %4300 = vmatprep.subr.mxu0 0.0
    %4301 = vmatpush2.msra.mxu0 0.0
    %4302 = vmatprep.subr.mxu0 0.0
    %4303 = vmatpush2.msra.mxu0 0.0
    %4304 = vmatprep.subr.mxu0 0.0
    %4305 = vmatpush2.msra.mxu0 0.0
    %4306 = vmatprep.subr.mxu0 0.0
    %4307 = vmatpush2.msra.mxu0 0.0
    %4308 = vmatprep.subr.mxu0 0.0
    %4309 = vmatpush2.msra.mxu0 0.0
    %4310 = vmatprep.subr.mxu0 0.0
    %4311 = vmatpush2.msra.mxu0 0.0
    %4312 = vmatprep.subr.mxu0 0.0
    %4313 = vmatpush2.msra.mxu0 0.0
    %4314 = vmatprep.subr.mxu0 0.0
    %4315 = vmatpush2.msra.mxu0 0.0
    %4316 = vmatprep.subr.mxu0 0.0
    %4317 = vmatpush2.msra.mxu0 0.0
    %4318 = vmatprep.subr.mxu0 0.0
    %4319 = vmatpush2.msra.mxu0 0.0
    %4320 = vmatprep.mubr.f32.mxu0 0.0
    %4321 = vmatmul.mubr.f32.gmra.mxu0 %v1420
    %v4322 = vpop.f32.mrf.mxu0
    %v4323 = vadd.f32 0.0, %v4322
    %v4324 = vpop.f32.mrf.mxu0
    %4325 = vmatprep.mubr.f32.mxu0 0.0
    %4326 = vmatmul.mubr.f32.gmra.mxu0 %v1423
    %v4327 = vpop.f32.mrf.mxu0
    %v4328 = vadd.f32 0.0, %v4327
    %v4329 = vpop.f32.mrf.mxu0
    %4330 = vmatprep.mubr.f32.mxu0 0.0
    %4331 = vmatmul.mubr.f32.gmra.mxu0 %v1426
    %v4332 = vpop.f32.mrf.mxu0
    %v4333 = vadd.f32 0.0, %v4332
    %v4334 = vpop.f32.mrf.mxu0
    %4335 = vmatprep.mubr.f32.mxu0 0.0
    %4336 = vmatmul.mubr.f32.gmra.mxu0 %v1429
    %v4337 = vpop.f32.mrf.mxu0
    %v4338 = vadd.f32 0.0, %v4337
    %v4339 = vpop.f32.mrf.mxu0
    %4340 = vmatprep.mubr.f32.mxu0 0.0
    %4341 = vmatmul.mubr.f32.gmra.mxu0 %v1432
    %v4342 = vpop.f32.mrf.mxu0
    %v4343 = vadd.f32 0.0, %v4342
    %v4344 = vpop.f32.mrf.mxu0
    %4345 = vdwg.mxu0
    %4348 = vrot.lane.b32.xlu0 %v4246, 127
    %v4349 = vpop.permute.xlu0 %4348
    %4350 = vrot.lane.b32.xlu0 %v4251, 127
    %v4351 = vpop.permute.xlu0 %4350
    %v4353 = vsel %vm634, %v4351, 0
    %4355 = vmatprep.subr.mxu0 0.0
    %4356 = vmatpush1.msra.mxu0 0.0
    %4357 = vmatprep.subr.mxu0 0.0
    %4358 = vmatpush1.msra.mxu0 0.0
    %4359 = vmatprep.subr.mxu0 0.0
    %4360 = vmatpush1.msra.mxu0 0.0
    %4361 = vmatprep.subr.mxu0 0.0
    %4362 = vmatpush1.msra.mxu0 0.0
    %4363 = vmatprep.subr.mxu0 0.0
    %4364 = vmatpush1.msra.mxu0 0.0
    %4365 = vmatprep.subr.mxu0 0.0
    %4366 = vmatpush1.msra.mxu0 0.0
    %4367 = vmatprep.subr.mxu0 0.0
    %4368 = vmatpush1.msra.mxu0 0.0
    %4369 = vmatprep.subr.mxu0 0.0
    %4370 = vmatpush1.msra.mxu0 0.0
    %4371 = vmatprep.subr.mxu0 0.0
    %4372 = vmatpush1.msra.mxu0 0.0
    %4373 = vmatprep.subr.mxu0 0.0
    %4374 = vmatpush1.msra.mxu0 0.0
    %4375 = vmatprep.subr.mxu0 0.0
    %4376 = vmatpush1.msra.mxu0 0.0
    %4377 = vmatprep.subr.mxu0 0.0
    %4378 = vmatpush1.msra.mxu0 0.0
    %4379 = vmatprep.subr.mxu0 0.0
    %4380 = vmatpush1.msra.mxu0 0.0
    %4381 = vmatprep.subr.mxu0 0.0
    %4382 = vmatpush1.msra.mxu0 0.0
    %4383 = vmatprep.subr.mxu0 0.0
    %4384 = vmatpush1.msra.mxu0 %v4353
    %4385 = vmatprep.subr.mxu0 0.0
    %4386 = vmatpush1.msra.mxu0 %v4349
    %4387 = vmatprep.subr.mxu0 0.0
    %4388 = vmatpush2.msra.mxu0 0.0
    %4389 = vmatprep.subr.mxu0 0.0
    %4390 = vmatpush2.msra.mxu0 0.0
    %4391 = vmatprep.subr.mxu0 0.0
    %4392 = vmatpush2.msra.mxu0 0.0
    %4393 = vmatprep.subr.mxu0 0.0
    %4394 = vmatpush2.msra.mxu0 0.0
    %4395 = vmatprep.subr.mxu0 0.0
    %4396 = vmatpush2.msra.mxu0 0.0
    %4397 = vmatprep.subr.mxu0 0.0
    %4398 = vmatpush2.msra.mxu0 0.0
    %4399 = vmatprep.subr.mxu0 0.0
    %4400 = vmatpush2.msra.mxu0 0.0
    %4401 = vmatprep.subr.mxu0 0.0
    %4402 = vmatpush2.msra.mxu0 0.0
    %4403 = vmatprep.subr.mxu0 0.0
    %4404 = vmatpush2.msra.mxu0 0.0
    %4405 = vmatprep.subr.mxu0 0.0
    %4406 = vmatpush2.msra.mxu0 0.0
    %4407 = vmatprep.subr.mxu0 0.0
    %4408 = vmatpush2.msra.mxu0 0.0
    %4409 = vmatprep.subr.mxu0 0.0
    %4410 = vmatpush2.msra.mxu0 0.0
    %4411 = vmatprep.subr.mxu0 0.0
    %4412 = vmatpush2.msra.mxu0 0.0
    %4413 = vmatprep.subr.mxu0 0.0
    %4414 = vmatpush2.msra.mxu0 0.0
    %4415 = vmatprep.subr.mxu0 0.0
    %4416 = vmatpush2.msra.mxu0 0.0
    %4417 = vmatprep.subr.mxu0 0.0
    %4418 = vmatpush2.msra.mxu0 0.0
    %4419 = vmatprep.mubr.f32.mxu0 0.0
    %4420 = vmatmul.mubr.f32.gmra.mxu0 %v1534
    %v4421 = vpop.f32.mrf.mxu0
    %v4422 = vadd.f32 0.0, %v4421
    %v4423 = vpop.f32.mrf.mxu0
    %4424 = vmatprep.mubr.f32.mxu0 0.0
    %4425 = vmatmul.mubr.f32.gmra.mxu0 %v1537
    %v4426 = vpop.f32.mrf.mxu0
    %v4427 = vadd.f32 0.0, %v4426
    %v4428 = vpop.f32.mrf.mxu0
    %4429 = vmatprep.mubr.f32.mxu0 0.0
    %4430 = vmatmul.mubr.f32.gmra.mxu0 %v1540
    %v4431 = vpop.f32.mrf.mxu0
    %v4432 = vadd.f32 0.0, %v4431
    %v4433 = vpop.f32.mrf.mxu0
    %4434 = vmatprep.mubr.f32.mxu0 0.0
    %4435 = vmatmul.mubr.f32.gmra.mxu0 %v1543
    %v4436 = vpop.f32.mrf.mxu0
    %v4437 = vadd.f32 0.0, %v4436
    %v4438 = vpop.f32.mrf.mxu0
    %4439 = vmatprep.mubr.f32.mxu0 0.0
    %4440 = vmatmul.mubr.f32.gmra.mxu0 %v1546
    %v4441 = vpop.f32.mrf.mxu0
    %v4442 = vadd.f32 0.0, %v4441
    %v4443 = vpop.f32.mrf.mxu0
    %4444 = vdwg.mxu0
    %v4445 = vsel %vm634, %v4251, 0
    %4447 = vmatprep.subr.mxu0 0.0
    %4448 = vmatpush1.msra.mxu0 0.0
    %4449 = vmatprep.subr.mxu0 0.0
    %4450 = vmatpush1.msra.mxu0 0.0
    %4451 = vmatprep.subr.mxu0 0.0
    %4452 = vmatpush1.msra.mxu0 0.0
    %4453 = vmatprep.subr.mxu0 0.0
    %4454 = vmatpush1.msra.mxu0 0.0
    %4455 = vmatprep.subr.mxu0 0.0
    %4456 = vmatpush1.msra.mxu0 0.0
    %4457 = vmatprep.subr.mxu0 0.0
    %4458 = vmatpush1.msra.mxu0 0.0
    %4459 = vmatprep.subr.mxu0 0.0
    %4460 = vmatpush1.msra.mxu0 0.0
    %4461 = vmatprep.subr.mxu0 0.0
    %4462 = vmatpush1.msra.mxu0 0.0
    %4463 = vmatprep.subr.mxu0 0.0
    %4464 = vmatpush1.msra.mxu0 0.0
    %4465 = vmatprep.subr.mxu0 0.0
    %4466 = vmatpush1.msra.mxu0 0.0
    %4467 = vmatprep.subr.mxu0 0.0
    %4468 = vmatpush1.msra.mxu0 0.0
    %4469 = vmatprep.subr.mxu0 0.0
    %4470 = vmatpush1.msra.mxu0 0.0
    %4471 = vmatprep.subr.mxu0 0.0
    %4472 = vmatpush1.msra.mxu0 0.0
    %4473 = vmatprep.subr.mxu0 0.0
    %4474 = vmatpush1.msra.mxu0 0.0
    %4475 = vmatprep.subr.mxu0 0.0
    %4476 = vmatpush1.msra.mxu0 %v4445
    %4477 = vmatprep.subr.mxu0 0.0
    %4478 = vmatpush1.msra.mxu0 %v4246
    %4479 = vmatprep.subr.mxu0 0.0
    %4480 = vmatpush2.msra.mxu0 0.0
    %4481 = vmatprep.subr.mxu0 0.0
    %4482 = vmatpush2.msra.mxu0 0.0
    %4483 = vmatprep.subr.mxu0 0.0
    %4484 = vmatpush2.msra.mxu0 0.0
    %4485 = vmatprep.subr.mxu0 0.0
    %4486 = vmatpush2.msra.mxu0 0.0
    %4487 = vmatprep.subr.mxu0 0.0
    %4488 = vmatpush2.msra.mxu0 0.0
    %4489 = vmatprep.subr.mxu0 0.0
    %4490 = vmatpush2.msra.mxu0 0.0
    %4491 = vmatprep.subr.mxu0 0.0
    %4492 = vmatpush2.msra.mxu0 0.0
    %4493 = vmatprep.subr.mxu0 0.0
    %4494 = vmatpush2.msra.mxu0 0.0
    %4495 = vmatprep.subr.mxu0 0.0
    %4496 = vmatpush2.msra.mxu0 0.0
    %4497 = vmatprep.subr.mxu0 0.0
    %4498 = vmatpush2.msra.mxu0 0.0
    %4499 = vmatprep.subr.mxu0 0.0
    %4500 = vmatpush2.msra.mxu0 0.0
    %4501 = vmatprep.subr.mxu0 0.0
    %4502 = vmatpush2.msra.mxu0 0.0
    %4503 = vmatprep.subr.mxu0 0.0
    %4504 = vmatpush2.msra.mxu0 0.0
    %4505 = vmatprep.subr.mxu0 0.0
    %4506 = vmatpush2.msra.mxu0 0.0
    %4507 = vmatprep.subr.mxu0 0.0
    %4508 = vmatpush2.msra.mxu0 0.0
    %4509 = vmatprep.subr.mxu0 0.0
    %4510 = vmatpush2.msra.mxu0 0.0
    %4511 = vmatprep.mubr.f32.mxu0 0.0
    %4512 = vmatmul.mubr.f32.gmra.mxu0 %v1420
    %v4513 = vpop.f32.mrf.mxu0
    %v4514 = vadd.f32 %v4422, %v4513
    %v4515 = vpop.f32.mrf.mxu0
    %4516 = vmatprep.mubr.f32.mxu0 0.0
    %4517 = vmatmul.mubr.f32.gmra.mxu0 %v1423
    %v4518 = vpop.f32.mrf.mxu0
    %v4519 = vadd.f32 %v4427, %v4518
    %v4520 = vpop.f32.mrf.mxu0
    %4521 = vmatprep.mubr.f32.mxu0 0.0
    %4522 = vmatmul.mubr.f32.gmra.mxu0 %v1426
    %v4523 = vpop.f32.mrf.mxu0
    %v4524 = vadd.f32 %v4432, %v4523
    %v4525 = vpop.f32.mrf.mxu0
    %4526 = vmatprep.mubr.f32.mxu0 0.0
    %4527 = vmatmul.mubr.f32.gmra.mxu0 %v1429
    %v4528 = vpop.f32.mrf.mxu0
    %v4529 = vadd.f32 %v4437, %v4528
    %v4530 = vpop.f32.mrf.mxu0
    %4531 = vmatprep.mubr.f32.mxu0 0.0
    %4532 = vmatmul.mubr.f32.gmra.mxu0 %v1432
    %v4533 = vpop.f32.mrf.mxu0
    %v4534 = vadd.f32 %v4442, %v4533
    %v4535 = vpop.f32.mrf.mxu0
    %4536 = vdwg.mxu0
    %vm4537 = vcmp.ge.f32.partialorder %v4514, 0.0
    %vm4538 = vcmp.ge.f32.partialorder %v4519, 0.0
    %vm4539 = vcmp.ge.f32.partialorder %v4524, 0.0
    %vm4540 = vcmp.ge.f32.partialorder %v4529, 0.0
    %vm4541 = vcmp.ge.f32.partialorder %v4534, 0.0
    %v4542 = vmul.f32 %v4514, 0.2
    %v4543 = vmul.f32 %v4519, 0.2
    %v4544 = vmul.f32 %v4524, 0.2
    %v4545 = vmul.f32 %v4529, 0.2
    %v4546 = vmul.f32 %v4534, 0.2
    %v4547 = vsel %vm4537, %v4514, %v4542
    %v4548 = vsel %vm4538, %v4519, %v4543
    %v4549 = vsel %vm4539, %v4524, %v4544
    %v4550 = vsel %vm4540, %v4529, %v4545
    %v4551 = vsel %vm4541, %v4534, %v4546
    %v4552 = vsel %vm1747, %v4547, -inf
    %v4553 = vsel %vm1747, %v4548, -inf
    %v4554 = vsel %vm1747, %v4549, -inf
    %v4555 = vsel %vm1747, %v4550, -inf
    %v4556 = vsel %vm1752, %v4551, -inf
    %v4557 = vmax.f32 %v4552, %v4556
    %v4558 = vmax.f32 %v4557, %v4553
    %v4559 = vmax.f32 %v4554, %v4555
    %v4560 = vmax.f32 %v4558, %v4559
    %4561 = vmax.xlane.f32.xlu0 %v4560
    %v4562 = vpop.xlane.xlu0 %4561
    %v4563 = vrot.slane %v4562, 4
    %v4564 = vmax.f32 %v4562, %v4563
    %v4565 = vrot.slane %v4564, 2
    %v4566 = vmax.f32 %v4564, %v4565
    %v4567 = vrot.slane %v4566, 1
    %v4568 = vmax.f32 %v4566, %v4567
    %s4569 = vtos %v4568
    %v4570 = vstv %s4569
    %v4571 = vsub.f32 %v4547, %v4570
    %v4572 = vsub.f32 %v4548, %v4570
    %v4573 = vsub.f32 %v4549, %v4570
    %v4574 = vsub.f32 %v4550, %v4570
    %v4575 = vsub.f32 %v4551, %v4570
    %v4576 = vmul.f32 %v4571, 1.442695
    %v4577 = vpow.pop %v4576
    %v4578 = vmul.f32 %v4572, 1.442695
    %v4579 = vpow.pop %v4578
    %v4580 = vmul.f32 %v4573, 1.442695
    %v4581 = vpow.pop %v4580
    %v4582 = vmul.f32 %v4574, 1.442695
    %v4583 = vpow.pop %v4582
    %v4584 = vmul.f32 %v4575, 1.442695
    %v4585 = vpow.pop %v4584
    %4587 = vset.pattern.permute.xlu0 0
    %4588 = vperm.xlu0 %4587, %v4577
    %v4589 = vpop.permute.xlu0 %4588
    %4592 = vset.pattern.permute.xlu0 0
    %4593 = vperm.xlu0 %4592, %v4579
    %v4594 = vpop.permute.xlu0 %4593
    %4597 = vset.pattern.permute.xlu0 0
    %4598 = vperm.xlu0 %4597, %v4581
    %v4599 = vpop.permute.xlu0 %4598
    %4602 = vset.pattern.permute.xlu0 0
    %4603 = vperm.xlu0 %4602, %v4583
    %v4604 = vpop.permute.xlu0 %4603
    %4607 = vset.pattern.permute.xlu0 0
    %4608 = vperm.xlu0 %4607, %v4585
    %v4609 = vpop.permute.xlu0 %4608
    %v4611 = vmul.f32 %v4589, %v4323
    %v4612 = vmul.f32 %v4594, %v4328
    %v4613 = vmul.f32 %v4599, %v4333
    %v4614 = vmul.f32 %v4604, %v4338
    %v4615 = vmul.f32 %v4609, %v4343
    %v4617 = vsel %vm634, %v4615, 0
    %4619 = vmatprep.subr.mxu0 0.0
    %4620 = vmatpush1.msra.mxu0 0.0
    %4621 = vmatprep.subr.mxu0 0.0
    %4622 = vmatpush1.msra.mxu0 0.0
    %4623 = vmatprep.subr.mxu0 0.0
    %4624 = vmatpush1.msra.mxu0 0.0
    %4625 = vmatprep.subr.mxu0 0.0
    %4626 = vmatpush1.msra.mxu0 0.0
    %4627 = vmatprep.subr.mxu0 0.0
    %4628 = vmatpush1.msra.mxu0 0.0
    %4629 = vmatprep.subr.mxu0 0.0
    %4630 = vmatpush1.msra.mxu0 0.0
    %4631 = vmatprep.subr.mxu0 0.0
    %4632 = vmatpush1.msra.mxu0 0.0
    %4633 = vmatprep.subr.mxu0 0.0
    %4634 = vmatpush1.msra.mxu0 0.0
    %4635 = vmatprep.subr.mxu0 0.0
    %4636 = vmatpush1.msra.mxu0 0.0
    %4637 = vmatprep.subr.mxu0 0.0
    %4638 = vmatpush1.msra.mxu0 0.0
    %4639 = vmatprep.subr.mxu0 0.0
    %4640 = vmatpush1.msra.mxu0 0.0
    %4641 = vmatprep.subr.mxu0 0.0
    %4642 = vmatpush1.msra.mxu0 %v4617
    %4643 = vmatprep.subr.mxu0 0.0
    %4644 = vmatpush1.msra.mxu0 %v4614
    %4645 = vmatprep.subr.mxu0 0.0
    %4646 = vmatpush1.msra.mxu0 %v4613
    %4647 = vmatprep.subr.mxu0 0.0
    %4648 = vmatpush1.msra.mxu0 %v4612
    %4649 = vmatprep.subr.mxu0 0.0
    %4650 = vmatpush1.msra.mxu0 %v4611
    %4651 = vmatprep.subr.mxu0 0.0
    %4652 = vmatpush2.msra.mxu0 0.0
    %4653 = vmatprep.subr.mxu0 0.0
    %4654 = vmatpush2.msra.mxu0 0.0
    %4655 = vmatprep.subr.mxu0 0.0
    %4656 = vmatpush2.msra.mxu0 0.0
    %4657 = vmatprep.subr.mxu0 0.0
    %4658 = vmatpush2.msra.mxu0 0.0
    %4659 = vmatprep.subr.mxu0 0.0
    %4660 = vmatpush2.msra.mxu0 0.0
    %4661 = vmatprep.subr.mxu0 0.0
    %4662 = vmatpush2.msra.mxu0 0.0
    %4663 = vmatprep.subr.mxu0 0.0
    %4664 = vmatpush2.msra.mxu0 0.0
    %4665 = vmatprep.subr.mxu0 0.0
    %4666 = vmatpush2.msra.mxu0 0.0
    %4667 = vmatprep.subr.mxu0 0.0
    %4668 = vmatpush2.msra.mxu0 0.0
    %4669 = vmatprep.subr.mxu0 0.0
    %4670 = vmatpush2.msra.mxu0 0.0
    %4671 = vmatprep.subr.mxu0 0.0
    %4672 = vmatpush2.msra.mxu0 0.0
    %4673 = vmatprep.subr.mxu0 0.0
    %4674 = vmatpush2.msra.mxu0 0.0
    %4675 = vmatprep.subr.mxu0 0.0
    %4676 = vmatpush2.msra.mxu0 0.0
    %4677 = vmatprep.subr.mxu0 0.0
    %4678 = vmatpush2.msra.mxu0 0.0
    %4679 = vmatprep.subr.mxu0 0.0
    %4680 = vmatpush2.msra.mxu0 0.0
    %4681 = vmatprep.subr.mxu0 0.0
    %4682 = vmatpush2.msra.mxu0 0.0
    %4683 = vmatprep.mubr.f32.mxu0 0.0
    %4684 = vmatmul.mubr.f32.gmra.mxu0 %v1815
    %v4685 = vpop.f32.mrf.mxu0
    %v4686 = vadd.f32 0.0, %v4685
    %v4687 = vpop.f32.mrf.mxu0
    %4688 = vmatprep.mubr.f32.mxu0 0.0
    %4689 = vmatmul.mubr.f32.gmra.mxu0 %v1818
    %v4690 = vpop.f32.mrf.mxu0
    %v4691 = vadd.f32 0.0, %v4690
    %v4692 = vpop.f32.mrf.mxu0
    %4693 = vdwg.mxu0
    %v4694 = vsel %vm634, %v4585, 0
    %4696 = vmatprep.subr.mxu0 0.0
    %4697 = vmatpush1.msra.mxu0 0.0
    %4698 = vmatprep.subr.mxu0 0.0
    %4699 = vmatpush1.msra.mxu0 0.0
    %4700 = vmatprep.subr.mxu0 0.0
    %4701 = vmatpush1.msra.mxu0 0.0
    %4702 = vmatprep.subr.mxu0 0.0
    %4703 = vmatpush1.msra.mxu0 0.0
    %4704 = vmatprep.subr.mxu0 0.0
    %4705 = vmatpush1.msra.mxu0 0.0
    %4706 = vmatprep.subr.mxu0 0.0
    %4707 = vmatpush1.msra.mxu0 0.0
    %4708 = vmatprep.subr.mxu0 0.0
    %4709 = vmatpush1.msra.mxu0 0.0
    %4710 = vmatprep.subr.mxu0 0.0
    %4711 = vmatpush1.msra.mxu0 0.0
    %4712 = vmatprep.subr.mxu0 0.0
    %4713 = vmatpush1.msra.mxu0 0.0
    %4714 = vmatprep.subr.mxu0 0.0
    %4715 = vmatpush1.msra.mxu0 0.0
    %4716 = vmatprep.subr.mxu0 0.0
    %4717 = vmatpush1.msra.mxu0 0.0
    %4718 = vmatprep.subr.mxu0 0.0
    %4719 = vmatpush1.msra.mxu0 %v4694
    %4720 = vmatprep.subr.mxu0 0.0
    %4721 = vmatpush1.msra.mxu0 %v4583
    %4722 = vmatprep.subr.mxu0 0.0
    %4723 = vmatpush1.msra.mxu0 %v4581
    %4724 = vmatprep.subr.mxu0 0.0
    %4725 = vmatpush1.msra.mxu0 %v4579
    %4726 = vmatprep.subr.mxu0 0.0
    %4727 = vmatpush1.msra.mxu0 %v4577
    %4728 = vmatprep.subr.mxu0 0.0
    %4729 = vmatpush2.msra.mxu0 0.0
    %4730 = vmatprep.subr.mxu0 0.0
    %4731 = vmatpush2.msra.mxu0 0.0
    %4732 = vmatprep.subr.mxu0 0.0
    %4733 = vmatpush2.msra.mxu0 0.0
    %4734 = vmatprep.subr.mxu0 0.0
    %4735 = vmatpush2.msra.mxu0 0.0
    %4736 = vmatprep.subr.mxu0 0.0
    %4737 = vmatpush2.msra.mxu0 0.0
    %4738 = vmatprep.subr.mxu0 0.0
    %4739 = vmatpush2.msra.mxu0 0.0
    %4740 = vmatprep.subr.mxu0 0.0
    %4741 = vmatpush2.msra.mxu0 0.0
    %4742 = vmatprep.subr.mxu0 0.0
    %4743 = vmatpush2.msra.mxu0 0.0
    %4744 = vmatprep.subr.mxu0 0.0
    %4745 = vmatpush2.msra.mxu0 0.0
    %4746 = vmatprep.subr.mxu0 0.0
    %4747 = vmatpush2.msra.mxu0 0.0
    %4748 = vmatprep.subr.mxu0 0.0
    %4749 = vmatpush2.msra.mxu0 0.0
    %4750 = vmatprep.subr.mxu0 0.0
    %4751 = vmatpush2.msra.mxu0 0.0
    %4752 = vmatprep.subr.mxu0 0.0
    %4753 = vmatpush2.msra.mxu0 0.0
    %4754 = vmatprep.subr.mxu0 0.0
    %4755 = vmatpush2.msra.mxu0 0.0
    %4756 = vmatprep.subr.mxu0 0.0
    %4757 = vmatpush2.msra.mxu0 0.0
    %4758 = vmatprep.subr.mxu0 0.0
    %4759 = vmatpush2.msra.mxu0 0.0
    %4760 = vmatprep.mubr.f32.mxu0 0.0
    %4761 = vmatmul.mubr.f32.gmra.mxu0 %v1815
    %v4762 = vpop.f32.mrf.mxu0
    %v4763 = vadd.f32 0.0, %v4762
    %v4764 = vpop.f32.mrf.mxu0
    %4765 = vmatprep.mubr.f32.mxu0 0.0
    %4766 = vmatmul.mubr.f32.gmra.mxu0 %v1818
    %v4767 = vpop.f32.mrf.mxu0
    %v4768 = vadd.f32 0.0, %v4767
    %v4769 = vpop.f32.mrf.mxu0
    %4770 = vdwg.mxu0
    %v4771 = vmax.f32 %v4763, 1e-30
    %v4772 = vmax.f32 %v4768, 1e-30
    %4774 = vset.pattern.permute.xlu0 0
    %4775 = vperm.xlu0 %4774, %v4771
    %v4776 = vpop.permute.xlu0 %4775
    %4779 = vset.pattern.permute.xlu0 0
    %4780 = vperm.xlu0 %4779, %v4772
    %v4781 = vpop.permute.xlu0 %4780
    %v4783 = vrcp.pop %v4776
    %v4784 = vmul.f32 %v4686, %v4783
    %v4785 = vrcp.pop %v4781
    %v4786 = vmul.f32 %v4691, %v4785
    %v4787 = vadd.f32 %v4784, %v1995
    %v4788 = vadd.f32 %v4786, %v1995
    %v4789 = vmax.f32 %v4787, 0.0
    %v4790 = vmax.f32 %v4788, 0.0
    %v4791 = vadd.f32 %v1999, %v3394
    %v4792 = vadd.f32 %v2000, %v3395
    %v4793 = vadd.f32 %v4791, %v4789
    %v4794 = vadd.f32 %v4792, %v4790
    %v4795 = vmul.f32 %v4793, 0.33333334
    %v4796 = vmul.f32 %v4794, 0.33333334
    %v4797 = vld [vmem:[%s7] sm:$0x3]
    %v4799 = vsel %vm624, %v4797, 0
    %v4802 = vsel %vm634, %v4796, 0
    %4804 = vmatprep.subr.mxu0 0.0
    %4805 = vmatpush1.msra.mxu0 0.0
    %4806 = vmatprep.subr.mxu0 0.0
    %4807 = vmatpush1.msra.mxu0 0.0
    %4808 = vmatprep.subr.mxu0 0.0
    %4809 = vmatpush1.msra.mxu0 0.0
    %4810 = vmatprep.subr.mxu0 0.0
    %4811 = vmatpush1.msra.mxu0 0.0
    %4812 = vmatprep.subr.mxu0 0.0
    %4813 = vmatpush1.msra.mxu0 0.0
    %4814 = vmatprep.subr.mxu0 0.0
    %4815 = vmatpush1.msra.mxu0 0.0
    %4816 = vmatprep.subr.mxu0 0.0
    %4817 = vmatpush1.msra.mxu0 0.0
    %4818 = vmatprep.subr.mxu0 0.0
    %4819 = vmatpush1.msra.mxu0 0.0
    %4820 = vmatprep.subr.mxu0 0.0
    %4821 = vmatpush1.msra.mxu0 0.0
    %4822 = vmatprep.subr.mxu0 0.0
    %4823 = vmatpush1.msra.mxu0 0.0
    %4824 = vmatprep.subr.mxu0 0.0
    %4825 = vmatpush1.msra.mxu0 0.0
    %4826 = vmatprep.subr.mxu0 0.0
    %4827 = vmatpush1.msra.mxu0 0.0
    %4828 = vmatprep.subr.mxu0 0.0
    %4829 = vmatpush1.msra.mxu0 0.0
    %4830 = vmatprep.subr.mxu0 0.0
    %4831 = vmatpush1.msra.mxu0 0.0
    %4832 = vmatprep.subr.mxu0 0.0
    %4833 = vmatpush1.msra.mxu0 %v4802
    %4834 = vmatprep.subr.mxu0 0.0
    %4835 = vmatpush1.msra.mxu0 %v4795
    %4836 = vmatprep.subr.mxu0 0.0
    %4837 = vmatpush2.msra.mxu0 0.0
    %4838 = vmatprep.subr.mxu0 0.0
    %4839 = vmatpush2.msra.mxu0 0.0
    %4840 = vmatprep.subr.mxu0 0.0
    %4841 = vmatpush2.msra.mxu0 0.0
    %4842 = vmatprep.subr.mxu0 0.0
    %4843 = vmatpush2.msra.mxu0 0.0
    %4844 = vmatprep.subr.mxu0 0.0
    %4845 = vmatpush2.msra.mxu0 0.0
    %4846 = vmatprep.subr.mxu0 0.0
    %4847 = vmatpush2.msra.mxu0 0.0
    %4848 = vmatprep.subr.mxu0 0.0
    %4849 = vmatpush2.msra.mxu0 0.0
    %4850 = vmatprep.subr.mxu0 0.0
    %4851 = vmatpush2.msra.mxu0 0.0
    %4852 = vmatprep.subr.mxu0 0.0
    %4853 = vmatpush2.msra.mxu0 0.0
    %4854 = vmatprep.subr.mxu0 0.0
    %4855 = vmatpush2.msra.mxu0 0.0
    %4856 = vmatprep.subr.mxu0 0.0
    %4857 = vmatpush2.msra.mxu0 0.0
    %4858 = vmatprep.subr.mxu0 0.0
    %4859 = vmatpush2.msra.mxu0 0.0
    %4860 = vmatprep.subr.mxu0 0.0
    %4861 = vmatpush2.msra.mxu0 0.0
    %4862 = vmatprep.subr.mxu0 0.0
    %4863 = vmatpush2.msra.mxu0 0.0
    %4864 = vmatprep.subr.mxu0 0.0
    %4865 = vmatpush2.msra.mxu0 0.0
    %4866 = vmatprep.subr.mxu0 0.0
    %4867 = vmatpush2.msra.mxu0 0.0
    %4868 = vmatprep.mubr.f32.mxu0 0.0
    %4869 = vmatmul.mubr.f32.gmra.mxu0 %v4799
    %v4870 = vpop.f32.mrf.mxu0
    %v4871 = vadd.f32 0.0, %v4870
    %v4872 = vpop.f32.mrf.mxu0
    %4873 = vdwg.mxu0
    %v4874 = vld [vmem:[#allocation14] sm:$0xff]
    %v4875 = vld [vmem:[#allocation14 + $0x8] sm:$0xff]
    %v4876 = vld [vmem:[#allocation16] sm:$0x1]
    %v4878 = vlaneseq
    %v4879 = vshrl.u32 %v4878, 7
    %v4880 = vsub.s32 0, %v4879
    %v4881 = vrot.slane %v4876, %v4880
    %v4884 = vsel %vm542, %v4871, 0
    %4886 = vmatprep.subr.mxu0 0.0
    %4887 = vmatpush1.msra.mxu0 0.0
    %4888 = vmatprep.subr.mxu0 0.0
    %4889 = vmatpush1.msra.mxu0 0.0
    %4890 = vmatprep.subr.mxu0 0.0
    %4891 = vmatpush1.msra.mxu0 0.0
    %4892 = vmatprep.subr.mxu0 0.0
    %4893 = vmatpush1.msra.mxu0 0.0
    %4894 = vmatprep.subr.mxu0 0.0
    %4895 = vmatpush1.msra.mxu0 0.0
    %4896 = vmatprep.subr.mxu0 0.0
    %4897 = vmatpush1.msra.mxu0 0.0
    %4898 = vmatprep.subr.mxu0 0.0
    %4899 = vmatpush1.msra.mxu0 0.0
    %4900 = vmatprep.subr.mxu0 0.0
    %4901 = vmatpush1.msra.mxu0 0.0
    %4902 = vmatprep.subr.mxu0 0.0
    %4903 = vmatpush1.msra.mxu0 0.0
    %4904 = vmatprep.subr.mxu0 0.0
    %4905 = vmatpush1.msra.mxu0 0.0
    %4906 = vmatprep.subr.mxu0 0.0
    %4907 = vmatpush1.msra.mxu0 0.0
    %4908 = vmatprep.subr.mxu0 0.0
    %4909 = vmatpush1.msra.mxu0 0.0
    %4910 = vmatprep.subr.mxu0 0.0
    %4911 = vmatpush1.msra.mxu0 0.0
    %4912 = vmatprep.subr.mxu0 0.0
    %4913 = vmatpush1.msra.mxu0 0.0
    %4914 = vmatprep.subr.mxu0 0.0
    %4915 = vmatpush1.msra.mxu0 %v4875
    %4916 = vmatprep.subr.mxu0 0.0
    %4917 = vmatpush1.msra.mxu0 %v4874
    %4918 = vmatprep.subr.mxu0 0.0
    %4919 = vmatpush2.msra.mxu0 0.0
    %4920 = vmatprep.subr.mxu0 0.0
    %4921 = vmatpush2.msra.mxu0 0.0
    %4922 = vmatprep.subr.mxu0 0.0
    %4923 = vmatpush2.msra.mxu0 0.0
    %4924 = vmatprep.subr.mxu0 0.0
    %4925 = vmatpush2.msra.mxu0 0.0
    %4926 = vmatprep.subr.mxu0 0.0
    %4927 = vmatpush2.msra.mxu0 0.0
    %4928 = vmatprep.subr.mxu0 0.0
    %4929 = vmatpush2.msra.mxu0 0.0
    %4930 = vmatprep.subr.mxu0 0.0
    %4931 = vmatpush2.msra.mxu0 0.0
    %4932 = vmatprep.subr.mxu0 0.0
    %4933 = vmatpush2.msra.mxu0 0.0
    %4934 = vmatprep.subr.mxu0 0.0
    %4935 = vmatpush2.msra.mxu0 0.0
    %4936 = vmatprep.subr.mxu0 0.0
    %4937 = vmatpush2.msra.mxu0 0.0
    %4938 = vmatprep.subr.mxu0 0.0
    %4939 = vmatpush2.msra.mxu0 0.0
    %4940 = vmatprep.subr.mxu0 0.0
    %4941 = vmatpush2.msra.mxu0 0.0
    %4942 = vmatprep.subr.mxu0 0.0
    %4943 = vmatpush2.msra.mxu0 0.0
    %4944 = vmatprep.subr.mxu0 0.0
    %4945 = vmatpush2.msra.mxu0 0.0
    %4946 = vmatprep.subr.mxu0 0.0
    %4947 = vmatpush2.msra.mxu0 0.0
    %4948 = vmatprep.subr.mxu0 0.0
    %4949 = vmatpush2.msra.mxu0 0.0
    %4950 = vmatprep.mubr.f32.mxu0 0.0
    %4951 = vmatmul.mubr.f32.gmra.mxu0 %v4884
    %v4952 = vpop.f32.mrf.mxu0
    %v4953 = vadd.f32 %v4881, %v4952
    %v4954 = vpop.f32.mrf.mxu0
    %4955 = vdwg.mxu0
    %v4956 = vmax.f32 %v4953, 0.0
    %v4957 = vld [vmem:[%s21] sm:$0xff]
    %v4958 = vld [vmem:[%s21 + $0x8] sm:$0xff]
    %v4959 = vld [vmem:[#allocation2] sm:$0x1]
    %v4961 = vlaneseq
    %v4962 = vshrl.u32 %v4961, 7
    %v4963 = vsub.s32 0, %v4962
    %v4964 = vrot.slane %v4959, %v4963
    %v4967 = vsel %vm542, %v4956, 0
    %4969 = vmatprep.subr.mxu0 0.0
    %4970 = vmatpush1.msra.mxu0 0.0
    %4971 = vmatprep.subr.mxu0 0.0
    %4972 = vmatpush1.msra.mxu0 0.0
    %4973 = vmatprep.subr.mxu0 0.0
    %4974 = vmatpush1.msra.mxu0 0.0
    %4975 = vmatprep.subr.mxu0 0.0
    %4976 = vmatpush1.msra.mxu0 0.0
    %4977 = vmatprep.subr.mxu0 0.0
    %4978 = vmatpush1.msra.mxu0 0.0
    %4979 = vmatprep.subr.mxu0 0.0
    %4980 = vmatpush1.msra.mxu0 0.0
    %4981 = vmatprep.subr.mxu0 0.0
    %4982 = vmatpush1.msra.mxu0 0.0
    %4983 = vmatprep.subr.mxu0 0.0
    %4984 = vmatpush1.msra.mxu0 0.0
    %4985 = vmatprep.subr.mxu0 0.0
    %4986 = vmatpush1.msra.mxu0 0.0
    %4987 = vmatprep.subr.mxu0 0.0
    %4988 = vmatpush1.msra.mxu0 0.0
    %4989 = vmatprep.subr.mxu0 0.0
    %4990 = vmatpush1.msra.mxu0 0.0
    %4991 = vmatprep.subr.mxu0 0.0
    %4992 = vmatpush1.msra.mxu0 0.0
    %4993 = vmatprep.subr.mxu0 0.0
    %4994 = vmatpush1.msra.mxu0 0.0
    %4995 = vmatprep.subr.mxu0 0.0
    %4996 = vmatpush1.msra.mxu0 0.0
    %4997 = vmatprep.subr.mxu0 0.0
    %4998 = vmatpush1.msra.mxu0 %v4958
    %4999 = vmatprep.subr.mxu0 0.0
    %5000 = vmatpush1.msra.mxu0 %v4957
    %5001 = vmatprep.subr.mxu0 0.0
    %5002 = vmatpush2.msra.mxu0 0.0
    %5003 = vmatprep.subr.mxu0 0.0
    %5004 = vmatpush2.msra.mxu0 0.0
    %5005 = vmatprep.subr.mxu0 0.0
    %5006 = vmatpush2.msra.mxu0 0.0
    %5007 = vmatprep.subr.mxu0 0.0
    %5008 = vmatpush2.msra.mxu0 0.0
    %5009 = vmatprep.subr.mxu0 0.0
    %5010 = vmatpush2.msra.mxu0 0.0
    %5011 = vmatprep.subr.mxu0 0.0
    %5012 = vmatpush2.msra.mxu0 0.0
    %5013 = vmatprep.subr.mxu0 0.0
    %5014 = vmatpush2.msra.mxu0 0.0
    %5015 = vmatprep.subr.mxu0 0.0
    %5016 = vmatpush2.msra.mxu0 0.0
    %5017 = vmatprep.subr.mxu0 0.0
    %5018 = vmatpush2.msra.mxu0 0.0
    %5019 = vmatprep.subr.mxu0 0.0
    %5020 = vmatpush2.msra.mxu0 0.0
    %5021 = vmatprep.subr.mxu0 0.0
    %5022 = vmatpush2.msra.mxu0 0.0
    %5023 = vmatprep.subr.mxu0 0.0
    %5024 = vmatpush2.msra.mxu0 0.0
    %5025 = vmatprep.subr.mxu0 0.0
    %5026 = vmatpush2.msra.mxu0 0.0
    %5027 = vmatprep.subr.mxu0 0.0
    %5028 = vmatpush2.msra.mxu0 0.0
    %5029 = vmatprep.subr.mxu0 0.0
    %5030 = vmatpush2.msra.mxu0 0.0
    %5031 = vmatprep.subr.mxu0 0.0
    %5032 = vmatpush2.msra.mxu0 0.0
    %5033 = vmatprep.mubr.f32.mxu0 0.0
    %5034 = vmatmul.mubr.f32.gmra.mxu0 %v4967
    %v5035 = vpop.f32.mrf.mxu0
    %v5036 = vadd.f32 %v4964, %v5035
    %v5037 = vpop.f32.mrf.mxu0
    %5038 = vdwg.mxu0
    %vm5039 = vcmask 1024
    %5040 = vst.msk [vmem:[%s23] sm:$0x3] %vm5039, %v5036
    // Predicated region
    $region130: #{forward.1} parent=1 // pred_check
      _
    $region131: #{forward.1} parent=1 // pred_check_branch
      %5042 = sbr.rel (0) target = $region133
    $region132: #{forward.1} parent=1 // pred_region
      _
    $region133: #{forward.1} parent=1 // pred_fallthru
      _
    // Predicated region
    $region134: #{forward.1} parent=1 // pred_check
      _
    $region135: #{forward.1} parent=1 // pred_check_branch
      %5044 = sbr.rel (0) target = $region137
    $region136: #{forward.1} parent=1 // pred_region
      _
    $region137: #{forward.1} parent=1 // pred_fallthru
      _
    %5045 = vsyncpa [#allocation4], 1
    %5046 = vsyncpa [#allocation6], 1
    %5047 = vsyncpa [#allocation9], 1
    %5048 = vsyncpa [#allocation12], 1
    %5049 = vsyncpa [#allocation15], 1

</llo_original>
